<compile_context>
chip_gen: v7x
topology: tpu7x:2x2x1
jax: 0.10.0
libtpu: 0.0.40
codegen_flags: <defaults>
</compile_context>

<pallas_src>
import functools
import math

import jax
import jax.numpy as jnp
from jax.experimental import pallas as pl
from jax.experimental.pallas import tpu as pltpu


# ----------------------------- config -----------------------------

class Config:
    vocab = 128
    max_pos = 32
    hidden = 32          # stands in for 768
    n_heads = 4
    head_dim = 8
    intermediate = 64
    n_layers = 2
    n_labels = 3         # len(labels)


LANES = 128              # vreg lane width; classifier output is padded to this


# ----------------------------- in-kernel helpers -----------------------------

def _layernorm(x, g, b, eps):
    mean = jnp.mean(x, axis=-1, keepdims=True)
    xc = x - mean
    var = jnp.mean(xc * xc, axis=-1, keepdims=True)
    return xc * jax.lax.rsqrt(var + eps) * g + b


def _gelu(x):
    # TODO(synk): HF BERT uses erf-GELU; tanh approximation keeps the transcendental on the EUP.
    c = math.sqrt(2.0 / math.pi)
    return 0.5 * x * (1.0 + jnp.tanh(c * (x + 0.044715 * x * x * x)))


def _split_heads(m, nH, dH):
    # [S, nH*dH] -> [nH, S, dH] via static lane slices + a major-axis stack
    # (avoids a general 3-D transpose; the batched einsums then have a LEADING batch dim).
    return jnp.stack([m[:, h * dH:(h + 1) * dH] for h in range(nH)], axis=0)


# ----------------------------- fused kernel -----------------------------

def _bert_classifier_kernel(
        ids_ref, mask_ref, word_emb_ref, pos_emb_ref, type_emb_ref,
        emb_g_ref, emb_b_ref,
        wqkv_ref, bqkv_ref, wo_ref, bo_ref, ln1_g_ref, ln1_b_ref,
        wi_ref, bi_ref, wo2_ref, bo2_ref, ln2_g_ref, ln2_b_ref,
        pool_w_ref, pool_b_ref, cls_w_ref, cls_b_ref,
        logits_ref,
        *, S, nH, dH, n_layers, eps, vocab):
    H = nH * dH
    bf16 = jnp.bfloat16
    f32 = jnp.float32
    scale = 1.0 / math.sqrt(dH)

    # ---- embeddings: word gather as a one-hot MXU matmul (XLA gather folded in) ----
    ids_col = ids_ref[0]                                                # [S, 1] int32
    vocab_iota = jax.lax.broadcasted_iota(jnp.int32, (S, vocab), 1)     # [S, V]
    one_hot = (ids_col == vocab_iota).astype(bf16)                      # [S, V]
    x = jnp.dot(one_hot, word_emb_ref[...], preferred_element_type=f32)  # [S, H]
    x = x + pos_emb_ref[0:S, :] + type_emb_ref[0:1, :]                  # pos + token-type-0
    x = _layernorm(x, emb_g_ref[...], emb_b_ref[...], eps)              # f32 [S, H]

    # ---- additive attention-mask bias, computed once (f32) and reused by all layers ----
    bias = (1.0 - mask_ref[...].astype(f32)) * (-1e9)                   # [1, 1, S]

    for l in range(n_layers):                                           # unrolled at trace time
        x_bf = x.astype(bf16)

        # fused Q|K|V projection: ONE [S,H]@[H,3H] bf16 matmul
        qkv = jnp.dot(x_bf, wqkv_ref[l], preferred_element_type=f32) + bqkv_ref[l]
        q = _split_heads(qkv[:, :H], nH, dH).astype(bf16)                # [nH, S, dH]
        k = _split_heads(qkv[:, H:2 * H], nH, dH).astype(bf16)
        v = _split_heads(qkv[:, 2 * H:], nH, dH).astype(bf16)

        # all heads batched: ONE score matmul + ONE context matmul per layer
        s = jnp.einsum("hqd,hkd->hqk", q, k, preferred_element_type=f32) * scale
        s = s + bias                                                     # f32 mask bias
        m = jnp.max(s, axis=-1, keepdims=True)
        p = jnp.exp(s - m)
        p = p * pl.reciprocal(jnp.sum(p, axis=-1, keepdims=True), approx=True)
        ctx = jnp.einsum("hqk,hkd->hqd", p.astype(bf16), v,
                         preferred_element_type=f32)                     # [nH, S, dH]

        # merge heads along the lane axis, then ONE [S,H]@[H,H] output projection
        merged = jnp.concatenate([ctx[h] for h in range(nH)], axis=-1)   # [S, H]
        attn_out = jnp.dot(merged.astype(bf16), wo_ref[l],
                           preferred_element_type=f32) + bo_ref[l]
        x = _layernorm(attn_out + x, ln1_g_ref[l], ln1_b_ref[l], eps)

        # FFN (GELU in f32)
        inter = _gelu(jnp.dot(x.astype(bf16), wi_ref[l],
                              preferred_element_type=f32) + bi_ref[l])
        ffn = jnp.dot(inter.astype(bf16), wo2_ref[l],
                      preferred_element_type=f32) + bo2_ref[l]
        x = _layernorm(ffn + x, ln2_g_ref[l], ln2_b_ref[l], eps)

    # pooler: dense + tanh on the [CLS] (position 0) token
    cls_tok = x[0:1, :]                                                  # [1, H]
    pooled = jnp.tanh(jnp.dot(cls_tok.astype(bf16), pool_w_ref[...],
                              preferred_element_type=f32) + pool_b_ref[...])

    # classifier head: dropout (eval identity) -> Linear (lane-padded to 128) -> ReLU
    logits = jnp.dot(pooled.astype(bf16), cls_w_ref[...],
                     preferred_element_type=f32) + cls_b_ref[...]
    logits_ref[0] = jnp.maximum(logits, 0.0).astype(logits_ref.dtype)


# ----------------------------- params -----------------------------

def init_params(key, cfg):
    """Deterministic random weights (no checkpoint may be loaded).

    Matmul weights are stored in bf16 (MXU-native); biases / LayerNorm params stay f32.
    Classifier weights are pre-padded to a 128-lane slab (not rebuilt per forward).
    """
    std = 0.02
    H, I, L, V = cfg.hidden, cfg.intermediate, cfg.n_layers, cfg.vocab
    bf16, f32 = jnp.bfloat16, jnp.float32

    def nrm(k, shape, dtype=f32):
        return (jax.random.normal(k, shape, f32) * std).astype(dtype)

    keys = iter(jax.random.split(key, 16))
    cls_w = jax.random.normal(next(keys), (H, cfg.n_labels), f32) * std
    cls_w_pad = jnp.zeros((H, LANES), f32).at[:, :cfg.n_labels].set(cls_w).astype(bf16)

    return dict(
        word_emb=nrm(next(keys), (V, H), bf16),
        pos_emb=nrm(next(keys), (cfg.max_pos, H)),
        type_emb=nrm(next(keys), (2, H)),
        emb_ln_g=jnp.ones((1, H), f32),
        emb_ln_b=jnp.zeros((1, H), f32),
        # transformer layers stacked over a leading layer axis; Q|K|V fused to [H,3H]
        wqkv=nrm(next(keys), (L, H, 3 * H), bf16),
        bqkv=jnp.zeros((L, 1, 3 * H), f32),
        wo=nrm(next(keys), (L, H, H), bf16),
        bo=jnp.zeros((L, 1, H), f32),
        ln1_g=jnp.ones((L, 1, H), f32),
        ln1_b=jnp.zeros((L, 1, H), f32),
        wi=nrm(next(keys), (L, H, I), bf16),
        bi=jnp.zeros((L, 1, I), f32),
        wo2=nrm(next(keys), (L, I, H), bf16),
        bo2=jnp.zeros((L, 1, H), f32),
        ln2_g=jnp.ones((L, 1, H), f32),
        ln2_b=jnp.zeros((L, 1, H), f32),
        pool_w=nrm(next(keys), (H, H), bf16),
        pool_b=jnp.zeros((1, H), f32),
        cls_w_pad=cls_w_pad,
        cls_b_pad=jnp.zeros((1, LANES), f32),
    )


# ----------------------------- wrapper -----------------------------

def _batched_spec(shape):
    nd = len(shape)
    return pl.BlockSpec((1,) + tuple(shape[1:]),
                        lambda b, _nd=nd: (b,) + (0,) * (_nd - 1))


def _resident_spec(arr):
    nd = arr.ndim
    return pl.BlockSpec(arr.shape, lambda b, _nd=nd: (0,) * _nd)


def bert_classifier_forward(params, input_id, mask, cfg):
    B, S = input_id.shape
    H, I, V, L = cfg.hidden, cfg.intermediate, cfg.vocab, cfg.n_layers
    nH, dH = cfg.n_heads, cfg.head_dim
    R = B * S

    # metadata-only reshapes so every per-batch block keeps full (last-two-dims) tiles
    ids3 = input_id.astype(jnp.int32).reshape(B, S, 1)
    mask3 = mask.astype(jnp.int32).reshape(B, 1, S)

    inputs = (
        ids3, mask3,
        params["word_emb"], params["pos_emb"], params["type_emb"],
        params["emb_ln_g"], params["emb_ln_b"],
        params["wqkv"], params["bqkv"], params["wo"], params["bo"],
        params["ln1_g"], params["ln1_b"],
        params["wi"], params["bi"], params["wo2"], params["bo2"],
        params["ln2_g"], params["ln2_b"],
        params["pool_w"], params["pool_b"],
        params["cls_w_pad"], params["cls_b_pad"],
    )

    in_specs = ([_batched_spec(ids3.shape), _batched_spec(mask3.shape)]
                + [_resident_spec(a) for a in inputs[2:]])
    out_specs = pl.BlockSpec((1, 1, LANES), lambda b: (b, 0, 0))

    # advisory cost estimate so XLA schedules the fused custom call sensibly
    flops_layer = (2 * R * H * 3 * H) + 2 * (2 * B * nH * S * S * dH) \
                  + (2 * R * H * H) + (2 * R * H * I) + (2 * R * I * H)
    flops = L * flops_layer + 2 * R * V * H + 2 * B * H * H + 2 * B * H * LANES
    transcendentals = L * (B * nH * S * S + R * I) + B * H + R * (2 * L + 1)
    bytes_accessed = sum(int(a.size) * a.dtype.itemsize for a in inputs) + B * LANES * 4

    kernel = functools.partial(
        _bert_classifier_kernel,
        S=S, nH=nH, dH=dH, n_layers=L, eps=1e-12, vocab=V)

    logits_pad = pl.pallas_call(
        kernel,
        out_shape=jax.ShapeDtypeStruct((B, 1, LANES), jnp.float32),
        grid=(B,),
        in_specs=in_specs,
        out_specs=out_specs,
        compiler_params=pltpu.CompilerParams(dimension_semantics=("parallel",)),
        cost_estimate=pl.CostEstimate(flops=int(flops),
                                      transcendentals=int(transcendentals),
                                      bytes_accessed=int(bytes_accessed)),
    )(*inputs)

    return logits_pad.reshape(B, LANES)[:, :cfg.n_labels]


# ----------------------------- main -----------------------------

if __name__ == "__main__":
    cfg = Config()
    key = jax.random.PRNGKey(0)
    k_param, k_ids = jax.random.split(key)

    params = init_params(k_param, cfg)

    B, S = 2, 8
    input_id = jax.random.randint(k_ids, (B, S), 0, cfg.vocab, dtype=jnp.int32)
    mask = jnp.array([[1, 1, 1, 1, 1, 1, 1, 1],
                      [1, 1, 1, 1, 1, 1, 0, 0]], dtype=jnp.int32)

    fwd = jax.jit(functools.partial(bert_classifier_forward, cfg=cfg))
    out = fwd(params, input_id, mask)
    out = jax.block_until_ready(out)

    assert out.shape == (B, cfg.n_labels)
    assert bool(jnp.all(out >= 0.0))          # ReLU output is non-negative
    print("KERNEL_OK")
</pallas_src>

<mosaic_0001>
module attributes {stable_mosaic.version = 11 : i64} {
  func.func @_bert_classifier_kernel(%arg0: i32, %arg1: memref<1x8x1xi32, #tpu.memory_space<vmem>>, %arg2: memref<1x1x8xi32, #tpu.memory_space<vmem>>, %arg3: memref<128x32xbf16, #tpu.memory_space<vmem>>, %arg4: memref<32x32xf32, #tpu.memory_space<vmem>>, %arg5: memref<2x32xf32, #tpu.memory_space<vmem>>, %arg6: memref<1x32xf32, #tpu.memory_space<vmem>>, %arg7: memref<1x32xf32, #tpu.memory_space<vmem>>, %arg8: memref<2x32x96xbf16, #tpu.memory_space<vmem>>, %arg9: memref<2x1x96xf32, #tpu.memory_space<vmem>>, %arg10: memref<2x32x32xbf16, #tpu.memory_space<vmem>>, %arg11: memref<2x1x32xf32, #tpu.memory_space<vmem>>, %arg12: memref<2x1x32xf32, #tpu.memory_space<vmem>>, %arg13: memref<2x1x32xf32, #tpu.memory_space<vmem>>, %arg14: memref<2x32x64xbf16, #tpu.memory_space<vmem>>, %arg15: memref<2x1x64xf32, #tpu.memory_space<vmem>>, %arg16: memref<2x64x32xbf16, #tpu.memory_space<vmem>>, %arg17: memref<2x1x32xf32, #tpu.memory_space<vmem>>, %arg18: memref<2x1x32xf32, #tpu.memory_space<vmem>>, %arg19: memref<2x1x32xf32, #tpu.memory_space<vmem>>, %arg20: memref<32x32xbf16, #tpu.memory_space<vmem>>, %arg21: memref<1x32xf32, #tpu.memory_space<vmem>>, %arg22: memref<32x128xbf16, #tpu.memory_space<vmem>>, %arg23: memref<1x128xf32, #tpu.memory_space<vmem>>, %arg24: memref<1x1x128xf32, #tpu.memory_space<vmem>>) attributes {dimension_semantics = [#tpu.dimension_semantics<parallel>], iteration_bounds = array<i64: 2>, scalar_prefetch = 0 : i64, scratch_operands = 0 : i64, tpu.core_type = #tpu.core_type<tc>, window_params = [{transform_indices = @transform_0, window_bounds = array<i64: 1, 8, 1>}, {transform_indices = @transform_1, window_bounds = array<i64: 1, 1, 8>}, {pipeline_mode = #tpu.pipeline_mode<synchronous>, transform_indices = @transform_2, window_bounds = array<i64: 128, 32>}, {pipeline_mode = #tpu.pipeline_mode<synchronous>, transform_indices = @transform_3, window_bounds = array<i64: 32, 32>}, {pipeline_mode = #tpu.pipeline_mode<synchronous>, transform_indices = @transform_4, window_bounds = array<i64: 2, 32>}, {pipeline_mode = #tpu.pipeline_mode<synchronous>, transform_indices = @transform_5, window_bounds = array<i64: 1, 32>}, {pipeline_mode = #tpu.pipeline_mode<synchronous>, transform_indices = @transform_6, window_bounds = array<i64: 1, 32>}, {pipeline_mode = #tpu.pipeline_mode<synchronous>, transform_indices = @transform_7, window_bounds = array<i64: 2, 32, 96>}, {pipeline_mode = #tpu.pipeline_mode<synchronous>, transform_indices = @transform_8, window_bounds = array<i64: 2, 1, 96>}, {pipeline_mode = #tpu.pipeline_mode<synchronous>, transform_indices = @transform_9, window_bounds = array<i64: 2, 32, 32>}, {pipeline_mode = #tpu.pipeline_mode<synchronous>, transform_indices = @transform_10, window_bounds = array<i64: 2, 1, 32>}, {pipeline_mode = #tpu.pipeline_mode<synchronous>, transform_indices = @transform_11, window_bounds = array<i64: 2, 1, 32>}, {pipeline_mode = #tpu.pipeline_mode<synchronous>, transform_indices = @transform_12, window_bounds = array<i64: 2, 1, 32>}, {pipeline_mode = #tpu.pipeline_mode<synchronous>, transform_indices = @transform_13, window_bounds = array<i64: 2, 32, 64>}, {pipeline_mode = #tpu.pipeline_mode<synchronous>, transform_indices = @transform_14, window_bounds = array<i64: 2, 1, 64>}, {pipeline_mode = #tpu.pipeline_mode<synchronous>, transform_indices = @transform_15, window_bounds = array<i64: 2, 64, 32>}, {pipeline_mode = #tpu.pipeline_mode<synchronous>, transform_indices = @transform_16, window_bounds = array<i64: 2, 1, 32>}, {pipeline_mode = #tpu.pipeline_mode<synchronous>, transform_indices = @transform_17, window_bounds = array<i64: 2, 1, 32>}, {pipeline_mode = #tpu.pipeline_mode<synchronous>, transform_indices = @transform_18, window_bounds = array<i64: 2, 1, 32>}, {pipeline_mode = #tpu.pipeline_mode<synchronous>, transform_indices = @transform_19, window_bounds = array<i64: 32, 32>}, {pipeline_mode = #tpu.pipeline_mode<synchronous>, transform_indices = @transform_20, window_bounds = array<i64: 1, 32>}, {pipeline_mode = #tpu.pipeline_mode<synchronous>, transform_indices = @transform_21, window_bounds = array<i64: 32, 128>}, {pipeline_mode = #tpu.pipeline_mode<synchronous>, transform_indices = @transform_22, window_bounds = array<i64: 1, 128>}, {transform_indices = @transform_23, window_bounds = array<i64: 1, 1, 128>}]} {
    %c0 = arith.constant 0 : index
    %c0_0 = arith.constant 0 : index
    %c0_1 = arith.constant 0 : index
    %0 = vector.load %arg1[%c0, %c0_0, %c0_1] : memref<1x8x1xi32, #tpu.memory_space<vmem>>, vector<1x8x1xi32>
    %1 = vector.shape_cast %0 : vector<1x8x1xi32> to vector<8x1xi32>
    %2 = tpu.iota {dimensions = array<i32: 1>} : vector<8x128xi32>
    %3 = vector.broadcast %1 : vector<8x1xi32> to vector<8x128xi32>
    %4 = arith.cmpi eq, %3, %2 : vector<8x128xi32>
    %5 = arith.extui %4 : vector<8x128xi1> to vector<8x128xi32>
    %6 = arith.sitofp %5 : vector<8x128xi32> to vector<8x128xf32>
    %7 = arith.truncf %6 : vector<8x128xf32> to vector<8x128xbf16>
    %c0_2 = arith.constant 0 : index
    %c0_3 = arith.constant 0 : index
    %8 = vector.load %arg3[%c0_2, %c0_3] : memref<128x32xbf16, #tpu.memory_space<vmem>>, vector<128x32xbf16>
    %cst = arith.constant dense<0.000000e+00> : vector<8x32xf32>
    %9 = tpu.matmul %7, %8, %cst {dimension_numbers = #tpu.dot_dimension_numbers<[1], [0], [0], [1], [0, 0, 1, 1], [], []>} : vector<8x128xbf16>, vector<128x32xbf16>, vector<8x32xf32> -> vector<8x32xf32>
    %c0_4 = arith.constant 0 : index
    %c0_5 = arith.constant 0 : index
    %10 = vector.load %arg4[%c0_4, %c0_5] : memref<32x32xf32, #tpu.memory_space<vmem>>, vector<8x32xf32>
    %11 = arith.addf %9, %10 : vector<8x32xf32>
    %c0_6 = arith.constant 0 : index
    %c0_7 = arith.constant 0 : index
    %12 = vector.load %arg5[%c0_6, %c0_7] : memref<2x32xf32, #tpu.memory_space<vmem>>, vector<1x32xf32>
    %13 = vector.broadcast %12 : vector<1x32xf32> to vector<8x32xf32>
    %14 = arith.addf %11, %13 : vector<8x32xf32>
    %c0_8 = arith.constant 0 : index
    %c0_9 = arith.constant 0 : index
    %15 = vector.load %arg6[%c0_8, %c0_9] : memref<1x32xf32, #tpu.memory_space<vmem>>, vector<1x32xf32>
    %c0_10 = arith.constant 0 : index
    %c0_11 = arith.constant 0 : index
    %16 = vector.load %arg7[%c0_10, %c0_11] : memref<1x32xf32, #tpu.memory_space<vmem>>, vector<1x32xf32>
    %cst_12 = arith.constant dense<0.000000e+00> : vector<8xf32>
    %17 = vector.multi_reduction <add>, %14, %cst_12 [1] : vector<8x32xf32> to vector<8xf32>
    %18 = vector.shape_cast %17 : vector<8xf32> to vector<8x1xf32>
    %cst_13 = arith.constant 3.200000e+01 : f32
    %19 = vector.broadcast %cst_13 : f32 to vector<8x1xf32>
    %20 = arith.divf %18, %19 : vector<8x1xf32>
    %21 = vector.broadcast %20 : vector<8x1xf32> to vector<8x32xf32>
    %22 = arith.subf %14, %21 : vector<8x32xf32>
    %23 = arith.mulf %22, %22 : vector<8x32xf32>
    %cst_14 = arith.constant dense<0.000000e+00> : vector<8xf32>
    %24 = vector.multi_reduction <add>, %23, %cst_14 [1] : vector<8x32xf32> to vector<8xf32>
    %25 = vector.shape_cast %24 : vector<8xf32> to vector<8x1xf32>
    %cst_15 = arith.constant 3.200000e+01 : f32
    %26 = vector.broadcast %cst_15 : f32 to vector<8x1xf32>
    %27 = arith.divf %25, %26 : vector<8x1xf32>
    %cst_16 = arith.constant 9.99999996E-13 : f32
    %28 = vector.broadcast %cst_16 : f32 to vector<8x1xf32>
    %29 = arith.addf %27, %28 : vector<8x1xf32>
    %30 = math.rsqrt %29 : vector<8x1xf32>
    %31 = vector.broadcast %30 : vector<8x1xf32> to vector<8x32xf32>
    %32 = arith.mulf %22, %31 : vector<8x32xf32>
    %33 = vector.broadcast %15 : vector<1x32xf32> to vector<8x32xf32>
    %34 = arith.mulf %32, %33 : vector<8x32xf32>
    %35 = vector.broadcast %16 : vector<1x32xf32> to vector<8x32xf32>
    %36 = arith.addf %34, %35 : vector<8x32xf32>
    %c0_17 = arith.constant 0 : index
    %c0_18 = arith.constant 0 : index
    %c0_19 = arith.constant 0 : index
    %37 = vector.load %arg2[%c0_17, %c0_18, %c0_19] : memref<1x1x8xi32, #tpu.memory_space<vmem>>, vector<1x1x8xi32>
    %38 = arith.sitofp %37 : vector<1x1x8xi32> to vector<1x1x8xf32>
    %cst_20 = arith.constant 1.000000e+00 : f32
    %39 = vector.broadcast %cst_20 : f32 to vector<1x1x8xf32>
    %40 = arith.subf %39, %38 : vector<1x1x8xf32>
    %cst_21 = arith.constant -1.000000e+09 : f32
    %41 = vector.broadcast %cst_21 : f32 to vector<1x1x8xf32>
    %42 = arith.mulf %40, %41 : vector<1x1x8xf32>
    %43 = arith.truncf %36 : vector<8x32xf32> to vector<8x32xbf16>
    %c0_22 = arith.constant 0 : index
    %c0_23 = arith.constant 0 : index
    %c0_24 = arith.constant 0 : index
    %44 = vector.load %arg8[%c0_22, %c0_23, %c0_24] : memref<2x32x96xbf16, #tpu.memory_space<vmem>>, vector<1x32x96xbf16>
    %45 = vector.shape_cast %44 : vector<1x32x96xbf16> to vector<32x96xbf16>
    %cst_25 = arith.constant dense<0.000000e+00> : vector<8x96xf32>
    %46 = tpu.matmul %43, %45, %cst_25 {dimension_numbers = #tpu.dot_dimension_numbers<[1], [0], [0], [1], [0, 0, 1, 1], [], []>} : vector<8x32xbf16>, vector<32x96xbf16>, vector<8x96xf32> -> vector<8x96xf32>
    %c0_26 = arith.constant 0 : index
    %c0_27 = arith.constant 0 : index
    %c0_28 = arith.constant 0 : index
    %47 = vector.load %arg9[%c0_26, %c0_27, %c0_28] : memref<2x1x96xf32, #tpu.memory_space<vmem>>, vector<1x1x96xf32>
    %48 = vector.shape_cast %47 : vector<1x1x96xf32> to vector<1x96xf32>
    %49 = vector.broadcast %48 : vector<1x96xf32> to vector<8x96xf32>
    %50 = arith.addf %46, %49 : vector<8x96xf32>
    %51 = vector.extract_strided_slice %50 {offsets = [0, 0], sizes = [8, 32], strides = [1, 1]} : vector<8x96xf32> to vector<8x32xf32>
    %52 = vector.extract_strided_slice %51 {offsets = [0, 0], sizes = [8, 8], strides = [1, 1]} : vector<8x32xf32> to vector<8x8xf32>
    %53 = vector.extract_strided_slice %51 {offsets = [0, 8], sizes = [8, 8], strides = [1, 1]} : vector<8x32xf32> to vector<8x8xf32>
    %54 = vector.extract_strided_slice %51 {offsets = [0, 16], sizes = [8, 8], strides = [1, 1]} : vector<8x32xf32> to vector<8x8xf32>
    %55 = vector.extract_strided_slice %51 {offsets = [0, 24], sizes = [8, 8], strides = [1, 1]} : vector<8x32xf32> to vector<8x8xf32>
    %56 = vector.shape_cast %52 : vector<8x8xf32> to vector<1x8x8xf32>
    %57 = vector.shape_cast %53 : vector<8x8xf32> to vector<1x8x8xf32>
    %58 = vector.shape_cast %54 : vector<8x8xf32> to vector<1x8x8xf32>
    %59 = vector.shape_cast %55 : vector<8x8xf32> to vector<1x8x8xf32>
    %60 = tpu.concatenate %56, %57, %58, %59 in 0 : vector<1x8x8xf32>, vector<1x8x8xf32>, vector<1x8x8xf32>, vector<1x8x8xf32> -> vector<4x8x8xf32>
    %61 = arith.truncf %60 : vector<4x8x8xf32> to vector<4x8x8xbf16>
    %62 = vector.extract_strided_slice %50 {offsets = [0, 32], sizes = [8, 32], strides = [1, 1]} : vector<8x96xf32> to vector<8x32xf32>
    %63 = vector.extract_strided_slice %62 {offsets = [0, 0], sizes = [8, 8], strides = [1, 1]} : vector<8x32xf32> to vector<8x8xf32>
    %64 = vector.extract_strided_slice %62 {offsets = [0, 8], sizes = [8, 8], strides = [1, 1]} : vector<8x32xf32> to vector<8x8xf32>
    %65 = vector.extract_strided_slice %62 {offsets = [0, 16], sizes = [8, 8], strides = [1, 1]} : vector<8x32xf32> to vector<8x8xf32>
    %66 = vector.extract_strided_slice %62 {offsets = [0, 24], sizes = [8, 8], strides = [1, 1]} : vector<8x32xf32> to vector<8x8xf32>
    %67 = vector.shape_cast %63 : vector<8x8xf32> to vector<1x8x8xf32>
    %68 = vector.shape_cast %64 : vector<8x8xf32> to vector<1x8x8xf32>
    %69 = vector.shape_cast %65 : vector<8x8xf32> to vector<1x8x8xf32>
    %70 = vector.shape_cast %66 : vector<8x8xf32> to vector<1x8x8xf32>
    %71 = tpu.concatenate %67, %68, %69, %70 in 0 : vector<1x8x8xf32>, vector<1x8x8xf32>, vector<1x8x8xf32>, vector<1x8x8xf32> -> vector<4x8x8xf32>
    %72 = arith.truncf %71 : vector<4x8x8xf32> to vector<4x8x8xbf16>
    %73 = vector.extract_strided_slice %50 {offsets = [0, 64], sizes = [8, 32], strides = [1, 1]} : vector<8x96xf32> to vector<8x32xf32>
    %74 = vector.extract_strided_slice %73 {offsets = [0, 0], sizes = [8, 8], strides = [1, 1]} : vector<8x32xf32> to vector<8x8xf32>
    %75 = vector.extract_strided_slice %73 {offsets = [0, 8], sizes = [8, 8], strides = [1, 1]} : vector<8x32xf32> to vector<8x8xf32>
    %76 = vector.extract_strided_slice %73 {offsets = [0, 16], sizes = [8, 8], strides = [1, 1]} : vector<8x32xf32> to vector<8x8xf32>
    %77 = vector.extract_strided_slice %73 {offsets = [0, 24], sizes = [8, 8], strides = [1, 1]} : vector<8x32xf32> to vector<8x8xf32>
    %78 = vector.shape_cast %74 : vector<8x8xf32> to vector<1x8x8xf32>
    %79 = vector.shape_cast %75 : vector<8x8xf32> to vector<1x8x8xf32>
    %80 = vector.shape_cast %76 : vector<8x8xf32> to vector<1x8x8xf32>
    %81 = vector.shape_cast %77 : vector<8x8xf32> to vector<1x8x8xf32>
    %82 = tpu.concatenate %78, %79, %80, %81 in 0 : vector<1x8x8xf32>, vector<1x8x8xf32>, vector<1x8x8xf32>, vector<1x8x8xf32> -> vector<4x8x8xf32>
    %83 = arith.truncf %82 : vector<4x8x8xf32> to vector<4x8x8xbf16>
    "tpu.trace_start"() <{level = 10 : i32, message = "hqd,hkd->hqk"}> : () -> ()
    %cst_29 = arith.constant dense<0.000000e+00> : vector<4x8x8xf32>
    %84 = tpu.matmul %61, %72, %cst_29 {dimension_numbers = #tpu.dot_dimension_numbers<[2], [2], [1], [1], [0, 0, 0, 1, 1, 1], [0], [0]>} : vector<4x8x8xbf16>, vector<4x8x8xbf16>, vector<4x8x8xf32> -> vector<4x8x8xf32>
    "tpu.trace_stop"() : () -> ()
    %cst_30 = arith.constant 0.353553385 : f32
    %85 = vector.broadcast %cst_30 : f32 to vector<4x8x8xf32>
    %86 = arith.mulf %84, %85 : vector<4x8x8xf32>
    %87 = vector.broadcast %42 : vector<1x1x8xf32> to vector<4x8x8xf32>
    %88 = arith.addf %86, %87 : vector<4x8x8xf32>
    %cst_31 = arith.constant dense<0xFF800000> : vector<4x8xf32>
    %89 = vector.multi_reduction <maximumf>, %88, %cst_31 [2] : vector<4x8x8xf32> to vector<4x8xf32>
    %90 = vector.shape_cast %89 : vector<4x8xf32> to vector<4x8x1xf32>
    %91 = vector.broadcast %90 : vector<4x8x1xf32> to vector<4x8x8xf32>
    %92 = arith.subf %88, %91 : vector<4x8x8xf32>
    %93 = math.exp %92 : vector<4x8x8xf32>
    %cst_32 = arith.constant dense<0.000000e+00> : vector<4x8xf32>
    %94 = vector.multi_reduction <add>, %93, %cst_32 [2] : vector<4x8x8xf32> to vector<4x8xf32>
    %95 = vector.shape_cast %94 : vector<4x8xf32> to vector<4x8x1xf32>
    %96 = tpu.reciprocal %95 {approx = true} : vector<4x8x1xf32> -> vector<4x8x1xf32>
    %97 = vector.broadcast %96 : vector<4x8x1xf32> to vector<4x8x8xf32>
    %98 = arith.mulf %93, %97 : vector<4x8x8xf32>
    %99 = arith.truncf %98 : vector<4x8x8xf32> to vector<4x8x8xbf16>
    "tpu.trace_start"() <{level = 10 : i32, message = "hqk,hkd->hqd"}> : () -> ()
    %cst_33 = arith.constant dense<0.000000e+00> : vector<4x8x8xf32>
    %100 = tpu.matmul %99, %83, %cst_33 {dimension_numbers = #tpu.dot_dimension_numbers<[2], [1], [1], [2], [0, 0, 0, 1, 1, 2], [0], [0]>} : vector<4x8x8xbf16>, vector<4x8x8xbf16>, vector<4x8x8xf32> -> vector<4x8x8xf32>
    "tpu.trace_stop"() : () -> ()
    %101 = vector.extract_strided_slice %100 {offsets = [0, 0, 0], sizes = [1, 8, 8], strides = [1, 1, 1]} : vector<4x8x8xf32> to vector<1x8x8xf32>
    %102 = vector.shape_cast %101 : vector<1x8x8xf32> to vector<8x8xf32>
    %103 = vector.extract_strided_slice %100 {offsets = [1, 0, 0], sizes = [1, 8, 8], strides = [1, 1, 1]} : vector<4x8x8xf32> to vector<1x8x8xf32>
    %104 = vector.shape_cast %103 : vector<1x8x8xf32> to vector<8x8xf32>
    %105 = vector.extract_strided_slice %100 {offsets = [2, 0, 0], sizes = [1, 8, 8], strides = [1, 1, 1]} : vector<4x8x8xf32> to vector<1x8x8xf32>
    %106 = vector.shape_cast %105 : vector<1x8x8xf32> to vector<8x8xf32>
    %107 = vector.extract_strided_slice %100 {offsets = [3, 0, 0], sizes = [1, 8, 8], strides = [1, 1, 1]} : vector<4x8x8xf32> to vector<1x8x8xf32>
    %108 = vector.shape_cast %107 : vector<1x8x8xf32> to vector<8x8xf32>
    %109 = tpu.concatenate %102, %104, %106, %108 in 1 : vector<8x8xf32>, vector<8x8xf32>, vector<8x8xf32>, vector<8x8xf32> -> vector<8x32xf32>
    %110 = arith.truncf %109 : vector<8x32xf32> to vector<8x32xbf16>
    %c0_34 = arith.constant 0 : index
    %c0_35 = arith.constant 0 : index
    %c0_36 = arith.constant 0 : index
    %111 = vector.load %arg10[%c0_34, %c0_35, %c0_36] : memref<2x32x32xbf16, #tpu.memory_space<vmem>>, vector<1x32x32xbf16>
    %112 = vector.shape_cast %111 : vector<1x32x32xbf16> to vector<32x32xbf16>
    %cst_37 = arith.constant dense<0.000000e+00> : vector<8x32xf32>
    %113 = tpu.matmul %110, %112, %cst_37 {dimension_numbers = #tpu.dot_dimension_numbers<[1], [0], [0], [1], [0, 0, 1, 1], [], []>} : vector<8x32xbf16>, vector<32x32xbf16>, vector<8x32xf32> -> vector<8x32xf32>
    %c0_38 = arith.constant 0 : index
    %c0_39 = arith.constant 0 : index
    %c0_40 = arith.constant 0 : index
    %114 = vector.load %arg11[%c0_38, %c0_39, %c0_40] : memref<2x1x32xf32, #tpu.memory_space<vmem>>, vector<1x1x32xf32>
    %115 = vector.shape_cast %114 : vector<1x1x32xf32> to vector<1x32xf32>
    %116 = vector.broadcast %115 : vector<1x32xf32> to vector<8x32xf32>
    %117 = arith.addf %113, %116 : vector<8x32xf32>
    %118 = arith.addf %117, %36 : vector<8x32xf32>
    %c0_41 = arith.constant 0 : index
    %c0_42 = arith.constant 0 : index
    %c0_43 = arith.constant 0 : index
    %119 = vector.load %arg12[%c0_41, %c0_42, %c0_43] : memref<2x1x32xf32, #tpu.memory_space<vmem>>, vector<1x1x32xf32>
    %120 = vector.shape_cast %119 : vector<1x1x32xf32> to vector<1x32xf32>
    %c0_44 = arith.constant 0 : index
    %c0_45 = arith.constant 0 : index
    %c0_46 = arith.constant 0 : index
    %121 = vector.load %arg13[%c0_44, %c0_45, %c0_46] : memref<2x1x32xf32, #tpu.memory_space<vmem>>, vector<1x1x32xf32>
    %122 = vector.shape_cast %121 : vector<1x1x32xf32> to vector<1x32xf32>
    %cst_47 = arith.constant dense<0.000000e+00> : vector<8xf32>
    %123 = vector.multi_reduction <add>, %118, %cst_47 [1] : vector<8x32xf32> to vector<8xf32>
    %124 = vector.shape_cast %123 : vector<8xf32> to vector<8x1xf32>
    %cst_48 = arith.constant 3.200000e+01 : f32
    %125 = vector.broadcast %cst_48 : f32 to vector<8x1xf32>
    %126 = arith.divf %124, %125 : vector<8x1xf32>
    %127 = vector.broadcast %126 : vector<8x1xf32> to vector<8x32xf32>
    %128 = arith.subf %118, %127 : vector<8x32xf32>
    %129 = arith.mulf %128, %128 : vector<8x32xf32>
    %cst_49 = arith.constant dense<0.000000e+00> : vector<8xf32>
    %130 = vector.multi_reduction <add>, %129, %cst_49 [1] : vector<8x32xf32> to vector<8xf32>
    %131 = vector.shape_cast %130 : vector<8xf32> to vector<8x1xf32>
    %cst_50 = arith.constant 3.200000e+01 : f32
    %132 = vector.broadcast %cst_50 : f32 to vector<8x1xf32>
    %133 = arith.divf %131, %132 : vector<8x1xf32>
    %cst_51 = arith.constant 9.99999996E-13 : f32
    %134 = vector.broadcast %cst_51 : f32 to vector<8x1xf32>
    %135 = arith.addf %133, %134 : vector<8x1xf32>
    %136 = math.rsqrt %135 : vector<8x1xf32>
    %137 = vector.broadcast %136 : vector<8x1xf32> to vector<8x32xf32>
    %138 = arith.mulf %128, %137 : vector<8x32xf32>
    %139 = vector.broadcast %120 : vector<1x32xf32> to vector<8x32xf32>
    %140 = arith.mulf %138, %139 : vector<8x32xf32>
    %141 = vector.broadcast %122 : vector<1x32xf32> to vector<8x32xf32>
    %142 = arith.addf %140, %141 : vector<8x32xf32>
    %143 = arith.truncf %142 : vector<8x32xf32> to vector<8x32xbf16>
    %c0_52 = arith.constant 0 : index
    %c0_53 = arith.constant 0 : index
    %c0_54 = arith.constant 0 : index
    %144 = vector.load %arg14[%c0_52, %c0_53, %c0_54] : memref<2x32x64xbf16, #tpu.memory_space<vmem>>, vector<1x32x64xbf16>
    %145 = vector.shape_cast %144 : vector<1x32x64xbf16> to vector<32x64xbf16>
    %cst_55 = arith.constant dense<0.000000e+00> : vector<8x64xf32>
    %146 = tpu.matmul %143, %145, %cst_55 {dimension_numbers = #tpu.dot_dimension_numbers<[1], [0], [0], [1], [0, 0, 1, 1], [], []>} : vector<8x32xbf16>, vector<32x64xbf16>, vector<8x64xf32> -> vector<8x64xf32>
    %c0_56 = arith.constant 0 : index
    %c0_57 = arith.constant 0 : index
    %c0_58 = arith.constant 0 : index
    %147 = vector.load %arg15[%c0_56, %c0_57, %c0_58] : memref<2x1x64xf32, #tpu.memory_space<vmem>>, vector<1x1x64xf32>
    %148 = vector.shape_cast %147 : vector<1x1x64xf32> to vector<1x64xf32>
    %149 = vector.broadcast %148 : vector<1x64xf32> to vector<8x64xf32>
    %150 = arith.addf %146, %149 : vector<8x64xf32>
    %cst_59 = arith.constant 5.000000e-01 : f32
    %151 = vector.broadcast %cst_59 : f32 to vector<8x64xf32>
    %152 = arith.mulf %151, %150 : vector<8x64xf32>
    %cst_60 = arith.constant 4.471500e-02 : f32
    %153 = vector.broadcast %cst_60 : f32 to vector<8x64xf32>
    %154 = arith.mulf %153, %150 : vector<8x64xf32>
    %155 = arith.mulf %154, %150 : vector<8x64xf32>
    %156 = arith.mulf %155, %150 : vector<8x64xf32>
    %157 = arith.addf %150, %156 : vector<8x64xf32>
    %cst_61 = arith.constant 0.797884583 : f32
    %158 = vector.broadcast %cst_61 : f32 to vector<8x64xf32>
    %159 = arith.mulf %158, %157 : vector<8x64xf32>
    %160 = math.tanh %159 : vector<8x64xf32>
    %cst_62 = arith.constant 1.000000e+00 : f32
    %161 = vector.broadcast %cst_62 : f32 to vector<8x64xf32>
    %162 = arith.addf %161, %160 : vector<8x64xf32>
    %163 = arith.mulf %152, %162 : vector<8x64xf32>
    %164 = arith.truncf %163 : vector<8x64xf32> to vector<8x64xbf16>
    %c0_63 = arith.constant 0 : index
    %c0_64 = arith.constant 0 : index
    %c0_65 = arith.constant 0 : index
    %165 = vector.load %arg16[%c0_63, %c0_64, %c0_65] : memref<2x64x32xbf16, #tpu.memory_space<vmem>>, vector<1x64x32xbf16>
    %166 = vector.shape_cast %165 : vector<1x64x32xbf16> to vector<64x32xbf16>
    %cst_66 = arith.constant dense<0.000000e+00> : vector<8x32xf32>
    %167 = tpu.matmul %164, %166, %cst_66 {dimension_numbers = #tpu.dot_dimension_numbers<[1], [0], [0], [1], [0, 0, 1, 1], [], []>} : vector<8x64xbf16>, vector<64x32xbf16>, vector<8x32xf32> -> vector<8x32xf32>
    %c0_67 = arith.constant 0 : index
    %c0_68 = arith.constant 0 : index
    %c0_69 = arith.constant 0 : index
    %168 = vector.load %arg17[%c0_67, %c0_68, %c0_69] : memref<2x1x32xf32, #tpu.memory_space<vmem>>, vector<1x1x32xf32>
    %169 = vector.shape_cast %168 : vector<1x1x32xf32> to vector<1x32xf32>
    %170 = vector.broadcast %169 : vector<1x32xf32> to vector<8x32xf32>
    %171 = arith.addf %167, %170 : vector<8x32xf32>
    %172 = arith.addf %171, %142 : vector<8x32xf32>
    %c0_70 = arith.constant 0 : index
    %c0_71 = arith.constant 0 : index
    %c0_72 = arith.constant 0 : index
    %173 = vector.load %arg18[%c0_70, %c0_71, %c0_72] : memref<2x1x32xf32, #tpu.memory_space<vmem>>, vector<1x1x32xf32>
    %174 = vector.shape_cast %173 : vector<1x1x32xf32> to vector<1x32xf32>
    %c0_73 = arith.constant 0 : index
    %c0_74 = arith.constant 0 : index
    %c0_75 = arith.constant 0 : index
    %175 = vector.load %arg19[%c0_73, %c0_74, %c0_75] : memref<2x1x32xf32, #tpu.memory_space<vmem>>, vector<1x1x32xf32>
    %176 = vector.shape_cast %175 : vector<1x1x32xf32> to vector<1x32xf32>
    %cst_76 = arith.constant dense<0.000000e+00> : vector<8xf32>
    %177 = vector.multi_reduction <add>, %172, %cst_76 [1] : vector<8x32xf32> to vector<8xf32>
    %178 = vector.shape_cast %177 : vector<8xf32> to vector<8x1xf32>
    %cst_77 = arith.constant 3.200000e+01 : f32
    %179 = vector.broadcast %cst_77 : f32 to vector<8x1xf32>
    %180 = arith.divf %178, %179 : vector<8x1xf32>
    %181 = vector.broadcast %180 : vector<8x1xf32> to vector<8x32xf32>
    %182 = arith.subf %172, %181 : vector<8x32xf32>
    %183 = arith.mulf %182, %182 : vector<8x32xf32>
    %cst_78 = arith.constant dense<0.000000e+00> : vector<8xf32>
    %184 = vector.multi_reduction <add>, %183, %cst_78 [1] : vector<8x32xf32> to vector<8xf32>
    %185 = vector.shape_cast %184 : vector<8xf32> to vector<8x1xf32>
    %cst_79 = arith.constant 3.200000e+01 : f32
    %186 = vector.broadcast %cst_79 : f32 to vector<8x1xf32>
    %187 = arith.divf %185, %186 : vector<8x1xf32>
    %cst_80 = arith.constant 9.99999996E-13 : f32
    %188 = vector.broadcast %cst_80 : f32 to vector<8x1xf32>
    %189 = arith.addf %187, %188 : vector<8x1xf32>
    %190 = math.rsqrt %189 : vector<8x1xf32>
    %191 = vector.broadcast %190 : vector<8x1xf32> to vector<8x32xf32>
    %192 = arith.mulf %182, %191 : vector<8x32xf32>
    %193 = vector.broadcast %174 : vector<1x32xf32> to vector<8x32xf32>
    %194 = arith.mulf %192, %193 : vector<8x32xf32>
    %195 = vector.broadcast %176 : vector<1x32xf32> to vector<8x32xf32>
    %196 = arith.addf %194, %195 : vector<8x32xf32>
    %197 = arith.truncf %196 : vector<8x32xf32> to vector<8x32xbf16>
    %c1 = arith.constant 1 : index
    %c0_81 = arith.constant 0 : index
    %c0_82 = arith.constant 0 : index
    %198 = vector.load %arg8[%c1, %c0_81, %c0_82] : memref<2x32x96xbf16, #tpu.memory_space<vmem>>, vector<1x32x96xbf16>
    %199 = vector.shape_cast %198 : vector<1x32x96xbf16> to vector<32x96xbf16>
    %cst_83 = arith.constant dense<0.000000e+00> : vector<8x96xf32>
    %200 = tpu.matmul %197, %199, %cst_83 {dimension_numbers = #tpu.dot_dimension_numbers<[1], [0], [0], [1], [0, 0, 1, 1], [], []>} : vector<8x32xbf16>, vector<32x96xbf16>, vector<8x96xf32> -> vector<8x96xf32>
    %c1_84 = arith.constant 1 : index
    %c0_85 = arith.constant 0 : index
    %c0_86 = arith.constant 0 : index
    %201 = vector.load %arg9[%c1_84, %c0_85, %c0_86] : memref<2x1x96xf32, #tpu.memory_space<vmem>>, vector<1x1x96xf32>
    %202 = vector.shape_cast %201 : vector<1x1x96xf32> to vector<1x96xf32>
    %203 = vector.broadcast %202 : vector<1x96xf32> to vector<8x96xf32>
    %204 = arith.addf %200, %203 : vector<8x96xf32>
    %205 = vector.extract_strided_slice %204 {offsets = [0, 0], sizes = [8, 32], strides = [1, 1]} : vector<8x96xf32> to vector<8x32xf32>
    %206 = vector.extract_strided_slice %205 {offsets = [0, 0], sizes = [8, 8], strides = [1, 1]} : vector<8x32xf32> to vector<8x8xf32>
    %207 = vector.extract_strided_slice %205 {offsets = [0, 8], sizes = [8, 8], strides = [1, 1]} : vector<8x32xf32> to vector<8x8xf32>
    %208 = vector.extract_strided_slice %205 {offsets = [0, 16], sizes = [8, 8], strides = [1, 1]} : vector<8x32xf32> to vector<8x8xf32>
    %209 = vector.extract_strided_slice %205 {offsets = [0, 24], sizes = [8, 8], strides = [1, 1]} : vector<8x32xf32> to vector<8x8xf32>
    %210 = vector.shape_cast %206 : vector<8x8xf32> to vector<1x8x8xf32>
    %211 = vector.shape_cast %207 : vector<8x8xf32> to vector<1x8x8xf32>
    %212 = vector.shape_cast %208 : vector<8x8xf32> to vector<1x8x8xf32>
    %213 = vector.shape_cast %209 : vector<8x8xf32> to vector<1x8x8xf32>
    %214 = tpu.concatenate %210, %211, %212, %213 in 0 : vector<1x8x8xf32>, vector<1x8x8xf32>, vector<1x8x8xf32>, vector<1x8x8xf32> -> vector<4x8x8xf32>
    %215 = arith.truncf %214 : vector<4x8x8xf32> to vector<4x8x8xbf16>
    %216 = vector.extract_strided_slice %204 {offsets = [0, 32], sizes = [8, 32], strides = [1, 1]} : vector<8x96xf32> to vector<8x32xf32>
    %217 = vector.extract_strided_slice %216 {offsets = [0, 0], sizes = [8, 8], strides = [1, 1]} : vector<8x32xf32> to vector<8x8xf32>
    %218 = vector.extract_strided_slice %216 {offsets = [0, 8], sizes = [8, 8], strides = [1, 1]} : vector<8x32xf32> to vector<8x8xf32>
    %219 = vector.extract_strided_slice %216 {offsets = [0, 16], sizes = [8, 8], strides = [1, 1]} : vector<8x32xf32> to vector<8x8xf32>
    %220 = vector.extract_strided_slice %216 {offsets = [0, 24], sizes = [8, 8], strides = [1, 1]} : vector<8x32xf32> to vector<8x8xf32>
    %221 = vector.shape_cast %217 : vector<8x8xf32> to vector<1x8x8xf32>
    %222 = vector.shape_cast %218 : vector<8x8xf32> to vector<1x8x8xf32>
    %223 = vector.shape_cast %219 : vector<8x8xf32> to vector<1x8x8xf32>
    %224 = vector.shape_cast %220 : vector<8x8xf32> to vector<1x8x8xf32>
    %225 = tpu.concatenate %221, %222, %223, %224 in 0 : vector<1x8x8xf32>, vector<1x8x8xf32>, vector<1x8x8xf32>, vector<1x8x8xf32> -> vector<4x8x8xf32>
    %226 = arith.truncf %225 : vector<4x8x8xf32> to vector<4x8x8xbf16>
    %227 = vector.extract_strided_slice %204 {offsets = [0, 64], sizes = [8, 32], strides = [1, 1]} : vector<8x96xf32> to vector<8x32xf32>
    %228 = vector.extract_strided_slice %227 {offsets = [0, 0], sizes = [8, 8], strides = [1, 1]} : vector<8x32xf32> to vector<8x8xf32>
    %229 = vector.extract_strided_slice %227 {offsets = [0, 8], sizes = [8, 8], strides = [1, 1]} : vector<8x32xf32> to vector<8x8xf32>
    %230 = vector.extract_strided_slice %227 {offsets = [0, 16], sizes = [8, 8], strides = [1, 1]} : vector<8x32xf32> to vector<8x8xf32>
    %231 = vector.extract_strided_slice %227 {offsets = [0, 24], sizes = [8, 8], strides = [1, 1]} : vector<8x32xf32> to vector<8x8xf32>
    %232 = vector.shape_cast %228 : vector<8x8xf32> to vector<1x8x8xf32>
    %233 = vector.shape_cast %229 : vector<8x8xf32> to vector<1x8x8xf32>
    %234 = vector.shape_cast %230 : vector<8x8xf32> to vector<1x8x8xf32>
    %235 = vector.shape_cast %231 : vector<8x8xf32> to vector<1x8x8xf32>
    %236 = tpu.concatenate %232, %233, %234, %235 in 0 : vector<1x8x8xf32>, vector<1x8x8xf32>, vector<1x8x8xf32>, vector<1x8x8xf32> -> vector<4x8x8xf32>
    %237 = arith.truncf %236 : vector<4x8x8xf32> to vector<4x8x8xbf16>
    "tpu.trace_start"() <{level = 10 : i32, message = "hqd,hkd->hqk"}> : () -> ()
    %cst_87 = arith.constant dense<0.000000e+00> : vector<4x8x8xf32>
    %238 = tpu.matmul %215, %226, %cst_87 {dimension_numbers = #tpu.dot_dimension_numbers<[2], [2], [1], [1], [0, 0, 0, 1, 1, 1], [0], [0]>} : vector<4x8x8xbf16>, vector<4x8x8xbf16>, vector<4x8x8xf32> -> vector<4x8x8xf32>
    "tpu.trace_stop"() : () -> ()
    %cst_88 = arith.constant 0.353553385 : f32
    %239 = vector.broadcast %cst_88 : f32 to vector<4x8x8xf32>
    %240 = arith.mulf %238, %239 : vector<4x8x8xf32>
    %241 = vector.broadcast %42 : vector<1x1x8xf32> to vector<4x8x8xf32>
    %242 = arith.addf %240, %241 : vector<4x8x8xf32>
    %cst_89 = arith.constant dense<0xFF800000> : vector<4x8xf32>
    %243 = vector.multi_reduction <maximumf>, %242, %cst_89 [2] : vector<4x8x8xf32> to vector<4x8xf32>
    %244 = vector.shape_cast %243 : vector<4x8xf32> to vector<4x8x1xf32>
    %245 = vector.broadcast %244 : vector<4x8x1xf32> to vector<4x8x8xf32>
    %246 = arith.subf %242, %245 : vector<4x8x8xf32>
    %247 = math.exp %246 : vector<4x8x8xf32>
    %cst_90 = arith.constant dense<0.000000e+00> : vector<4x8xf32>
    %248 = vector.multi_reduction <add>, %247, %cst_90 [2] : vector<4x8x8xf32> to vector<4x8xf32>
    %249 = vector.shape_cast %248 : vector<4x8xf32> to vector<4x8x1xf32>
    %250 = tpu.reciprocal %249 {approx = true} : vector<4x8x1xf32> -> vector<4x8x1xf32>
    %251 = vector.broadcast %250 : vector<4x8x1xf32> to vector<4x8x8xf32>
    %252 = arith.mulf %247, %251 : vector<4x8x8xf32>
    %253 = arith.truncf %252 : vector<4x8x8xf32> to vector<4x8x8xbf16>
    "tpu.trace_start"() <{level = 10 : i32, message = "hqk,hkd->hqd"}> : () -> ()
    %cst_91 = arith.constant dense<0.000000e+00> : vector<4x8x8xf32>
    %254 = tpu.matmul %253, %237, %cst_91 {dimension_numbers = #tpu.dot_dimension_numbers<[2], [1], [1], [2], [0, 0, 0, 1, 1, 2], [0], [0]>} : vector<4x8x8xbf16>, vector<4x8x8xbf16>, vector<4x8x8xf32> -> vector<4x8x8xf32>
    "tpu.trace_stop"() : () -> ()
    %255 = vector.extract_strided_slice %254 {offsets = [0, 0, 0], sizes = [1, 8, 8], strides = [1, 1, 1]} : vector<4x8x8xf32> to vector<1x8x8xf32>
    %256 = vector.shape_cast %255 : vector<1x8x8xf32> to vector<8x8xf32>
    %257 = vector.extract_strided_slice %254 {offsets = [1, 0, 0], sizes = [1, 8, 8], strides = [1, 1, 1]} : vector<4x8x8xf32> to vector<1x8x8xf32>
    %258 = vector.shape_cast %257 : vector<1x8x8xf32> to vector<8x8xf32>
    %259 = vector.extract_strided_slice %254 {offsets = [2, 0, 0], sizes = [1, 8, 8], strides = [1, 1, 1]} : vector<4x8x8xf32> to vector<1x8x8xf32>
    %260 = vector.shape_cast %259 : vector<1x8x8xf32> to vector<8x8xf32>
    %261 = vector.extract_strided_slice %254 {offsets = [3, 0, 0], sizes = [1, 8, 8], strides = [1, 1, 1]} : vector<4x8x8xf32> to vector<1x8x8xf32>
    %262 = vector.shape_cast %261 : vector<1x8x8xf32> to vector<8x8xf32>
    %263 = tpu.concatenate %256, %258, %260, %262 in 1 : vector<8x8xf32>, vector<8x8xf32>, vector<8x8xf32>, vector<8x8xf32> -> vector<8x32xf32>
    %264 = arith.truncf %263 : vector<8x32xf32> to vector<8x32xbf16>
    %c1_92 = arith.constant 1 : index
    %c0_93 = arith.constant 0 : index
    %c0_94 = arith.constant 0 : index
    %265 = vector.load %arg10[%c1_92, %c0_93, %c0_94] : memref<2x32x32xbf16, #tpu.memory_space<vmem>>, vector<1x32x32xbf16>
    %266 = vector.shape_cast %265 : vector<1x32x32xbf16> to vector<32x32xbf16>
    %cst_95 = arith.constant dense<0.000000e+00> : vector<8x32xf32>
    %267 = tpu.matmul %264, %266, %cst_95 {dimension_numbers = #tpu.dot_dimension_numbers<[1], [0], [0], [1], [0, 0, 1, 1], [], []>} : vector<8x32xbf16>, vector<32x32xbf16>, vector<8x32xf32> -> vector<8x32xf32>
    %c1_96 = arith.constant 1 : index
    %c0_97 = arith.constant 0 : index
    %c0_98 = arith.constant 0 : index
    %268 = vector.load %arg11[%c1_96, %c0_97, %c0_98] : memref<2x1x32xf32, #tpu.memory_space<vmem>>, vector<1x1x32xf32>
    %269 = vector.shape_cast %268 : vector<1x1x32xf32> to vector<1x32xf32>
    %270 = vector.broadcast %269 : vector<1x32xf32> to vector<8x32xf32>
    %271 = arith.addf %267, %270 : vector<8x32xf32>
    %272 = arith.addf %271, %196 : vector<8x32xf32>
    %c1_99 = arith.constant 1 : index
    %c0_100 = arith.constant 0 : index
    %c0_101 = arith.constant 0 : index
    %273 = vector.load %arg12[%c1_99, %c0_100, %c0_101] : memref<2x1x32xf32, #tpu.memory_space<vmem>>, vector<1x1x32xf32>
    %274 = vector.shape_cast %273 : vector<1x1x32xf32> to vector<1x32xf32>
    %c1_102 = arith.constant 1 : index
    %c0_103 = arith.constant 0 : index
    %c0_104 = arith.constant 0 : index
    %275 = vector.load %arg13[%c1_102, %c0_103, %c0_104] : memref<2x1x32xf32, #tpu.memory_space<vmem>>, vector<1x1x32xf32>
    %276 = vector.shape_cast %275 : vector<1x1x32xf32> to vector<1x32xf32>
    %cst_105 = arith.constant dense<0.000000e+00> : vector<8xf32>
    %277 = vector.multi_reduction <add>, %272, %cst_105 [1] : vector<8x32xf32> to vector<8xf32>
    %278 = vector.shape_cast %277 : vector<8xf32> to vector<8x1xf32>
    %cst_106 = arith.constant 3.200000e+01 : f32
    %279 = vector.broadcast %cst_106 : f32 to vector<8x1xf32>
    %280 = arith.divf %278, %279 : vector<8x1xf32>
    %281 = vector.broadcast %280 : vector<8x1xf32> to vector<8x32xf32>
    %282 = arith.subf %272, %281 : vector<8x32xf32>
    %283 = arith.mulf %282, %282 : vector<8x32xf32>
    %cst_107 = arith.constant dense<0.000000e+00> : vector<8xf32>
    %284 = vector.multi_reduction <add>, %283, %cst_107 [1] : vector<8x32xf32> to vector<8xf32>
    %285 = vector.shape_cast %284 : vector<8xf32> to vector<8x1xf32>
    %cst_108 = arith.constant 3.200000e+01 : f32
    %286 = vector.broadcast %cst_108 : f32 to vector<8x1xf32>
    %287 = arith.divf %285, %286 : vector<8x1xf32>
    %cst_109 = arith.constant 9.99999996E-13 : f32
    %288 = vector.broadcast %cst_109 : f32 to vector<8x1xf32>
    %289 = arith.addf %287, %288 : vector<8x1xf32>
    %290 = math.rsqrt %289 : vector<8x1xf32>
    %291 = vector.broadcast %290 : vector<8x1xf32> to vector<8x32xf32>
    %292 = arith.mulf %282, %291 : vector<8x32xf32>
    %293 = vector.broadcast %274 : vector<1x32xf32> to vector<8x32xf32>
    %294 = arith.mulf %292, %293 : vector<8x32xf32>
    %295 = vector.broadcast %276 : vector<1x32xf32> to vector<8x32xf32>
    %296 = arith.addf %294, %295 : vector<8x32xf32>
    %297 = arith.truncf %296 : vector<8x32xf32> to vector<8x32xbf16>
    %c1_110 = arith.constant 1 : index
    %c0_111 = arith.constant 0 : index
    %c0_112 = arith.constant 0 : index
    %298 = vector.load %arg14[%c1_110, %c0_111, %c0_112] : memref<2x32x64xbf16, #tpu.memory_space<vmem>>, vector<1x32x64xbf16>
    %299 = vector.shape_cast %298 : vector<1x32x64xbf16> to vector<32x64xbf16>
    %cst_113 = arith.constant dense<0.000000e+00> : vector<8x64xf32>
    %300 = tpu.matmul %297, %299, %cst_113 {dimension_numbers = #tpu.dot_dimension_numbers<[1], [0], [0], [1], [0, 0, 1, 1], [], []>} : vector<8x32xbf16>, vector<32x64xbf16>, vector<8x64xf32> -> vector<8x64xf32>
    %c1_114 = arith.constant 1 : index
    %c0_115 = arith.constant 0 : index
    %c0_116 = arith.constant 0 : index
    %301 = vector.load %arg15[%c1_114, %c0_115, %c0_116] : memref<2x1x64xf32, #tpu.memory_space<vmem>>, vector<1x1x64xf32>
    %302 = vector.shape_cast %301 : vector<1x1x64xf32> to vector<1x64xf32>
    %303 = vector.broadcast %302 : vector<1x64xf32> to vector<8x64xf32>
    %304 = arith.addf %300, %303 : vector<8x64xf32>
    %cst_117 = arith.constant 5.000000e-01 : f32
    %305 = vector.broadcast %cst_117 : f32 to vector<8x64xf32>
    %306 = arith.mulf %305, %304 : vector<8x64xf32>
    %cst_118 = arith.constant 4.471500e-02 : f32
    %307 = vector.broadcast %cst_118 : f32 to vector<8x64xf32>
    %308 = arith.mulf %307, %304 : vector<8x64xf32>
    %309 = arith.mulf %308, %304 : vector<8x64xf32>
    %310 = arith.mulf %309, %304 : vector<8x64xf32>
    %311 = arith.addf %304, %310 : vector<8x64xf32>
    %cst_119 = arith.constant 0.797884583 : f32
    %312 = vector.broadcast %cst_119 : f32 to vector<8x64xf32>
    %313 = arith.mulf %312, %311 : vector<8x64xf32>
    %314 = math.tanh %313 : vector<8x64xf32>
    %cst_120 = arith.constant 1.000000e+00 : f32
    %315 = vector.broadcast %cst_120 : f32 to vector<8x64xf32>
    %316 = arith.addf %315, %314 : vector<8x64xf32>
    %317 = arith.mulf %306, %316 : vector<8x64xf32>
    %318 = arith.truncf %317 : vector<8x64xf32> to vector<8x64xbf16>
    %c1_121 = arith.constant 1 : index
    %c0_122 = arith.constant 0 : index
    %c0_123 = arith.constant 0 : index
    %319 = vector.load %arg16[%c1_121, %c0_122, %c0_123] : memref<2x64x32xbf16, #tpu.memory_space<vmem>>, vector<1x64x32xbf16>
    %320 = vector.shape_cast %319 : vector<1x64x32xbf16> to vector<64x32xbf16>
    %cst_124 = arith.constant dense<0.000000e+00> : vector<8x32xf32>
    %321 = tpu.matmul %318, %320, %cst_124 {dimension_numbers = #tpu.dot_dimension_numbers<[1], [0], [0], [1], [0, 0, 1, 1], [], []>} : vector<8x64xbf16>, vector<64x32xbf16>, vector<8x32xf32> -> vector<8x32xf32>
    %c1_125 = arith.constant 1 : index
    %c0_126 = arith.constant 0 : index
    %c0_127 = arith.constant 0 : index
    %322 = vector.load %arg17[%c1_125, %c0_126, %c0_127] : memref<2x1x32xf32, #tpu.memory_space<vmem>>, vector<1x1x32xf32>
    %323 = vector.shape_cast %322 : vector<1x1x32xf32> to vector<1x32xf32>
    %324 = vector.broadcast %323 : vector<1x32xf32> to vector<8x32xf32>
    %325 = arith.addf %321, %324 : vector<8x32xf32>
    %326 = arith.addf %325, %296 : vector<8x32xf32>
    %c1_128 = arith.constant 1 : index
    %c0_129 = arith.constant 0 : index
    %c0_130 = arith.constant 0 : index
    %327 = vector.load %arg18[%c1_128, %c0_129, %c0_130] : memref<2x1x32xf32, #tpu.memory_space<vmem>>, vector<1x1x32xf32>
    %328 = vector.shape_cast %327 : vector<1x1x32xf32> to vector<1x32xf32>
    %c1_131 = arith.constant 1 : index
    %c0_132 = arith.constant 0 : index
    %c0_133 = arith.constant 0 : index
    %329 = vector.load %arg19[%c1_131, %c0_132, %c0_133] : memref<2x1x32xf32, #tpu.memory_space<vmem>>, vector<1x1x32xf32>
    %330 = vector.shape_cast %329 : vector<1x1x32xf32> to vector<1x32xf32>
    %cst_134 = arith.constant dense<0.000000e+00> : vector<8xf32>
    %331 = vector.multi_reduction <add>, %326, %cst_134 [1] : vector<8x32xf32> to vector<8xf32>
    %332 = vector.shape_cast %331 : vector<8xf32> to vector<8x1xf32>
    %cst_135 = arith.constant 3.200000e+01 : f32
    %333 = vector.broadcast %cst_135 : f32 to vector<8x1xf32>
    %334 = arith.divf %332, %333 : vector<8x1xf32>
    %335 = vector.broadcast %334 : vector<8x1xf32> to vector<8x32xf32>
    %336 = arith.subf %326, %335 : vector<8x32xf32>
    %337 = arith.mulf %336, %336 : vector<8x32xf32>
    %cst_136 = arith.constant dense<0.000000e+00> : vector<8xf32>
    %338 = vector.multi_reduction <add>, %337, %cst_136 [1] : vector<8x32xf32> to vector<8xf32>
    %339 = vector.shape_cast %338 : vector<8xf32> to vector<8x1xf32>
    %cst_137 = arith.constant 3.200000e+01 : f32
    %340 = vector.broadcast %cst_137 : f32 to vector<8x1xf32>
    %341 = arith.divf %339, %340 : vector<8x1xf32>
    %cst_138 = arith.constant 9.99999996E-13 : f32
    %342 = vector.broadcast %cst_138 : f32 to vector<8x1xf32>
    %343 = arith.addf %341, %342 : vector<8x1xf32>
    %344 = math.rsqrt %343 : vector<8x1xf32>
    %345 = vector.broadcast %344 : vector<8x1xf32> to vector<8x32xf32>
    %346 = arith.mulf %336, %345 : vector<8x32xf32>
    %347 = vector.broadcast %328 : vector<1x32xf32> to vector<8x32xf32>
    %348 = arith.mulf %346, %347 : vector<8x32xf32>
    %349 = vector.broadcast %330 : vector<1x32xf32> to vector<8x32xf32>
    %350 = arith.addf %348, %349 : vector<8x32xf32>
    %351 = vector.extract_strided_slice %350 {offsets = [0, 0], sizes = [1, 32], strides = [1, 1]} : vector<8x32xf32> to vector<1x32xf32>
    %352 = arith.truncf %351 : vector<1x32xf32> to vector<1x32xbf16>
    %c0_139 = arith.constant 0 : index
    %c0_140 = arith.constant 0 : index
    %353 = vector.load %arg20[%c0_139, %c0_140] : memref<32x32xbf16, #tpu.memory_space<vmem>>, vector<32x32xbf16>
    %cst_141 = arith.constant dense<0.000000e+00> : vector<1x32xf32>
    %354 = tpu.matmul %352, %353, %cst_141 {dimension_numbers = #tpu.dot_dimension_numbers<[1], [0], [0], [1], [0, 0, 1, 1], [], []>} : vector<1x32xbf16>, vector<32x32xbf16>, vector<1x32xf32> -> vector<1x32xf32>
    %c0_142 = arith.constant 0 : index
    %c0_143 = arith.constant 0 : index
    %355 = vector.load %arg21[%c0_142, %c0_143] : memref<1x32xf32, #tpu.memory_space<vmem>>, vector<1x32xf32>
    %356 = arith.addf %354, %355 : vector<1x32xf32>
    %357 = math.tanh %356 : vector<1x32xf32>
    %358 = arith.truncf %357 : vector<1x32xf32> to vector<1x32xbf16>
    %c0_144 = arith.constant 0 : index
    %c0_145 = arith.constant 0 : index
    %359 = vector.load %arg22[%c0_144, %c0_145] : memref<32x128xbf16, #tpu.memory_space<vmem>>, vector<32x128xbf16>
    %cst_146 = arith.constant dense<0.000000e+00> : vector<1x128xf32>
    %360 = tpu.matmul %358, %359, %cst_146 {dimension_numbers = #tpu.dot_dimension_numbers<[1], [0], [0], [1], [0, 0, 1, 1], [], []>} : vector<1x32xbf16>, vector<32x128xbf16>, vector<1x128xf32> -> vector<1x128xf32>
    %c0_147 = arith.constant 0 : index
    %c0_148 = arith.constant 0 : index
    %361 = vector.load %arg23[%c0_147, %c0_148] : memref<1x128xf32, #tpu.memory_space<vmem>>, vector<1x128xf32>
    %362 = arith.addf %360, %361 : vector<1x128xf32>
    %cst_149 = arith.constant 0.000000e+00 : f32
    %363 = vector.broadcast %cst_149 : f32 to vector<1x128xf32>
    %364 = arith.maximumf %362, %363 : vector<1x128xf32>
    %c0_150 = arith.constant 0 : index
    %c0_151 = arith.constant 0 : index
    %c0_152 = arith.constant 0 : index
    %365 = vector.load %arg24[%c0_150, %c0_151, %c0_152] : memref<1x1x128xf32, #tpu.memory_space<vmem>>, vector<1x1x128xf32>
    %366 = vector.shape_cast %365 : vector<1x1x128xf32> to vector<1x128xf32>
    %367 = vector.shape_cast %364 : vector<1x128xf32> to vector<1x1x128xf32>
    tpu.vector_store %arg24[%c0_150, %c0_151, %c0_152], %367 {strides = array<i32>} : memref<1x1x128xf32, #tpu.memory_space<vmem>>, vector<1x1x128xf32>,
    return
  }
  func.func @transform_0(%arg0: i32) -> (i32, i32, i32) {
    %c0_i32 = arith.constant 0 : i32
    %c0_i32_0 = arith.constant 0 : i32
    %c0_i32_1 = arith.constant 0 : i32
    return %arg0, %c0_i32, %c0_i32_0 : i32, i32, i32
  }
  func.func @transform_1(%arg0: i32) -> (i32, i32, i32) {
    %c0_i32 = arith.constant 0 : i32
    %c0_i32_0 = arith.constant 0 : i32
    %c0_i32_1 = arith.constant 0 : i32
    return %arg0, %c0_i32, %c0_i32_0 : i32, i32, i32
  }
  func.func @transform_2(%arg0: i32) -> (i32, i32) {
    %c0_i32 = arith.constant 0 : i32
    %c0_i32_0 = arith.constant 0 : i32
    %c0_i32_1 = arith.constant 0 : i32
    return %c0_i32, %c0_i32_0 : i32, i32
  }
  func.func @transform_3(%arg0: i32) -> (i32, i32) {
    %c0_i32 = arith.constant 0 : i32
    %c0_i32_0 = arith.constant 0 : i32
    %c0_i32_1 = arith.constant 0 : i32
    return %c0_i32, %c0_i32_0 : i32, i32
  }
  func.func @transform_4(%arg0: i32) -> (i32, i32) {
    %c0_i32 = arith.constant 0 : i32
    %c0_i32_0 = arith.constant 0 : i32
    %c0_i32_1 = arith.constant 0 : i32
    return %c0_i32, %c0_i32_0 : i32, i32
  }
  func.func @transform_5(%arg0: i32) -> (i32, i32) {
    %c0_i32 = arith.constant 0 : i32
    %c0_i32_0 = arith.constant 0 : i32
    %c0_i32_1 = arith.constant 0 : i32
    return %c0_i32, %c0_i32_0 : i32, i32
  }
  func.func @transform_6(%arg0: i32) -> (i32, i32) {
    %c0_i32 = arith.constant 0 : i32
    %c0_i32_0 = arith.constant 0 : i32
    %c0_i32_1 = arith.constant 0 : i32
    return %c0_i32, %c0_i32_0 : i32, i32
  }
  func.func @transform_7(%arg0: i32) -> (i32, i32, i32) {
    %c0_i32 = arith.constant 0 : i32
    %c0_i32_0 = arith.constant 0 : i32
    %c0_i32_1 = arith.constant 0 : i32
    %c0_i32_2 = arith.constant 0 : i32
    return %c0_i32, %c0_i32_0, %c0_i32_1 : i32, i32, i32
  }
  func.func @transform_8(%arg0: i32) -> (i32, i32, i32) {
    %c0_i32 = arith.constant 0 : i32
    %c0_i32_0 = arith.constant 0 : i32
    %c0_i32_1 = arith.constant 0 : i32
    %c0_i32_2 = arith.constant 0 : i32
    return %c0_i32, %c0_i32_0, %c0_i32_1 : i32, i32, i32
  }
  func.func @transform_9(%arg0: i32) -> (i32, i32, i32) {
    %c0_i32 = arith.constant 0 : i32
    %c0_i32_0 = arith.constant 0 : i32
    %c0_i32_1 = arith.constant 0 : i32
    %c0_i32_2 = arith.constant 0 : i32
    return %c0_i32, %c0_i32_0, %c0_i32_1 : i32, i32, i32
  }
  func.func @transform_10(%arg0: i32) -> (i32, i32, i32) {
    %c0_i32 = arith.constant 0 : i32
    %c0_i32_0 = arith.constant 0 : i32
    %c0_i32_1 = arith.constant 0 : i32
    %c0_i32_2 = arith.constant 0 : i32
    return %c0_i32, %c0_i32_0, %c0_i32_1 : i32, i32, i32
  }
  func.func @transform_11(%arg0: i32) -> (i32, i32, i32) {
    %c0_i32 = arith.constant 0 : i32
    %c0_i32_0 = arith.constant 0 : i32
    %c0_i32_1 = arith.constant 0 : i32
    %c0_i32_2 = arith.constant 0 : i32
    return %c0_i32, %c0_i32_0, %c0_i32_1 : i32, i32, i32
  }
  func.func @transform_12(%arg0: i32) -> (i32, i32, i32) {
    %c0_i32 = arith.constant 0 : i32
    %c0_i32_0 = arith.constant 0 : i32
    %c0_i32_1 = arith.constant 0 : i32
    %c0_i32_2 = arith.constant 0 : i32
    return %c0_i32, %c0_i32_0, %c0_i32_1 : i32, i32, i32
  }
  func.func @transform_13(%arg0: i32) -> (i32, i32, i32) {
    %c0_i32 = arith.constant 0 : i32
    %c0_i32_0 = arith.constant 0 : i32
    %c0_i32_1 = arith.constant 0 : i32
    %c0_i32_2 = arith.constant 0 : i32
    return %c0_i32, %c0_i32_0, %c0_i32_1 : i32, i32, i32
  }
  func.func @transform_14(%arg0: i32) -> (i32, i32, i32) {
    %c0_i32 = arith.constant 0 : i32
    %c0_i32_0 = arith.constant 0 : i32
    %c0_i32_1 = arith.constant 0 : i32
    %c0_i32_2 = arith.constant 0 : i32
    return %c0_i32, %c0_i32_0, %c0_i32_1 : i32, i32, i32
  }
  func.func @transform_15(%arg0: i32) -> (i32, i32, i32) {
    %c0_i32 = arith.constant 0 : i32
    %c0_i32_0 = arith.constant 0 : i32
    %c0_i32_1 = arith.constant 0 : i32
    %c0_i32_2 = arith.constant 0 : i32
    return %c0_i32, %c0_i32_0, %c0_i32_1 : i32, i32, i32
  }
  func.func @transform_16(%arg0: i32) -> (i32, i32, i32) {
    %c0_i32 = arith.constant 0 : i32
    %c0_i32_0 = arith.constant 0 : i32
    %c0_i32_1 = arith.constant 0 : i32
    %c0_i32_2 = arith.constant 0 : i32
    return %c0_i32, %c0_i32_0, %c0_i32_1 : i32, i32, i32
  }
  func.func @transform_17(%arg0: i32) -> (i32, i32, i32) {
    %c0_i32 = arith.constant 0 : i32
    %c0_i32_0 = arith.constant 0 : i32
    %c0_i32_1 = arith.constant 0 : i32
    %c0_i32_2 = arith.constant 0 : i32
    return %c0_i32, %c0_i32_0, %c0_i32_1 : i32, i32, i32
  }
  func.func @transform_18(%arg0: i32) -> (i32, i32, i32) {
    %c0_i32 = arith.constant 0 : i32
    %c0_i32_0 = arith.constant 0 : i32
    %c0_i32_1 = arith.constant 0 : i32
    %c0_i32_2 = arith.constant 0 : i32
    return %c0_i32, %c0_i32_0, %c0_i32_1 : i32, i32, i32
  }
  func.func @transform_19(%arg0: i32) -> (i32, i32) {
    %c0_i32 = arith.constant 0 : i32
    %c0_i32_0 = arith.constant 0 : i32
    %c0_i32_1 = arith.constant 0 : i32
    return %c0_i32, %c0_i32_0 : i32, i32
  }
  func.func @transform_20(%arg0: i32) -> (i32, i32) {
    %c0_i32 = arith.constant 0 : i32
    %c0_i32_0 = arith.constant 0 : i32
    %c0_i32_1 = arith.constant 0 : i32
    return %c0_i32, %c0_i32_0 : i32, i32
  }
  func.func @transform_21(%arg0: i32) -> (i32, i32) {
    %c0_i32 = arith.constant 0 : i32
    %c0_i32_0 = arith.constant 0 : i32
    %c0_i32_1 = arith.constant 0 : i32
    return %c0_i32, %c0_i32_0 : i32, i32
  }
  func.func @transform_22(%arg0: i32) -> (i32, i32) {
    %c0_i32 = arith.constant 0 : i32
    %c0_i32_0 = arith.constant 0 : i32
    %c0_i32_1 = arith.constant 0 : i32
    return %c0_i32, %c0_i32_0 : i32, i32
  }
  func.func @transform_23(%arg0: i32) -> (i32, i32, i32) {
    %c0_i32 = arith.constant 0 : i32
    %c0_i32_0 = arith.constant 0 : i32
    %c0_i32_1 = arith.constant 0 : i32
    return %arg0, %c0_i32, %c0_i32_0 : i32, i32, i32
  }
}

</mosaic_0001>

<llo_original>
// kernel: bert_classifier_forward.1
$region0: #{bert_classifier_forward.1}
  #allocation0 [shape = 'u32[]', space=smem, size = 0x4, offset = 0x4, fixed_abs, tag = 'smem constant byte address 0x4 - core index']
  #allocation1 [shape = 'u32[144,128]{1,0:T(1,128)}', space=vmem, size = 0x12000, scoped, tag = 'internal scratch']
  %s0 = inlined_call_operand.vmem [shape: s32[2,8,1], index: 0, kind: input, shape index: {}]
  %s1 = inlined_call_operand.vmem [shape: s32[2,1,8], index: 1, kind: input, shape index: {}]
  %s2 = inlined_call_operand.vmem [shape: bf16[128,32], index: 2, kind: input, shape index: {}]
  %s3 = inlined_call_operand.vmem [shape: f32[32,32], index: 3, kind: input, shape index: {}]
  %s4 = inlined_call_operand.vmem [shape: f32[2,32], index: 4, kind: input, shape index: {}]
  %s5 = inlined_call_operand.vmem [shape: f32[1,32], index: 5, kind: input, shape index: {}]
  %s6 = inlined_call_operand.vmem [shape: f32[1,32], index: 6, kind: input, shape index: {}]
  %s7 = inlined_call_operand.vmem [shape: bf16[2,32,96], index: 7, kind: input, shape index: {}]
  %s8 = inlined_call_operand.vmem [shape: f32[2,1,96], index: 8, kind: input, shape index: {}]
  %s9 = inlined_call_operand.vmem [shape: bf16[2,32,32], index: 9, kind: input, shape index: {}]
  %s10 = inlined_call_operand.vmem [shape: f32[2,1,32], index: 10, kind: input, shape index: {}]
  %s11 = inlined_call_operand.vmem [shape: f32[2,1,32], index: 11, kind: input, shape index: {}]
  %s12 = inlined_call_operand.vmem [shape: f32[2,1,32], index: 12, kind: input, shape index: {}]
  %s13 = inlined_call_operand.vmem [shape: bf16[2,32,64], index: 13, kind: input, shape index: {}]
  %s14 = inlined_call_operand.vmem [shape: f32[2,1,64], index: 14, kind: input, shape index: {}]
  %s15 = inlined_call_operand.vmem [shape: bf16[2,64,32], index: 15, kind: input, shape index: {}]
  %s16 = inlined_call_operand.vmem [shape: f32[2,1,32], index: 16, kind: input, shape index: {}]
  %s17 = inlined_call_operand.vmem [shape: f32[2,1,32], index: 17, kind: input, shape index: {}]
  %s18 = inlined_call_operand.vmem [shape: f32[2,1,32], index: 18, kind: input, shape index: {}]
  %s19 = inlined_call_operand.vmem [shape: bf16[32,32], index: 19, kind: input, shape index: {}]
  %s20 = inlined_call_operand.vmem [shape: f32[1,32], index: 20, kind: input, shape index: {}]
  %s21 = inlined_call_operand.vmem [shape: bf16[32,128], index: 21, kind: input, shape index: {}]
  %s22 = inlined_call_operand.vmem [shape: f32[1,128], index: 22, kind: input, shape index: {}]
  %s23 = inlined_call_operand.hbm [shape: f32[2,1,128], index: 23, kind: output, shape index: {}]
  %s24 = sld [smem:[#allocation0]]
  $region125: #{bert_classifier_forward.1} parent=0
    _
  %s26 = ssub.s32 1, %s24
  %s27 = scalar_select 0, %s26, %s24
  $region1: #{bert_classifier_forward.1} parent=0
    #allocation2 [shape = 'u8[1024]{0}', space=vmem, size = 0x400, scoped, tag = 'output window, operand 0']
    #allocation3 [shape = 's32[2]{0}', space=sflag, size = 0x8, scoped, tag = 'scoped memory for bert_classifier_forward.1']
    %28 = vsyncpa [#allocation3], 0
    %s29 = scalar_lea.sflag [#allocation3], 1
    %30 = vsyncpa %s29, 0
    loop: start=0, step=1, limit=4
    $region2: #{bert_classifier_forward.1} parent=1 // loop_pre_header
      _
    $region3: #{bert_classifier_forward.1} parent=1 // loop_header
      %s32 = sphi 0, %s36
      %p33 = scmp.ge.s32.totalorder %s32, 4
      %s42 = sphi 0, %s44
      %s45 = sphi 0, %s42
      %s46 = sphi 0, %s45
      %s62 = sphi 0, %s46
      %s68 = sphi 0, %s70
      %s71 = sphi 0, %s68
      %s72 = sphi 0, %s71
      %s88 = sphi 0, %s72
      %s92 = sphi 0, %s92
      %s94 = sphi 0, %s92
      %s95 = sphi 0, %s94
      %s109 = sphi 0, %s95
      %s113 = sphi 0, %s113
      %s115 = sphi 0, %s113
      %s116 = sphi 0, %s115
      %s130 = sphi 0, %s116
      %s134 = sphi 0, %s134
      %s136 = sphi 0, %s134
      %s137 = sphi 0, %s136
      %s151 = sphi 0, %s137
      %s155 = sphi 0, %s155
      %s157 = sphi 0, %s155
      %s158 = sphi 0, %s157
      %s172 = sphi 0, %s158
      %s176 = sphi 0, %s176
      %s178 = sphi 0, %s176
      %s179 = sphi 0, %s178
      %s193 = sphi 0, %s179
      %s197 = sphi 0, %s197
      %s199 = sphi 0, %s197
      %s200 = sphi 0, %s199
      %s214 = sphi 0, %s200
      %s218 = sphi 0, %s218
      %s220 = sphi 0, %s218
      %s221 = sphi 0, %s220
      %s235 = sphi 0, %s221
      %s239 = sphi 0, %s239
      %s241 = sphi 0, %s239
      %s242 = sphi 0, %s241
      %s256 = sphi 0, %s242
      %s260 = sphi 0, %s260
      %s262 = sphi 0, %s260
      %s263 = sphi 0, %s262
      %s277 = sphi 0, %s263
      %s281 = sphi 0, %s281
      %s283 = sphi 0, %s281
      %s284 = sphi 0, %s283
      %s298 = sphi 0, %s284
      %s302 = sphi 0, %s302
      %s304 = sphi 0, %s302
      %s305 = sphi 0, %s304
      %s319 = sphi 0, %s305
      %s323 = sphi 0, %s323
      %s325 = sphi 0, %s323
      %s326 = sphi 0, %s325
      %s340 = sphi 0, %s326
      %s344 = sphi 0, %s344
      %s346 = sphi 0, %s344
      %s347 = sphi 0, %s346
      %s361 = sphi 0, %s347
      %s365 = sphi 0, %s365
      %s367 = sphi 0, %s365
      %s368 = sphi 0, %s367
      %s382 = sphi 0, %s368
      %s386 = sphi 0, %s386
      %s388 = sphi 0, %s386
      %s389 = sphi 0, %s388
      %s403 = sphi 0, %s389
      %s407 = sphi 0, %s407
      %s409 = sphi 0, %s407
      %s410 = sphi 0, %s409
      %s424 = sphi 0, %s410
      %s428 = sphi 0, %s428
      %s430 = sphi 0, %s428
      %s431 = sphi 0, %s430
      %s445 = sphi 0, %s431
      %s449 = sphi 0, %s449
      %s451 = sphi 0, %s449
      %s452 = sphi 0, %s451
      %s466 = sphi 0, %s452
      %s470 = sphi 0, %s470
      %s472 = sphi 0, %s470
      %s473 = sphi 0, %s472
      %s487 = sphi 0, %s473
      %s491 = sphi 0, %s491
      %s493 = sphi 0, %s491
      %s494 = sphi 0, %s493
      %s508 = sphi 0, %s494
      %s512 = sphi 0, %s512
      %s514 = sphi 0, %s512
      %s515 = sphi 0, %s514
      %s529 = sphi 0, %s515
      %s535 = sphi 0, %s537
      %s538 = sphi 0, %s535
      %s539 = sphi 0, %s538
      %s555 = sphi 0, %s539
    $region4: #{bert_classifier_forward.1} parent=1 // loop_header_branch
      %35 = sbr.rel (%p33) target = $region8
    $region5: #{bert_classifier_forward.1} parent=1 // loop_body
      %s37 = ssub.s32 %s32, 1
      %s38 = ssub.s32 %s32, 2
      %s39 = sadd.s32 %s32, 1
      %s40 = ssub.s32 %s32, %s39
      %p41 = scmp.eq.s32.totalorder %s40, 0
      %s43 = sadd.s32 %s42, 1
      %s44 = scalar_select %p41, %s42, %s43
      %p47 = pneg %p41
      %p48 = scmp.eq.s32.totalorder %s32, 1
      %p49 = por %p47, %p48
      %p50 = scmp.ne.s32.totalorder %s42, %s45
      %p51 = scmp.eq.s32.totalorder %s32, 0
      %p52 = por %p50, %p51
      %p53 = scmp.ne.s32.totalorder %s42, %s45
      %p54 = scmp.eq.s32.totalorder %s37, 1
      %p55 = por %p53, %p54
      %p56 = scmp.ne.s32.totalorder %s45, %s46
      %p57 = scmp.eq.s32.totalorder %s37, 0
      %p58 = por %p56, %p57
      %p59 = scmp.ne.s32.totalorder %s45, %s46
      %p60 = scmp.eq.s32.totalorder %s38, 1
      %p61 = por %p59, %p60
      %p63 = scmp.ne.s32.totalorder %s46, %s62
      %p64 = scmp.eq.s32.totalorder %s38, 0
      %p65 = por %p63, %p64
      %s66 = ssub.s32 %s32, %s39
      %p67 = scmp.eq.s32.totalorder %s66, 0
      %s69 = sadd.s32 %s68, 1
      %s70 = scalar_select %p67, %s68, %s69
      %p73 = pneg %p67
      %p74 = scmp.eq.s32.totalorder %s32, 1
      %p75 = por %p73, %p74
      %p76 = scmp.ne.s32.totalorder %s68, %s71
      %p77 = scmp.eq.s32.totalorder %s32, 0
      %p78 = por %p76, %p77
      %p79 = scmp.ne.s32.totalorder %s68, %s71
      %p80 = scmp.eq.s32.totalorder %s37, 1
      %p81 = por %p79, %p80
      %p82 = scmp.ne.s32.totalorder %s71, %s72
      %p83 = scmp.eq.s32.totalorder %s37, 0
      %p84 = por %p82, %p83
      %p85 = scmp.ne.s32.totalorder %s71, %s72
      %p86 = scmp.eq.s32.totalorder %s38, 1
      %p87 = por %p85, %p86
      %p89 = scmp.ne.s32.totalorder %s72, %s88
      %p90 = scmp.eq.s32.totalorder %s38, 0
      %p91 = por %p89, %p90
      %s93 = sadd.s32 %s92, 1
      %p96 = scmp.eq.s32.totalorder %s32, 1
      %p97 = scmp.ne.s32.totalorder %s92, %s94
      %p98 = scmp.eq.s32.totalorder %s32, 0
      %p99 = por %p97, %p98
      %p100 = scmp.ne.s32.totalorder %s92, %s94
      %p101 = scmp.eq.s32.totalorder %s37, 1
      %p102 = por %p100, %p101
      %p103 = scmp.ne.s32.totalorder %s94, %s95
      %p104 = scmp.eq.s32.totalorder %s37, 0
      %p105 = por %p103, %p104
      %p106 = scmp.ne.s32.totalorder %s94, %s95
      %p107 = scmp.eq.s32.totalorder %s38, 1
      %p108 = por %p106, %p107
      %p110 = scmp.ne.s32.totalorder %s95, %s109
      %p111 = scmp.eq.s32.totalorder %s38, 0
      %p112 = por %p110, %p111
      %s114 = sadd.s32 %s113, 1
      %p117 = scmp.eq.s32.totalorder %s32, 1
      %p118 = scmp.ne.s32.totalorder %s113, %s115
      %p119 = scmp.eq.s32.totalorder %s32, 0
      %p120 = por %p118, %p119
      %p121 = scmp.ne.s32.totalorder %s113, %s115
      %p122 = scmp.eq.s32.totalorder %s37, 1
      %p123 = por %p121, %p122
      %p124 = scmp.ne.s32.totalorder %s115, %s116
      %p125 = scmp.eq.s32.totalorder %s37, 0
      %p126 = por %p124, %p125
      %p127 = scmp.ne.s32.totalorder %s115, %s116
      %p128 = scmp.eq.s32.totalorder %s38, 1
      %p129 = por %p127, %p128
      %p131 = scmp.ne.s32.totalorder %s116, %s130
      %p132 = scmp.eq.s32.totalorder %s38, 0
      %p133 = por %p131, %p132
      %s135 = sadd.s32 %s134, 1
      %p138 = scmp.eq.s32.totalorder %s32, 1
      %p139 = scmp.ne.s32.totalorder %s134, %s136
      %p140 = scmp.eq.s32.totalorder %s32, 0
      %p141 = por %p139, %p140
      %p142 = scmp.ne.s32.totalorder %s134, %s136
      %p143 = scmp.eq.s32.totalorder %s37, 1
      %p144 = por %p142, %p143
      %p145 = scmp.ne.s32.totalorder %s136, %s137
      %p146 = scmp.eq.s32.totalorder %s37, 0
      %p147 = por %p145, %p146
      %p148 = scmp.ne.s32.totalorder %s136, %s137
      %p149 = scmp.eq.s32.totalorder %s38, 1
      %p150 = por %p148, %p149
      %p152 = scmp.ne.s32.totalorder %s137, %s151
      %p153 = scmp.eq.s32.totalorder %s38, 0
      %p154 = por %p152, %p153
      %s156 = sadd.s32 %s155, 1
      %p159 = scmp.eq.s32.totalorder %s32, 1
      %p160 = scmp.ne.s32.totalorder %s155, %s157
      %p161 = scmp.eq.s32.totalorder %s32, 0
      %p162 = por %p160, %p161
      %p163 = scmp.ne.s32.totalorder %s155, %s157
      %p164 = scmp.eq.s32.totalorder %s37, 1
      %p165 = por %p163, %p164
      %p166 = scmp.ne.s32.totalorder %s157, %s158
      %p167 = scmp.eq.s32.totalorder %s37, 0
      %p168 = por %p166, %p167
      %p169 = scmp.ne.s32.totalorder %s157, %s158
      %p170 = scmp.eq.s32.totalorder %s38, 1
      %p171 = por %p169, %p170
      %p173 = scmp.ne.s32.totalorder %s158, %s172
      %p174 = scmp.eq.s32.totalorder %s38, 0
      %p175 = por %p173, %p174
      %s177 = sadd.s32 %s176, 1
      %p180 = scmp.eq.s32.totalorder %s32, 1
      %p181 = scmp.ne.s32.totalorder %s176, %s178
      %p182 = scmp.eq.s32.totalorder %s32, 0
      %p183 = por %p181, %p182
      %p184 = scmp.ne.s32.totalorder %s176, %s178
      %p185 = scmp.eq.s32.totalorder %s37, 1
      %p186 = por %p184, %p185
      %p187 = scmp.ne.s32.totalorder %s178, %s179
      %p188 = scmp.eq.s32.totalorder %s37, 0
      %p189 = por %p187, %p188
      %p190 = scmp.ne.s32.totalorder %s178, %s179
      %p191 = scmp.eq.s32.totalorder %s38, 1
      %p192 = por %p190, %p191
      %p194 = scmp.ne.s32.totalorder %s179, %s193
      %p195 = scmp.eq.s32.totalorder %s38, 0
      %p196 = por %p194, %p195
      %s198 = sadd.s32 %s197, 1
      %p201 = scmp.eq.s32.totalorder %s32, 1
      %p202 = scmp.ne.s32.totalorder %s197, %s199
      %p203 = scmp.eq.s32.totalorder %s32, 0
      %p204 = por %p202, %p203
      %p205 = scmp.ne.s32.totalorder %s197, %s199
      %p206 = scmp.eq.s32.totalorder %s37, 1
      %p207 = por %p205, %p206
      %p208 = scmp.ne.s32.totalorder %s199, %s200
      %p209 = scmp.eq.s32.totalorder %s37, 0
      %p210 = por %p208, %p209
      %p211 = scmp.ne.s32.totalorder %s199, %s200
      %p212 = scmp.eq.s32.totalorder %s38, 1
      %p213 = por %p211, %p212
      %p215 = scmp.ne.s32.totalorder %s200, %s214
      %p216 = scmp.eq.s32.totalorder %s38, 0
      %p217 = por %p215, %p216
      %s219 = sadd.s32 %s218, 1
      %p222 = scmp.eq.s32.totalorder %s32, 1
      %p223 = scmp.ne.s32.totalorder %s218, %s220
      %p224 = scmp.eq.s32.totalorder %s32, 0
      %p225 = por %p223, %p224
      %p226 = scmp.ne.s32.totalorder %s218, %s220
      %p227 = scmp.eq.s32.totalorder %s37, 1
      %p228 = por %p226, %p227
      %p229 = scmp.ne.s32.totalorder %s220, %s221
      %p230 = scmp.eq.s32.totalorder %s37, 0
      %p231 = por %p229, %p230
      %p232 = scmp.ne.s32.totalorder %s220, %s221
      %p233 = scmp.eq.s32.totalorder %s38, 1
      %p234 = por %p232, %p233
      %p236 = scmp.ne.s32.totalorder %s221, %s235
      %p237 = scmp.eq.s32.totalorder %s38, 0
      %p238 = por %p236, %p237
      %s240 = sadd.s32 %s239, 1
      %p243 = scmp.eq.s32.totalorder %s32, 1
      %p244 = scmp.ne.s32.totalorder %s239, %s241
      %p245 = scmp.eq.s32.totalorder %s32, 0
      %p246 = por %p244, %p245
      %p247 = scmp.ne.s32.totalorder %s239, %s241
      %p248 = scmp.eq.s32.totalorder %s37, 1
      %p249 = por %p247, %p248
      %p250 = scmp.ne.s32.totalorder %s241, %s242
      %p251 = scmp.eq.s32.totalorder %s37, 0
      %p252 = por %p250, %p251
      %p253 = scmp.ne.s32.totalorder %s241, %s242
      %p254 = scmp.eq.s32.totalorder %s38, 1
      %p255 = por %p253, %p254
      %p257 = scmp.ne.s32.totalorder %s242, %s256
      %p258 = scmp.eq.s32.totalorder %s38, 0
      %p259 = por %p257, %p258
      %s261 = sadd.s32 %s260, 1
      %p264 = scmp.eq.s32.totalorder %s32, 1
      %p265 = scmp.ne.s32.totalorder %s260, %s262
      %p266 = scmp.eq.s32.totalorder %s32, 0
      %p267 = por %p265, %p266
      %p268 = scmp.ne.s32.totalorder %s260, %s262
      %p269 = scmp.eq.s32.totalorder %s37, 1
      %p270 = por %p268, %p269
      %p271 = scmp.ne.s32.totalorder %s262, %s263
      %p272 = scmp.eq.s32.totalorder %s37, 0
      %p273 = por %p271, %p272
      %p274 = scmp.ne.s32.totalorder %s262, %s263
      %p275 = scmp.eq.s32.totalorder %s38, 1
      %p276 = por %p274, %p275
      %p278 = scmp.ne.s32.totalorder %s263, %s277
      %p279 = scmp.eq.s32.totalorder %s38, 0
      %p280 = por %p278, %p279
      %s282 = sadd.s32 %s281, 1
      %p285 = scmp.eq.s32.totalorder %s32, 1
      %p286 = scmp.ne.s32.totalorder %s281, %s283
      %p287 = scmp.eq.s32.totalorder %s32, 0
      %p288 = por %p286, %p287
      %p289 = scmp.ne.s32.totalorder %s281, %s283
      %p290 = scmp.eq.s32.totalorder %s37, 1
      %p291 = por %p289, %p290
      %p292 = scmp.ne.s32.totalorder %s283, %s284
      %p293 = scmp.eq.s32.totalorder %s37, 0
      %p294 = por %p292, %p293
      %p295 = scmp.ne.s32.totalorder %s283, %s284
      %p296 = scmp.eq.s32.totalorder %s38, 1
      %p297 = por %p295, %p296
      %p299 = scmp.ne.s32.totalorder %s284, %s298
      %p300 = scmp.eq.s32.totalorder %s38, 0
      %p301 = por %p299, %p300
      %s303 = sadd.s32 %s302, 1
      %p306 = scmp.eq.s32.totalorder %s32, 1
      %p307 = scmp.ne.s32.totalorder %s302, %s304
      %p308 = scmp.eq.s32.totalorder %s32, 0
      %p309 = por %p307, %p308
      %p310 = scmp.ne.s32.totalorder %s302, %s304
      %p311 = scmp.eq.s32.totalorder %s37, 1
      %p312 = por %p310, %p311
      %p313 = scmp.ne.s32.totalorder %s304, %s305
      %p314 = scmp.eq.s32.totalorder %s37, 0
      %p315 = por %p313, %p314
      %p316 = scmp.ne.s32.totalorder %s304, %s305
      %p317 = scmp.eq.s32.totalorder %s38, 1
      %p318 = por %p316, %p317
      %p320 = scmp.ne.s32.totalorder %s305, %s319
      %p321 = scmp.eq.s32.totalorder %s38, 0
      %p322 = por %p320, %p321
      %s324 = sadd.s32 %s323, 1
      %p327 = scmp.eq.s32.totalorder %s32, 1
      %p328 = scmp.ne.s32.totalorder %s323, %s325
      %p329 = scmp.eq.s32.totalorder %s32, 0
      %p330 = por %p328, %p329
      %p331 = scmp.ne.s32.totalorder %s323, %s325
      %p332 = scmp.eq.s32.totalorder %s37, 1
      %p333 = por %p331, %p332
      %p334 = scmp.ne.s32.totalorder %s325, %s326
      %p335 = scmp.eq.s32.totalorder %s37, 0
      %p336 = por %p334, %p335
      %p337 = scmp.ne.s32.totalorder %s325, %s326
      %p338 = scmp.eq.s32.totalorder %s38, 1
      %p339 = por %p337, %p338
      %p341 = scmp.ne.s32.totalorder %s326, %s340
      %p342 = scmp.eq.s32.totalorder %s38, 0
      %p343 = por %p341, %p342
      %s345 = sadd.s32 %s344, 1
      %p348 = scmp.eq.s32.totalorder %s32, 1
      %p349 = scmp.ne.s32.totalorder %s344, %s346
      %p350 = scmp.eq.s32.totalorder %s32, 0
      %p351 = por %p349, %p350
      %p352 = scmp.ne.s32.totalorder %s344, %s346
      %p353 = scmp.eq.s32.totalorder %s37, 1
      %p354 = por %p352, %p353
      %p355 = scmp.ne.s32.totalorder %s346, %s347
      %p356 = scmp.eq.s32.totalorder %s37, 0
      %p357 = por %p355, %p356
      %p358 = scmp.ne.s32.totalorder %s346, %s347
      %p359 = scmp.eq.s32.totalorder %s38, 1
      %p360 = por %p358, %p359
      %p362 = scmp.ne.s32.totalorder %s347, %s361
      %p363 = scmp.eq.s32.totalorder %s38, 0
      %p364 = por %p362, %p363
      %s366 = sadd.s32 %s365, 1
      %p369 = scmp.eq.s32.totalorder %s32, 1
      %p370 = scmp.ne.s32.totalorder %s365, %s367
      %p371 = scmp.eq.s32.totalorder %s32, 0
      %p372 = por %p370, %p371
      %p373 = scmp.ne.s32.totalorder %s365, %s367
      %p374 = scmp.eq.s32.totalorder %s37, 1
      %p375 = por %p373, %p374
      %p376 = scmp.ne.s32.totalorder %s367, %s368
      %p377 = scmp.eq.s32.totalorder %s37, 0
      %p378 = por %p376, %p377
      %p379 = scmp.ne.s32.totalorder %s367, %s368
      %p380 = scmp.eq.s32.totalorder %s38, 1
      %p381 = por %p379, %p380
      %p383 = scmp.ne.s32.totalorder %s368, %s382
      %p384 = scmp.eq.s32.totalorder %s38, 0
      %p385 = por %p383, %p384
      %s387 = sadd.s32 %s386, 1
      %p390 = scmp.eq.s32.totalorder %s32, 1
      %p391 = scmp.ne.s32.totalorder %s386, %s388
      %p392 = scmp.eq.s32.totalorder %s32, 0
      %p393 = por %p391, %p392
      %p394 = scmp.ne.s32.totalorder %s386, %s388
      %p395 = scmp.eq.s32.totalorder %s37, 1
      %p396 = por %p394, %p395
      %p397 = scmp.ne.s32.totalorder %s388, %s389
      %p398 = scmp.eq.s32.totalorder %s37, 0
      %p399 = por %p397, %p398
      %p400 = scmp.ne.s32.totalorder %s388, %s389
      %p401 = scmp.eq.s32.totalorder %s38, 1
      %p402 = por %p400, %p401
      %p404 = scmp.ne.s32.totalorder %s389, %s403
      %p405 = scmp.eq.s32.totalorder %s38, 0
      %p406 = por %p404, %p405
      %s408 = sadd.s32 %s407, 1
      %p411 = scmp.eq.s32.totalorder %s32, 1
      %p412 = scmp.ne.s32.totalorder %s407, %s409
      %p413 = scmp.eq.s32.totalorder %s32, 0
      %p414 = por %p412, %p413
      %p415 = scmp.ne.s32.totalorder %s407, %s409
      %p416 = scmp.eq.s32.totalorder %s37, 1
      %p417 = por %p415, %p416
      %p418 = scmp.ne.s32.totalorder %s409, %s410
      %p419 = scmp.eq.s32.totalorder %s37, 0
      %p420 = por %p418, %p419
      %p421 = scmp.ne.s32.totalorder %s409, %s410
      %p422 = scmp.eq.s32.totalorder %s38, 1
      %p423 = por %p421, %p422
      %p425 = scmp.ne.s32.totalorder %s410, %s424
      %p426 = scmp.eq.s32.totalorder %s38, 0
      %p427 = por %p425, %p426
      %s429 = sadd.s32 %s428, 1
      %p432 = scmp.eq.s32.totalorder %s32, 1
      %p433 = scmp.ne.s32.totalorder %s428, %s430
      %p434 = scmp.eq.s32.totalorder %s32, 0
      %p435 = por %p433, %p434
      %p436 = scmp.ne.s32.totalorder %s428, %s430
      %p437 = scmp.eq.s32.totalorder %s37, 1
      %p438 = por %p436, %p437
      %p439 = scmp.ne.s32.totalorder %s430, %s431
      %p440 = scmp.eq.s32.totalorder %s37, 0
      %p441 = por %p439, %p440
      %p442 = scmp.ne.s32.totalorder %s430, %s431
      %p443 = scmp.eq.s32.totalorder %s38, 1
      %p444 = por %p442, %p443
      %p446 = scmp.ne.s32.totalorder %s431, %s445
      %p447 = scmp.eq.s32.totalorder %s38, 0
      %p448 = por %p446, %p447
      %s450 = sadd.s32 %s449, 1
      %p453 = scmp.eq.s32.totalorder %s32, 1
      %p454 = scmp.ne.s32.totalorder %s449, %s451
      %p455 = scmp.eq.s32.totalorder %s32, 0
      %p456 = por %p454, %p455
      %p457 = scmp.ne.s32.totalorder %s449, %s451
      %p458 = scmp.eq.s32.totalorder %s37, 1
      %p459 = por %p457, %p458
      %p460 = scmp.ne.s32.totalorder %s451, %s452
      %p461 = scmp.eq.s32.totalorder %s37, 0
      %p462 = por %p460, %p461
      %p463 = scmp.ne.s32.totalorder %s451, %s452
      %p464 = scmp.eq.s32.totalorder %s38, 1
      %p465 = por %p463, %p464
      %p467 = scmp.ne.s32.totalorder %s452, %s466
      %p468 = scmp.eq.s32.totalorder %s38, 0
      %p469 = por %p467, %p468
      %s471 = sadd.s32 %s470, 1
      %p474 = scmp.eq.s32.totalorder %s32, 1
      %p475 = scmp.ne.s32.totalorder %s470, %s472
      %p476 = scmp.eq.s32.totalorder %s32, 0
      %p477 = por %p475, %p476
      %p478 = scmp.ne.s32.totalorder %s470, %s472
      %p479 = scmp.eq.s32.totalorder %s37, 1
      %p480 = por %p478, %p479
      %p481 = scmp.ne.s32.totalorder %s472, %s473
      %p482 = scmp.eq.s32.totalorder %s37, 0
      %p483 = por %p481, %p482
      %p484 = scmp.ne.s32.totalorder %s472, %s473
      %p485 = scmp.eq.s32.totalorder %s38, 1
      %p486 = por %p484, %p485
      %p488 = scmp.ne.s32.totalorder %s473, %s487
      %p489 = scmp.eq.s32.totalorder %s38, 0
      %p490 = por %p488, %p489
      %s492 = sadd.s32 %s491, 1
      %p495 = scmp.eq.s32.totalorder %s32, 1
      %p496 = scmp.ne.s32.totalorder %s491, %s493
      %p497 = scmp.eq.s32.totalorder %s32, 0
      %p498 = por %p496, %p497
      %p499 = scmp.ne.s32.totalorder %s491, %s493
      %p500 = scmp.eq.s32.totalorder %s37, 1
      %p501 = por %p499, %p500
      %p502 = scmp.ne.s32.totalorder %s493, %s494
      %p503 = scmp.eq.s32.totalorder %s37, 0
      %p504 = por %p502, %p503
      %p505 = scmp.ne.s32.totalorder %s493, %s494
      %p506 = scmp.eq.s32.totalorder %s38, 1
      %p507 = por %p505, %p506
      %p509 = scmp.ne.s32.totalorder %s494, %s508
      %p510 = scmp.eq.s32.totalorder %s38, 0
      %p511 = por %p509, %p510
      %s513 = sadd.s32 %s512, 1
      %p516 = scmp.eq.s32.totalorder %s32, 1
      %p517 = scmp.ne.s32.totalorder %s512, %s514
      %p518 = scmp.eq.s32.totalorder %s32, 0
      %p519 = por %p517, %p518
      %p520 = scmp.ne.s32.totalorder %s512, %s514
      %p521 = scmp.eq.s32.totalorder %s37, 1
      %p522 = por %p520, %p521
      %p523 = scmp.ne.s32.totalorder %s514, %s515
      %p524 = scmp.eq.s32.totalorder %s37, 0
      %p525 = por %p523, %p524
      %p526 = scmp.ne.s32.totalorder %s514, %s515
      %p527 = scmp.eq.s32.totalorder %s38, 1
      %p528 = por %p526, %p527
      %p530 = scmp.ne.s32.totalorder %s515, %s529
      %p531 = scmp.eq.s32.totalorder %s38, 0
      %p532 = por %p530, %p531
      %s533 = ssub.s32 %s32, %s39
      %p534 = scmp.eq.s32.totalorder %s533, 0
      %s536 = sadd.s32 %s535, 1
      %s537 = scalar_select %p534, %s535, %s536
      %p540 = pneg %p534
      %p541 = scmp.eq.s32.totalorder %s32, 1
      %p542 = por %p540, %p541
      %p543 = scmp.ne.s32.totalorder %s535, %s538
      %p544 = scmp.eq.s32.totalorder %s32, 0
      %p545 = por %p543, %p544
      %p546 = scmp.ne.s32.totalorder %s535, %s538
      %p547 = scmp.eq.s32.totalorder %s37, 1
      %p548 = por %p546, %p547
      %p549 = scmp.ne.s32.totalorder %s538, %s539
      %p550 = scmp.eq.s32.totalorder %s37, 0
      %p551 = por %p549, %p550
      %p552 = scmp.ne.s32.totalorder %s538, %s539
      %p553 = scmp.eq.s32.totalorder %s38, 1
      %p554 = por %p552, %p553
      %p556 = scmp.ne.s32.totalorder %s539, %s555
      %p557 = scmp.eq.s32.totalorder %s38, 0
      %p558 = por %p556, %p557
      %p559 = scmp.le.s32.totalorder 1, %s32
      %p560 = scmp.lt.s32.totalorder %s32, 3
      %p561 = pnand %p559, %p560
      %p562 = pneg %p561
      // Predicated region
      $region9: #{bert_classifier_forward.1} parent=5 // pred_check
        _
      $region10: #{bert_classifier_forward.1} parent=5 // pred_check_branch
        %564 = sbr.rel (%p561) target = $region12
      $region11: #{bert_classifier_forward.1} parent=5 // pred_region
        %s565 = ssub.s32 %s32, 1
        // Predicated region
        $region13: #{bert_classifier_forward.1} parent=11 // pred_check
          %p566 = pneg %p105
        $region14: #{bert_classifier_forward.1} parent=11 // pred_check_branch
          %568 = sbr.rel (%p566) target = $region16
        $region15: #{bert_classifier_forward.1} parent=11 // pred_region
          _
        $region16: #{bert_classifier_forward.1} parent=11 // pred_fallthru
          _
        // Predicated region
        $region17: #{bert_classifier_forward.1} parent=11 // pred_check
          %p569 = pneg %p126
        $region18: #{bert_classifier_forward.1} parent=11 // pred_check_branch
          %571 = sbr.rel (%p569) target = $region20
        $region19: #{bert_classifier_forward.1} parent=11 // pred_region
          _
        $region20: #{bert_classifier_forward.1} parent=11 // pred_fallthru
          _
        // Predicated region
        $region21: #{bert_classifier_forward.1} parent=11 // pred_check
          %p572 = pneg %p147
        $region22: #{bert_classifier_forward.1} parent=11 // pred_check_branch
          %574 = sbr.rel (%p572) target = $region24
        $region23: #{bert_classifier_forward.1} parent=11 // pred_region
          _
        $region24: #{bert_classifier_forward.1} parent=11 // pred_fallthru
          _
        // Predicated region
        $region25: #{bert_classifier_forward.1} parent=11 // pred_check
          %p575 = pneg %p168
        $region26: #{bert_classifier_forward.1} parent=11 // pred_check_branch
          %577 = sbr.rel (%p575) target = $region28
        $region27: #{bert_classifier_forward.1} parent=11 // pred_region
          _
        $region28: #{bert_classifier_forward.1} parent=11 // pred_fallthru
          _
        // Predicated region
        $region29: #{bert_classifier_forward.1} parent=11 // pred_check
          %p578 = pneg %p189
        $region30: #{bert_classifier_forward.1} parent=11 // pred_check_branch
          %580 = sbr.rel (%p578) target = $region32
        $region31: #{bert_classifier_forward.1} parent=11 // pred_region
          _
        $region32: #{bert_classifier_forward.1} parent=11 // pred_fallthru
          _
        // Predicated region
        $region33: #{bert_classifier_forward.1} parent=11 // pred_check
          %p581 = pneg %p210
        $region34: #{bert_classifier_forward.1} parent=11 // pred_check_branch
          %583 = sbr.rel (%p581) target = $region36
        $region35: #{bert_classifier_forward.1} parent=11 // pred_region
          _
        $region36: #{bert_classifier_forward.1} parent=11 // pred_fallthru
          _
        // Predicated region
        $region37: #{bert_classifier_forward.1} parent=11 // pred_check
          %p584 = pneg %p231
        $region38: #{bert_classifier_forward.1} parent=11 // pred_check_branch
          %586 = sbr.rel (%p584) target = $region40
        $region39: #{bert_classifier_forward.1} parent=11 // pred_region
          _
        $region40: #{bert_classifier_forward.1} parent=11 // pred_fallthru
          _
        // Predicated region
        $region41: #{bert_classifier_forward.1} parent=11 // pred_check
          %p587 = pneg %p252
        $region42: #{bert_classifier_forward.1} parent=11 // pred_check_branch
          %589 = sbr.rel (%p587) target = $region44
        $region43: #{bert_classifier_forward.1} parent=11 // pred_region
          _
        $region44: #{bert_classifier_forward.1} parent=11 // pred_fallthru
          _
        // Predicated region
        $region45: #{bert_classifier_forward.1} parent=11 // pred_check
          %p590 = pneg %p273
        $region46: #{bert_classifier_forward.1} parent=11 // pred_check_branch
          %592 = sbr.rel (%p590) target = $region48
        $region47: #{bert_classifier_forward.1} parent=11 // pred_region
          _
        $region48: #{bert_classifier_forward.1} parent=11 // pred_fallthru
          _
        // Predicated region
        $region49: #{bert_classifier_forward.1} parent=11 // pred_check
          %p593 = pneg %p294
        $region50: #{bert_classifier_forward.1} parent=11 // pred_check_branch
          %595 = sbr.rel (%p593) target = $region52
        $region51: #{bert_classifier_forward.1} parent=11 // pred_region
          _
        $region52: #{bert_classifier_forward.1} parent=11 // pred_fallthru
          _
        // Predicated region
        $region53: #{bert_classifier_forward.1} parent=11 // pred_check
          %p596 = pneg %p315
        $region54: #{bert_classifier_forward.1} parent=11 // pred_check_branch
          %598 = sbr.rel (%p596) target = $region56
        $region55: #{bert_classifier_forward.1} parent=11 // pred_region
          _
        $region56: #{bert_classifier_forward.1} parent=11 // pred_fallthru
          _
        // Predicated region
        $region57: #{bert_classifier_forward.1} parent=11 // pred_check
          %p599 = pneg %p336
        $region58: #{bert_classifier_forward.1} parent=11 // pred_check_branch
          %601 = sbr.rel (%p599) target = $region60
        $region59: #{bert_classifier_forward.1} parent=11 // pred_region
          _
        $region60: #{bert_classifier_forward.1} parent=11 // pred_fallthru
          _
        // Predicated region
        $region61: #{bert_classifier_forward.1} parent=11 // pred_check
          %p602 = pneg %p357
        $region62: #{bert_classifier_forward.1} parent=11 // pred_check_branch
          %604 = sbr.rel (%p602) target = $region64
        $region63: #{bert_classifier_forward.1} parent=11 // pred_region
          _
        $region64: #{bert_classifier_forward.1} parent=11 // pred_fallthru
          _
        // Predicated region
        $region65: #{bert_classifier_forward.1} parent=11 // pred_check
          %p605 = pneg %p378
        $region66: #{bert_classifier_forward.1} parent=11 // pred_check_branch
          %607 = sbr.rel (%p605) target = $region68
        $region67: #{bert_classifier_forward.1} parent=11 // pred_region
          _
        $region68: #{bert_classifier_forward.1} parent=11 // pred_fallthru
          _
        // Predicated region
        $region69: #{bert_classifier_forward.1} parent=11 // pred_check
          %p608 = pneg %p399
        $region70: #{bert_classifier_forward.1} parent=11 // pred_check_branch
          %610 = sbr.rel (%p608) target = $region72
        $region71: #{bert_classifier_forward.1} parent=11 // pred_region
          _
        $region72: #{bert_classifier_forward.1} parent=11 // pred_fallthru
          _
        // Predicated region
        $region73: #{bert_classifier_forward.1} parent=11 // pred_check
          %p611 = pneg %p420
        $region74: #{bert_classifier_forward.1} parent=11 // pred_check_branch
          %613 = sbr.rel (%p611) target = $region76
        $region75: #{bert_classifier_forward.1} parent=11 // pred_region
          _
        $region76: #{bert_classifier_forward.1} parent=11 // pred_fallthru
          _
        // Predicated region
        $region77: #{bert_classifier_forward.1} parent=11 // pred_check
          %p614 = pneg %p441
        $region78: #{bert_classifier_forward.1} parent=11 // pred_check_branch
          %616 = sbr.rel (%p614) target = $region80
        $region79: #{bert_classifier_forward.1} parent=11 // pred_region
          _
        $region80: #{bert_classifier_forward.1} parent=11 // pred_fallthru
          _
        // Predicated region
        $region81: #{bert_classifier_forward.1} parent=11 // pred_check
          %p617 = pneg %p462
        $region82: #{bert_classifier_forward.1} parent=11 // pred_check_branch
          %619 = sbr.rel (%p617) target = $region84
        $region83: #{bert_classifier_forward.1} parent=11 // pred_region
          _
        $region84: #{bert_classifier_forward.1} parent=11 // pred_fallthru
          _
        // Predicated region
        $region85: #{bert_classifier_forward.1} parent=11 // pred_check
          %p620 = pneg %p483
        $region86: #{bert_classifier_forward.1} parent=11 // pred_check_branch
          %622 = sbr.rel (%p620) target = $region88
        $region87: #{bert_classifier_forward.1} parent=11 // pred_region
          _
        $region88: #{bert_classifier_forward.1} parent=11 // pred_fallthru
          _
        // Predicated region
        $region89: #{bert_classifier_forward.1} parent=11 // pred_check
          %p623 = pneg %p504
        $region90: #{bert_classifier_forward.1} parent=11 // pred_check_branch
          %625 = sbr.rel (%p623) target = $region92
        $region91: #{bert_classifier_forward.1} parent=11 // pred_region
          _
        $region92: #{bert_classifier_forward.1} parent=11 // pred_fallthru
          _
        // Predicated region
        $region93: #{bert_classifier_forward.1} parent=11 // pred_check
          %p626 = pneg %p525
        $region94: #{bert_classifier_forward.1} parent=11 // pred_check_branch
          %628 = sbr.rel (%p626) target = $region96
        $region95: #{bert_classifier_forward.1} parent=11 // pred_region
          _
        $region96: #{bert_classifier_forward.1} parent=11 // pred_fallthru
          _
      $region12: #{bert_classifier_forward.1} parent=5 // pred_fallthru
        _
      %p629 = scmp.lt.s32.totalorder %s32, 2
      // Predicated region
      $region97: #{bert_classifier_forward.1} parent=5 // pred_check
        %p630 = pneg %p629
      $region98: #{bert_classifier_forward.1} parent=5 // pred_check_branch
        %632 = sbr.rel (%p630) target = $region100
      $region99: #{bert_classifier_forward.1} parent=5 // pred_region
        // Predicated region
        $region101: #{bert_classifier_forward.1} parent=99 // pred_check
          %p633 = pneg %p52
        $region102: #{bert_classifier_forward.1} parent=99 // pred_check_branch
          %635 = sbr.rel (%p633) target = $region104
        $region103: #{bert_classifier_forward.1} parent=99 // pred_region
          %p636 = scmp.lt.s32.totalorder %s32, 1
          %s637 = scalar_select %p636, %s32, 1
          %s638 = smul.addr %s637, 8
          %s639 = scalar_lea.vmem %s0, %s638
        $region104: #{bert_classifier_forward.1} parent=99 // pred_fallthru
          _
        // Predicated region
        $region105: #{bert_classifier_forward.1} parent=99 // pred_check
          %p640 = pneg %p78
        $region106: #{bert_classifier_forward.1} parent=99 // pred_check_branch
          %642 = sbr.rel (%p640) target = $region108
        $region107: #{bert_classifier_forward.1} parent=99 // pred_region
          %p643 = scmp.lt.s32.totalorder %s32, 1
          %s644 = scalar_select %p643, %s32, 1
          %s645 = scalar_lea.vmem %s1, %s644
        $region108: #{bert_classifier_forward.1} parent=99 // pred_fallthru
          _
      $region100: #{bert_classifier_forward.1} parent=5 // pred_fallthru
        _
      %p646 = scmp.le.s32.totalorder 1, %s32
      %p647 = scmp.lt.s32.totalorder %s32, 3
      %p648 = pnand %p646, %p647
      %p649 = pneg %p648
      // Predicated region
      $region109: #{bert_classifier_forward.1} parent=5 // pred_check
        _
      $region110: #{bert_classifier_forward.1} parent=5 // pred_check_branch
        %651 = sbr.rel (%p648) target = $region112
      $region111: #{bert_classifier_forward.1} parent=5 // pred_region
        %s652 = ssub.s32 %s32, 1
        %p653 = scmp.lt.s32.totalorder %s37, 1
        %s654 = scalar_select %p653, %s37, 1
        %s655 = smul.addr %s654, 8
        %s656 = scalar_lea.vmem %s0, %s655
        %p657 = pneg %p58
        %p658 = pneg %p55
        %p659 = scmp.lt.s32.totalorder %s37, 1
        %s660 = scalar_select %p659, %s37, 1
        %s661 = scalar_lea.vmem %s1, %s660
        %p662 = pneg %p84
        %p663 = pneg %p81
        %p664 = pneg %p105
        %p665 = pneg %p102
        %p666 = pneg %p126
        %p667 = pneg %p123
        %p668 = pneg %p147
        %p669 = pneg %p144
        %p670 = pneg %p168
        %p671 = pneg %p165
        %p672 = pneg %p189
        %p673 = pneg %p186
        %p674 = pneg %p210
        %p675 = pneg %p207
        %p676 = pneg %p231
        %p677 = pneg %p228
        %p678 = pneg %p252
        %p679 = pneg %p249
        %p680 = pneg %p273
        %p681 = pneg %p270
        %p682 = pneg %p294
        %p683 = pneg %p291
        %p684 = pneg %p315
        %p685 = pneg %p312
        %p686 = pneg %p336
        %p687 = pneg %p333
        %p688 = pneg %p357
        %p689 = pneg %p354
        %p690 = pneg %p378
        %p691 = pneg %p375
        %p692 = pneg %p399
        %p693 = pneg %p396
        %p694 = pneg %p420
        %p695 = pneg %p417
        %p696 = pneg %p441
        %p697 = pneg %p438
        %p698 = pneg %p462
        %p699 = pneg %p459
        %p700 = pneg %p483
        %p701 = pneg %p480
        %p702 = pneg %p504
        %p703 = pneg %p501
        %p704 = pneg %p525
        %p705 = pneg %p522
        %p706 = pneg %p551
        %p707 = pneg %p548
        %s708 = sand.u32 %s538, 1
        %s709 = scalar_lea.sflag [#allocation3], %s708
        %s710 = sand.u32 %s538, 1
        %s711 = scalar_lea.vmem [#allocation2], %s710
        %p712 = scmp.lt.s32.totalorder %s37, 1
        %s713 = scalar_select %p712, %s37, 1
        %s714 = smul.addr %s713, 8
        %s715 = scalar_lea.vmem %s0, %s714
        %p716 = scmp.lt.s32.totalorder %s37, 1
        %s717 = scalar_select %p716, %s37, 1
        %s718 = scalar_lea.vmem %s1, %s717
        %v720 = vld [vmem:[%s715] sm:$0xff]
        %v721 = vlaneseq
        %v722 = vand.u32 %v721, 127
        %723 = vset.pattern.permute.xlu0 0
        %724 = vperm.xlu0 %723, %v720
        %v725 = vpop.permute.xlu0 %724
        %vm726 = vcmp.eq.s32.totalorder %v725, %v722
        %v727 = vsel %vm726, 1, 0
        %v728 = vcvt.s32.f32 %v727
        %v729 = vpack.c.bf16 %v728, %v728
        %v730 = vld [vmem:[%s2] sm:$0xf]
        %v731 = vld [vmem:[%s2 + $0x4] sm:$0xf]
        %v732 = vld [vmem:[%s2 + $0x8] sm:$0xf]
        %v733 = vld [vmem:[%s2 + $0xc] sm:$0xf]
        %v734 = vld [vmem:[%s2 + $0x10] sm:$0xf]
        %v735 = vld [vmem:[%s2 + $0x14] sm:$0xf]
        %v736 = vld [vmem:[%s2 + $0x18] sm:$0xf]
        %v737 = vld [vmem:[%s2 + $0x1c] sm:$0xf]
        %v738 = vld [vmem:[%s2 + $0x20] sm:$0xf]
        %v739 = vld [vmem:[%s2 + $0x24] sm:$0xf]
        %v740 = vld [vmem:[%s2 + $0x28] sm:$0xf]
        %v741 = vld [vmem:[%s2 + $0x2c] sm:$0xf]
        %v742 = vld [vmem:[%s2 + $0x30] sm:$0xf]
        %v743 = vld [vmem:[%s2 + $0x34] sm:$0xf]
        %v744 = vld [vmem:[%s2 + $0x38] sm:$0xf]
        %v745 = vld [vmem:[%s2 + $0x3c] sm:$0xf]
        %v746 = vld [vmem:[%s3] sm:$0xff]
        %v763 = vunpack.c.l.b16 %v730
        %v764 = vunpack.c.l.b16 %v731
        %v765 = vunpack.c.l.b16 %v732
        %v766 = vunpack.c.l.b16 %v733
        %v767 = vunpack.c.l.b16 %v734
        %v768 = vunpack.c.l.b16 %v735
        %v769 = vunpack.c.l.b16 %v736
        %v770 = vunpack.c.l.b16 %v737
        %v771 = vunpack.c.l.b16 %v738
        %v772 = vunpack.c.l.b16 %v739
        %v773 = vunpack.c.l.b16 %v740
        %v774 = vunpack.c.l.b16 %v741
        %v775 = vunpack.c.l.b16 %v742
        %v776 = vunpack.c.l.b16 %v743
        %v777 = vunpack.c.l.b16 %v744
        %v778 = vunpack.c.l.b16 %v745
        %v779 = vpack.c.b16 %v764, %v763
        %v780 = vpack.c.b16 %v766, %v765
        %v781 = vpack.c.b16 %v768, %v767
        %v782 = vpack.c.b16 %v770, %v769
        %v783 = vpack.c.b16 %v772, %v771
        %v784 = vpack.c.b16 %v774, %v773
        %v785 = vpack.c.b16 %v776, %v775
        %v786 = vpack.c.b16 %v778, %v777
        %795 = vmatprep.subr.bf16.mxu0 0
        %796 = vmatpush1.bf16.msra.mxu0 %v779
        %797 = vmatprep.subr.bf16.mxu0 0
        %798 = vmatpush1.bf16.msra.mxu0 %v780
        %799 = vmatprep.subr.bf16.mxu0 0
        %800 = vmatpush1.bf16.msra.mxu0 %v781
        %801 = vmatprep.subr.bf16.mxu0 0
        %802 = vmatpush1.bf16.msra.mxu0 %v782
        %803 = vmatprep.subr.bf16.mxu0 0
        %804 = vmatpush1.bf16.msra.mxu0 %v783
        %805 = vmatprep.subr.bf16.mxu0 0
        %806 = vmatpush1.bf16.msra.mxu0 %v784
        %807 = vmatprep.subr.bf16.mxu0 0
        %808 = vmatpush1.bf16.msra.mxu0 %v785
        %809 = vmatprep.subr.bf16.mxu0 0
        %810 = vmatpush1.bf16.msra.mxu0 %v786
        %811 = vmatprep.subr.bf16.mxu0 0
        %812 = vmatpush1.bf16.msra.mxu0 0
        %813 = vmatprep.subr.bf16.mxu0 0
        %814 = vmatpush1.bf16.msra.mxu0 0
        %815 = vmatprep.subr.bf16.mxu0 0
        %816 = vmatpush1.bf16.msra.mxu0 0
        %817 = vmatprep.subr.bf16.mxu0 0
        %818 = vmatpush1.bf16.msra.mxu0 0
        %819 = vmatprep.subr.bf16.mxu0 0
        %820 = vmatpush1.bf16.msra.mxu0 0
        %821 = vmatprep.subr.bf16.mxu0 0
        %822 = vmatpush1.bf16.msra.mxu0 0
        %823 = vmatprep.subr.bf16.mxu0 0
        %824 = vmatpush1.bf16.msra.mxu0 0
        %825 = vmatprep.subr.bf16.mxu0 0
        %826 = vmatpush1.bf16.msra.mxu0 0
        %827 = vmatprep.mubr.bf16.mxu0 0
        %828 = vmatmul.mubr.bf16.gmra.mrb[0].mxu0 %v729
        %v829 = vpop.f32.mrb[0].mxu0
        %v830 = vadd.f32 %v746, %v829
        %v831 = vpop.f32.mrb[0].mxu0
        %v832 = vpop.f32.mrb[0].mxu0
        %v833 = vpop.f32.mrb[0].mxu0
        %834 = vdwg.mxu0
        %v835 = vld [vmem:[%s4] sm:$0x1]
        %v836 = vlaneseq
        %v837 = vshrl.u32 %v836, 7
        %v838 = vsub.s32 0, %v837
        %v839 = vrot.slane %v835, %v838
        %v840 = vadd.f32 %v830, %v839
        %v841 = vld [vmem:[%s5] sm:$0x1]
        %v842 = vld [vmem:[%s6] sm:$0x1]
        %vm843 = vcmask 261120
        %v844 = vsel %vm843, %v840, 0.0
        %845 = vadd.xlane.f32.xlu0 %v844
        %v846 = vpop.xlane.xlu0 %845
        %v847 = vrcp.pop 32.0
        %v848 = vmul.f32 %v846, %v847
        %v849 = vsub.f32 %v840, %v848
        %v850 = vmul.f32 %v849, %v849
        %v851 = vsel %vm843, %v850, 0.0
        %852 = vadd.xlane.f32.xlu0 %v851
        %v853 = vpop.xlane.xlu0 %852
        %v854 = vmul.f32 %v853, %v847
        %v855 = vadd.f32 %v854, 1e-12
        %v856 = vrsqrt.pop %v855
        %v857 = vmul.f32 %v849, %v856
        %v859 = vlaneseq
        %v860 = vshrl.u32 %v859, 7
        %v861 = vsub.s32 0, %v860
        %v862 = vrot.slane %v841, %v861
        %v864 = vmul.f32 %v857, %v862
        %v866 = vlaneseq
        %v867 = vshrl.u32 %v866, 7
        %v868 = vsub.s32 0, %v867
        %v869 = vrot.slane %v842, %v868
        %v871 = vadd.f32 %v864, %v869
        %v872 = vld [vmem:[%s718] sm:$0x1]
        %v873 = vcvt.s32.f32 %v872
        %v874 = vsub.f32 1.0, %v873
        %v875 = vmul.f32 %v874, -1e+09
        %v876 = vpack.c.bf16 %v871, %v871
        %v877 = vld [vmem:[%s7] sm:$0xf]
        %v878 = vld [vmem:[%s7 + $0x4] sm:$0xf]
        %v879 = vld [vmem:[%s7 + $0x8] sm:$0xf]
        %v880 = vld [vmem:[%s7 + $0xc] sm:$0xf]
        %v881 = vld [vmem:[%s8] sm:$0x1]
        %v883 = vlaneseq
        %v884 = vshrl.u32 %v883, 7
        %v885 = vsub.s32 0, %v884
        %v886 = vrot.slane %v881, %v885
        %v892 = vunpack.c.l.b16 %v877
        %v893 = vunpack.c.l.b16 %v878
        %v894 = vunpack.c.l.b16 %v879
        %v895 = vunpack.c.l.b16 %v880
        %v896 = vpack.c.b16 %v893, %v892
        %v897 = vpack.c.b16 %v895, %v894
        %v901 = vsel %vm843, %v876, 0
        %903 = vmatprep.subr.bf16.mxu0 0
        %904 = vmatpush1.bf16.msra.mxu0 %v896
        %905 = vmatprep.subr.bf16.mxu0 0
        %906 = vmatpush1.bf16.msra.mxu0 %v897
        %907 = vmatprep.subr.bf16.mxu0 0
        %908 = vmatpush1.bf16.msra.mxu0 0
        %909 = vmatprep.subr.bf16.mxu0 0
        %910 = vmatpush1.bf16.msra.mxu0 0
        %911 = vmatprep.subr.bf16.mxu0 0
        %912 = vmatpush1.bf16.msra.mxu0 0
        %913 = vmatprep.subr.bf16.mxu0 0
        %914 = vmatpush1.bf16.msra.mxu0 0
        %915 = vmatprep.subr.bf16.mxu0 0
        %916 = vmatpush1.bf16.msra.mxu0 0
        %917 = vmatprep.subr.bf16.mxu0 0
        %918 = vmatpush1.bf16.msra.mxu0 0
        %919 = vmatprep.subr.bf16.mxu0 0
        %920 = vmatpush1.bf16.msra.mxu0 0
        %921 = vmatprep.subr.bf16.mxu0 0
        %922 = vmatpush1.bf16.msra.mxu0 0
        %923 = vmatprep.subr.bf16.mxu0 0
        %924 = vmatpush1.bf16.msra.mxu0 0
        %925 = vmatprep.subr.bf16.mxu0 0
        %926 = vmatpush1.bf16.msra.mxu0 0
        %927 = vmatprep.subr.bf16.mxu0 0
        %928 = vmatpush1.bf16.msra.mxu0 0
        %929 = vmatprep.subr.bf16.mxu0 0
        %930 = vmatpush1.bf16.msra.mxu0 0
        %931 = vmatprep.subr.bf16.mxu0 0
        %932 = vmatpush1.bf16.msra.mxu0 0
        %933 = vmatprep.subr.bf16.mxu0 0
        %934 = vmatpush1.bf16.msra.mxu0 0
        %935 = vmatprep.mubr.bf16.mxu0 0
        %936 = vmatmul.mubr.bf16.gmra.mrb[0].mxu0 %v901
        %v937 = vpop.f32.mrb[0].mxu0
        %v938 = vadd.f32 %v886, %v937
        %v939 = vpop.f32.mrb[0].mxu0
        %v940 = vpop.f32.mrb[0].mxu0
        %v941 = vpop.f32.mrb[0].mxu0
        %942 = vdwg.mxu0
        %944 = vrot.lane.b32.xlu0 %v938, 120
        %v945 = vpop.permute.xlu0 %944
        %947 = vrot.lane.b32.xlu0 %v938, 112
        %v948 = vpop.permute.xlu0 %947
        %950 = vrot.lane.b32.xlu0 %v938, 104
        %v951 = vpop.permute.xlu0 %950
        %v953 = vpack.c.bf16 %v938, %v938
        %v954 = vpack.c.bf16 %v945, %v945
        %v955 = vpack.c.bf16 %v948, %v948
        %v956 = vpack.c.bf16 %v951, %v951
        %958 = vrot.lane.b32.xlu0 %v953, 96
        %v959 = vpop.permute.xlu0 %958
        %vm960 = vcmask 64512
        %v962 = vsel %vm960, %v953, 0
        %v965 = vsel %vm960, %v959, 0
        %967 = vmatprep.subr.bf16.mxu0 0
        %968 = vmatpush1.bf16.xpose.msra.mxu0 %v965
        %969 = vmatprep.subr.bf16.mxu0 0
        %970 = vmatpush1.bf16.xpose.msra.mxu0 0
        %971 = vmatprep.subr.bf16.mxu0 0
        %972 = vmatpush1.bf16.xpose.msra.mxu0 0
        %973 = vmatprep.subr.bf16.mxu0 0
        %974 = vmatpush1.bf16.xpose.msra.mxu0 0
        %975 = vmatprep.subr.bf16.mxu0 0
        %976 = vmatpush1.bf16.xpose.msra.mxu0 0
        %977 = vmatprep.subr.bf16.mxu0 0
        %978 = vmatpush1.bf16.xpose.msra.mxu0 0
        %979 = vmatprep.subr.bf16.mxu0 0
        %980 = vmatpush1.bf16.xpose.msra.mxu0 0
        %981 = vmatprep.subr.bf16.mxu0 0
        %982 = vmatpush1.bf16.xpose.msra.mxu0 0
        %983 = vmatprep.subr.bf16.mxu0 0
        %984 = vmatpush1.bf16.xpose.msra.mxu0 0
        %985 = vmatprep.subr.bf16.mxu0 0
        %986 = vmatpush1.bf16.xpose.msra.mxu0 0
        %987 = vmatprep.subr.bf16.mxu0 0
        %988 = vmatpush1.bf16.xpose.msra.mxu0 0
        %989 = vmatprep.subr.bf16.mxu0 0
        %990 = vmatpush1.bf16.xpose.msra.mxu0 0
        %991 = vmatprep.subr.bf16.mxu0 0
        %992 = vmatpush1.bf16.xpose.msra.mxu0 0
        %993 = vmatprep.subr.bf16.mxu0 0
        %994 = vmatpush1.bf16.xpose.msra.mxu0 0
        %995 = vmatprep.subr.bf16.mxu0 0
        %996 = vmatpush1.bf16.xpose.msra.mxu0 0
        %997 = vmatprep.subr.bf16.mxu0 0
        %998 = vmatpush1.bf16.xpose.msra.mxu0 0
        %999 = vmatprep.mubr.bf16.mxu0 0
        %1000 = vmatmul.mubr.bf16.gmra.mrb[0].mxu0 %v962
        %v1001 = vpop.f32.mrb[0].mxu0
        %v1002 = vadd.f32 0.0, %v1001
        %v1003 = vpop.f32.mrb[0].mxu0
        %v1004 = vpop.f32.mrb[0].mxu0
        %v1005 = vpop.f32.mrb[0].mxu0
        %1006 = vdwg.mxu0
        %1008 = vrot.lane.b32.xlu0 %v954, 96
        %v1009 = vpop.permute.xlu0 %1008
        %v1011 = vsel %vm960, %v954, 0
        %v1014 = vsel %vm960, %v1009, 0
        %1016 = vmatprep.subr.bf16.mxu0 0
        %1017 = vmatpush1.bf16.xpose.msra.mxu0 %v1014
        %1018 = vmatprep.subr.bf16.mxu0 0
        %1019 = vmatpush1.bf16.xpose.msra.mxu0 0
        %1020 = vmatprep.subr.bf16.mxu0 0
        %1021 = vmatpush1.bf16.xpose.msra.mxu0 0
        %1022 = vmatprep.subr.bf16.mxu0 0
        %1023 = vmatpush1.bf16.xpose.msra.mxu0 0
        %1024 = vmatprep.subr.bf16.mxu0 0
        %1025 = vmatpush1.bf16.xpose.msra.mxu0 0
        %1026 = vmatprep.subr.bf16.mxu0 0
        %1027 = vmatpush1.bf16.xpose.msra.mxu0 0
        %1028 = vmatprep.subr.bf16.mxu0 0
        %1029 = vmatpush1.bf16.xpose.msra.mxu0 0
        %1030 = vmatprep.subr.bf16.mxu0 0
        %1031 = vmatpush1.bf16.xpose.msra.mxu0 0
        %1032 = vmatprep.subr.bf16.mxu0 0
        %1033 = vmatpush1.bf16.xpose.msra.mxu0 0
        %1034 = vmatprep.subr.bf16.mxu0 0
        %1035 = vmatpush1.bf16.xpose.msra.mxu0 0
        %1036 = vmatprep.subr.bf16.mxu0 0
        %1037 = vmatpush1.bf16.xpose.msra.mxu0 0
        %1038 = vmatprep.subr.bf16.mxu0 0
        %1039 = vmatpush1.bf16.xpose.msra.mxu0 0
        %1040 = vmatprep.subr.bf16.mxu0 0
        %1041 = vmatpush1.bf16.xpose.msra.mxu0 0
        %1042 = vmatprep.subr.bf16.mxu0 0
        %1043 = vmatpush1.bf16.xpose.msra.mxu0 0
        %1044 = vmatprep.subr.bf16.mxu0 0
        %1045 = vmatpush1.bf16.xpose.msra.mxu0 0
        %1046 = vmatprep.subr.bf16.mxu0 0
        %1047 = vmatpush1.bf16.xpose.msra.mxu0 0
        %1048 = vmatprep.mubr.bf16.mxu0 0
        %1049 = vmatmul.mubr.bf16.gmra.mrb[0].mxu0 %v1011
        %v1050 = vpop.f32.mrb[0].mxu0
        %v1051 = vadd.f32 0.0, %v1050
        %v1052 = vpop.f32.mrb[0].mxu0
        %v1053 = vpop.f32.mrb[0].mxu0
        %v1054 = vpop.f32.mrb[0].mxu0
        %1055 = vdwg.mxu0
        %1057 = vrot.lane.b32.xlu0 %v955, 96
        %v1058 = vpop.permute.xlu0 %1057
        %v1060 = vsel %vm960, %v955, 0
        %v1063 = vsel %vm960, %v1058, 0
        %1065 = vmatprep.subr.bf16.mxu0 0
        %1066 = vmatpush1.bf16.xpose.msra.mxu0 %v1063
        %1067 = vmatprep.subr.bf16.mxu0 0
        %1068 = vmatpush1.bf16.xpose.msra.mxu0 0
        %1069 = vmatprep.subr.bf16.mxu0 0
        %1070 = vmatpush1.bf16.xpose.msra.mxu0 0
        %1071 = vmatprep.subr.bf16.mxu0 0
        %1072 = vmatpush1.bf16.xpose.msra.mxu0 0
        %1073 = vmatprep.subr.bf16.mxu0 0
        %1074 = vmatpush1.bf16.xpose.msra.mxu0 0
        %1075 = vmatprep.subr.bf16.mxu0 0
        %1076 = vmatpush1.bf16.xpose.msra.mxu0 0
        %1077 = vmatprep.subr.bf16.mxu0 0
        %1078 = vmatpush1.bf16.xpose.msra.mxu0 0
        %1079 = vmatprep.subr.bf16.mxu0 0
        %1080 = vmatpush1.bf16.xpose.msra.mxu0 0
        %1081 = vmatprep.subr.bf16.mxu0 0
        %1082 = vmatpush1.bf16.xpose.msra.mxu0 0
        %1083 = vmatprep.subr.bf16.mxu0 0
        %1084 = vmatpush1.bf16.xpose.msra.mxu0 0
        %1085 = vmatprep.subr.bf16.mxu0 0
        %1086 = vmatpush1.bf16.xpose.msra.mxu0 0
        %1087 = vmatprep.subr.bf16.mxu0 0
        %1088 = vmatpush1.bf16.xpose.msra.mxu0 0
        %1089 = vmatprep.subr.bf16.mxu0 0
        %1090 = vmatpush1.bf16.xpose.msra.mxu0 0
        %1091 = vmatprep.subr.bf16.mxu0 0
        %1092 = vmatpush1.bf16.xpose.msra.mxu0 0
        %1093 = vmatprep.subr.bf16.mxu0 0
        %1094 = vmatpush1.bf16.xpose.msra.mxu0 0
        %1095 = vmatprep.subr.bf16.mxu0 0
        %1096 = vmatpush1.bf16.xpose.msra.mxu0 0
        %1097 = vmatprep.mubr.bf16.mxu0 0
        %1098 = vmatmul.mubr.bf16.gmra.mrb[0].mxu0 %v1060
        %v1099 = vpop.f32.mrb[0].mxu0
        %v1100 = vadd.f32 0.0, %v1099
        %v1101 = vpop.f32.mrb[0].mxu0
        %v1102 = vpop.f32.mrb[0].mxu0
        %v1103 = vpop.f32.mrb[0].mxu0
        %1104 = vdwg.mxu0
        %1106 = vrot.lane.b32.xlu0 %v956, 96
        %v1107 = vpop.permute.xlu0 %1106
        %v1109 = vsel %vm960, %v956, 0
        %v1112 = vsel %vm960, %v1107, 0
        %1114 = vmatprep.subr.bf16.mxu0 0
        %1115 = vmatpush1.bf16.xpose.msra.mxu0 %v1112
        %1116 = vmatprep.subr.bf16.mxu0 0
        %1117 = vmatpush1.bf16.xpose.msra.mxu0 0
        %1118 = vmatprep.subr.bf16.mxu0 0
        %1119 = vmatpush1.bf16.xpose.msra.mxu0 0
        %1120 = vmatprep.subr.bf16.mxu0 0
        %1121 = vmatpush1.bf16.xpose.msra.mxu0 0
        %1122 = vmatprep.subr.bf16.mxu0 0
        %1123 = vmatpush1.bf16.xpose.msra.mxu0 0
        %1124 = vmatprep.subr.bf16.mxu0 0
        %1125 = vmatpush1.bf16.xpose.msra.mxu0 0
        %1126 = vmatprep.subr.bf16.mxu0 0
        %1127 = vmatpush1.bf16.xpose.msra.mxu0 0
        %1128 = vmatprep.subr.bf16.mxu0 0
        %1129 = vmatpush1.bf16.xpose.msra.mxu0 0
        %1130 = vmatprep.subr.bf16.mxu0 0
        %1131 = vmatpush1.bf16.xpose.msra.mxu0 0
        %1132 = vmatprep.subr.bf16.mxu0 0
        %1133 = vmatpush1.bf16.xpose.msra.mxu0 0
        %1134 = vmatprep.subr.bf16.mxu0 0
        %1135 = vmatpush1.bf16.xpose.msra.mxu0 0
        %1136 = vmatprep.subr.bf16.mxu0 0
        %1137 = vmatpush1.bf16.xpose.msra.mxu0 0
        %1138 = vmatprep.subr.bf16.mxu0 0
        %1139 = vmatpush1.bf16.xpose.msra.mxu0 0
        %1140 = vmatprep.subr.bf16.mxu0 0
        %1141 = vmatpush1.bf16.xpose.msra.mxu0 0
        %1142 = vmatprep.subr.bf16.mxu0 0
        %1143 = vmatpush1.bf16.xpose.msra.mxu0 0
        %1144 = vmatprep.subr.bf16.mxu0 0
        %1145 = vmatpush1.bf16.xpose.msra.mxu0 0
        %1146 = vmatprep.mubr.bf16.mxu0 0
        %1147 = vmatmul.mubr.bf16.gmra.mrb[0].mxu0 %v1109
        %v1148 = vpop.f32.mrb[0].mxu0
        %v1149 = vadd.f32 0.0, %v1148
        %v1150 = vpop.f32.mrb[0].mxu0
        %v1151 = vpop.f32.mrb[0].mxu0
        %v1152 = vpop.f32.mrb[0].mxu0
        %1153 = vdwg.mxu0
        %v1154 = vmul.f32 %v1002, 0.35355338
        %v1155 = vmul.f32 %v1051, 0.35355338
        %v1156 = vmul.f32 %v1100, 0.35355338
        %v1157 = vmul.f32 %v1149, 0.35355338
        %v1159 = vlaneseq
        %v1160 = vshrl.u32 %v1159, 7
        %v1161 = vsub.s32 0, %v1160
        %v1162 = vrot.slane %v875, %v1161
        %v1164 = vadd.f32 %v1154, %v1162
        %v1165 = vadd.f32 %v1155, %v1162
        %v1166 = vadd.f32 %v1156, %v1162
        %v1167 = vadd.f32 %v1157, %v1162
        %v1168 = vsel %vm960, %v1164, -inf
        %1169 = vmax.xlane.f32.xlu0 %v1168
        %v1170 = vpop.xlane.xlu0 %1169
        %v1171 = vsel %vm960, %v1165, -inf
        %1172 = vmax.xlane.f32.xlu0 %v1171
        %v1173 = vpop.xlane.xlu0 %1172
        %v1174 = vsel %vm960, %v1166, -inf
        %1175 = vmax.xlane.f32.xlu0 %v1174
        %v1176 = vpop.xlane.xlu0 %1175
        %v1177 = vsel %vm960, %v1167, -inf
        %1178 = vmax.xlane.f32.xlu0 %v1177
        %v1179 = vpop.xlane.xlu0 %1178
        %v1180 = vsub.f32 %v1164, %v1170
        %v1181 = vsub.f32 %v1165, %v1173
        %v1182 = vsub.f32 %v1166, %v1176
        %v1183 = vsub.f32 %v1167, %v1179
        %v1184 = vmul.f32 %v1180, 1.442695
        %v1185 = vpow.pop %v1184
        %v1186 = vmul.f32 %v1181, 1.442695
        %v1187 = vpow.pop %v1186
        %v1188 = vmul.f32 %v1182, 1.442695
        %v1189 = vpow.pop %v1188
        %v1190 = vmul.f32 %v1183, 1.442695
        %v1191 = vpow.pop %v1190
        %v1192 = vsel %vm960, %v1185, 0.0
        %1193 = vadd.xlane.f32.xlu0 %v1192
        %v1194 = vpop.xlane.xlu0 %1193
        %v1195 = vsel %vm960, %v1187, 0.0
        %1196 = vadd.xlane.f32.xlu0 %v1195
        %v1197 = vpop.xlane.xlu0 %1196
        %v1198 = vsel %vm960, %v1189, 0.0
        %1199 = vadd.xlane.f32.xlu0 %v1198
        %v1200 = vpop.xlane.xlu0 %1199
        %v1201 = vsel %vm960, %v1191, 0.0
        %1202 = vadd.xlane.f32.xlu0 %v1201
        %v1203 = vpop.xlane.xlu0 %1202
        %v1204 = vrcp.pop %v1194
        %v1205 = vrcp.pop %v1197
        %v1206 = vrcp.pop %v1200
        %v1207 = vrcp.pop %v1203
        %v1208 = vmul.f32 %v1185, %v1204
        %v1209 = vmul.f32 %v1187, %v1205
        %v1210 = vmul.f32 %v1189, %v1206
        %v1211 = vmul.f32 %v1191, %v1207
        %v1212 = vpack.c.bf16 %v1208, %v1208
        %v1213 = vpack.c.bf16 %v1209, %v1209
        %v1214 = vpack.c.bf16 %v1210, %v1210
        %v1215 = vpack.c.bf16 %v1211, %v1211
        %1216 = vrot.lane.b32.xlu0 %v953, 64
        %v1217 = vpop.permute.xlu0 %1216
        %v1219 = vsel %vm960, %v1212, 0
        %vm1221 = vcmask 1043456
        %v1223 = vsel %vm1221, %v1217, 0
        %1225 = vmatprep.subr.bf16.mxu0 0
        %1226 = vmatpush1.bf16.msra.mxu0 %v1223
        %1227 = vmatprep.subr.bf16.mxu0 0
        %1228 = vmatpush1.bf16.msra.mxu0 0
        %1229 = vmatprep.subr.bf16.mxu0 0
        %1230 = vmatpush1.bf16.msra.mxu0 0
        %1231 = vmatprep.subr.bf16.mxu0 0
        %1232 = vmatpush1.bf16.msra.mxu0 0
        %1233 = vmatprep.subr.bf16.mxu0 0
        %1234 = vmatpush1.bf16.msra.mxu0 0
        %1235 = vmatprep.subr.bf16.mxu0 0
        %1236 = vmatpush1.bf16.msra.mxu0 0
        %1237 = vmatprep.subr.bf16.mxu0 0
        %1238 = vmatpush1.bf16.msra.mxu0 0
        %1239 = vmatprep.subr.bf16.mxu0 0
        %1240 = vmatpush1.bf16.msra.mxu0 0
        %1241 = vmatprep.subr.bf16.mxu0 0
        %1242 = vmatpush1.bf16.msra.mxu0 0
        %1243 = vmatprep.subr.bf16.mxu0 0
        %1244 = vmatpush1.bf16.msra.mxu0 0
        %1245 = vmatprep.subr.bf16.mxu0 0
        %1246 = vmatpush1.bf16.msra.mxu0 0
        %1247 = vmatprep.subr.bf16.mxu0 0
        %1248 = vmatpush1.bf16.msra.mxu0 0
        %1249 = vmatprep.subr.bf16.mxu0 0
        %1250 = vmatpush1.bf16.msra.mxu0 0
        %1251 = vmatprep.subr.bf16.mxu0 0
        %1252 = vmatpush1.bf16.msra.mxu0 0
        %1253 = vmatprep.subr.bf16.mxu0 0
        %1254 = vmatpush1.bf16.msra.mxu0 0
        %1255 = vmatprep.subr.bf16.mxu0 0
        %1256 = vmatpush1.bf16.msra.mxu0 0
        %1257 = vmatprep.mubr.bf16.mxu0 0
        %1258 = vmatmul.mubr.bf16.gmra.mrb[0].mxu0 %v1219
        %v1259 = vpop.f32.mrb[0].mxu0
        %v1260 = vadd.f32 0.0, %v1259
        %v1261 = vpop.f32.mrb[0].mxu0
        %v1262 = vpop.f32.mrb[0].mxu0
        %v1263 = vpop.f32.mrb[0].mxu0
        %1264 = vdwg.mxu0
        %1265 = vrot.lane.b32.xlu0 %v954, 64
        %v1266 = vpop.permute.xlu0 %1265
        %v1268 = vsel %vm960, %v1213, 0
        %v1271 = vsel %vm1221, %v1266, 0
        %1273 = vmatprep.subr.bf16.mxu0 0
        %1274 = vmatpush1.bf16.msra.mxu0 %v1271
        %1275 = vmatprep.subr.bf16.mxu0 0
        %1276 = vmatpush1.bf16.msra.mxu0 0
        %1277 = vmatprep.subr.bf16.mxu0 0
        %1278 = vmatpush1.bf16.msra.mxu0 0
        %1279 = vmatprep.subr.bf16.mxu0 0
        %1280 = vmatpush1.bf16.msra.mxu0 0
        %1281 = vmatprep.subr.bf16.mxu0 0
        %1282 = vmatpush1.bf16.msra.mxu0 0
        %1283 = vmatprep.subr.bf16.mxu0 0
        %1284 = vmatpush1.bf16.msra.mxu0 0
        %1285 = vmatprep.subr.bf16.mxu0 0
        %1286 = vmatpush1.bf16.msra.mxu0 0
        %1287 = vmatprep.subr.bf16.mxu0 0
        %1288 = vmatpush1.bf16.msra.mxu0 0
        %1289 = vmatprep.subr.bf16.mxu0 0
        %1290 = vmatpush1.bf16.msra.mxu0 0
        %1291 = vmatprep.subr.bf16.mxu0 0
        %1292 = vmatpush1.bf16.msra.mxu0 0
        %1293 = vmatprep.subr.bf16.mxu0 0
        %1294 = vmatpush1.bf16.msra.mxu0 0
        %1295 = vmatprep.subr.bf16.mxu0 0
        %1296 = vmatpush1.bf16.msra.mxu0 0
        %1297 = vmatprep.subr.bf16.mxu0 0
        %1298 = vmatpush1.bf16.msra.mxu0 0
        %1299 = vmatprep.subr.bf16.mxu0 0
        %1300 = vmatpush1.bf16.msra.mxu0 0
        %1301 = vmatprep.subr.bf16.mxu0 0
        %1302 = vmatpush1.bf16.msra.mxu0 0
        %1303 = vmatprep.subr.bf16.mxu0 0
        %1304 = vmatpush1.bf16.msra.mxu0 0
        %1305 = vmatprep.mubr.bf16.mxu0 0
        %1306 = vmatmul.mubr.bf16.gmra.mrb[0].mxu0 %v1268
        %v1307 = vpop.f32.mrb[0].mxu0
        %v1308 = vadd.f32 0.0, %v1307
        %v1309 = vpop.f32.mrb[0].mxu0
        %v1310 = vpop.f32.mrb[0].mxu0
        %v1311 = vpop.f32.mrb[0].mxu0
        %1312 = vdwg.mxu0
        %1313 = vrot.lane.b32.xlu0 %v955, 64
        %v1314 = vpop.permute.xlu0 %1313
        %v1316 = vsel %vm960, %v1214, 0
        %v1319 = vsel %vm1221, %v1314, 0
        %1321 = vmatprep.subr.bf16.mxu0 0
        %1322 = vmatpush1.bf16.msra.mxu0 %v1319
        %1323 = vmatprep.subr.bf16.mxu0 0
        %1324 = vmatpush1.bf16.msra.mxu0 0
        %1325 = vmatprep.subr.bf16.mxu0 0
        %1326 = vmatpush1.bf16.msra.mxu0 0
        %1327 = vmatprep.subr.bf16.mxu0 0
        %1328 = vmatpush1.bf16.msra.mxu0 0
        %1329 = vmatprep.subr.bf16.mxu0 0
        %1330 = vmatpush1.bf16.msra.mxu0 0
        %1331 = vmatprep.subr.bf16.mxu0 0
        %1332 = vmatpush1.bf16.msra.mxu0 0
        %1333 = vmatprep.subr.bf16.mxu0 0
        %1334 = vmatpush1.bf16.msra.mxu0 0
        %1335 = vmatprep.subr.bf16.mxu0 0
        %1336 = vmatpush1.bf16.msra.mxu0 0
        %1337 = vmatprep.subr.bf16.mxu0 0
        %1338 = vmatpush1.bf16.msra.mxu0 0
        %1339 = vmatprep.subr.bf16.mxu0 0
        %1340 = vmatpush1.bf16.msra.mxu0 0
        %1341 = vmatprep.subr.bf16.mxu0 0
        %1342 = vmatpush1.bf16.msra.mxu0 0
        %1343 = vmatprep.subr.bf16.mxu0 0
        %1344 = vmatpush1.bf16.msra.mxu0 0
        %1345 = vmatprep.subr.bf16.mxu0 0
        %1346 = vmatpush1.bf16.msra.mxu0 0
        %1347 = vmatprep.subr.bf16.mxu0 0
        %1348 = vmatpush1.bf16.msra.mxu0 0
        %1349 = vmatprep.subr.bf16.mxu0 0
        %1350 = vmatpush1.bf16.msra.mxu0 0
        %1351 = vmatprep.subr.bf16.mxu0 0
        %1352 = vmatpush1.bf16.msra.mxu0 0
        %1353 = vmatprep.mubr.bf16.mxu0 0
        %1354 = vmatmul.mubr.bf16.gmra.mrb[0].mxu0 %v1316
        %v1355 = vpop.f32.mrb[0].mxu0
        %v1356 = vadd.f32 0.0, %v1355
        %v1357 = vpop.f32.mrb[0].mxu0
        %v1358 = vpop.f32.mrb[0].mxu0
        %v1359 = vpop.f32.mrb[0].mxu0
        %1360 = vdwg.mxu0
        %1361 = vrot.lane.b32.xlu0 %v956, 64
        %v1362 = vpop.permute.xlu0 %1361
        %v1364 = vsel %vm960, %v1215, 0
        %v1367 = vsel %vm1221, %v1362, 0
        %1369 = vmatprep.subr.bf16.mxu0 0
        %1370 = vmatpush1.bf16.msra.mxu0 %v1367
        %1371 = vmatprep.subr.bf16.mxu0 0
        %1372 = vmatpush1.bf16.msra.mxu0 0
        %1373 = vmatprep.subr.bf16.mxu0 0
        %1374 = vmatpush1.bf16.msra.mxu0 0
        %1375 = vmatprep.subr.bf16.mxu0 0
        %1376 = vmatpush1.bf16.msra.mxu0 0
        %1377 = vmatprep.subr.bf16.mxu0 0
        %1378 = vmatpush1.bf16.msra.mxu0 0
        %1379 = vmatprep.subr.bf16.mxu0 0
        %1380 = vmatpush1.bf16.msra.mxu0 0
        %1381 = vmatprep.subr.bf16.mxu0 0
        %1382 = vmatpush1.bf16.msra.mxu0 0
        %1383 = vmatprep.subr.bf16.mxu0 0
        %1384 = vmatpush1.bf16.msra.mxu0 0
        %1385 = vmatprep.subr.bf16.mxu0 0
        %1386 = vmatpush1.bf16.msra.mxu0 0
        %1387 = vmatprep.subr.bf16.mxu0 0
        %1388 = vmatpush1.bf16.msra.mxu0 0
        %1389 = vmatprep.subr.bf16.mxu0 0
        %1390 = vmatpush1.bf16.msra.mxu0 0
        %1391 = vmatprep.subr.bf16.mxu0 0
        %1392 = vmatpush1.bf16.msra.mxu0 0
        %1393 = vmatprep.subr.bf16.mxu0 0
        %1394 = vmatpush1.bf16.msra.mxu0 0
        %1395 = vmatprep.subr.bf16.mxu0 0
        %1396 = vmatpush1.bf16.msra.mxu0 0
        %1397 = vmatprep.subr.bf16.mxu0 0
        %1398 = vmatpush1.bf16.msra.mxu0 0
        %1399 = vmatprep.subr.bf16.mxu0 0
        %1400 = vmatpush1.bf16.msra.mxu0 0
        %1401 = vmatprep.mubr.bf16.mxu0 0
        %1402 = vmatmul.mubr.bf16.gmra.mrb[0].mxu0 %v1364
        %v1403 = vpop.f32.mrb[0].mxu0
        %v1404 = vadd.f32 0.0, %v1403
        %v1405 = vpop.f32.mrb[0].mxu0
        %v1406 = vpop.f32.mrb[0].mxu0
        %v1407 = vpop.f32.mrb[0].mxu0
        %1408 = vdwg.mxu0
        %1410 = vrot.lane.b32.xlu0 %v1308, 8
        %v1411 = vpop.permute.xlu0 %1410
        %1414 = vrot.lane.b32.xlu0 %v1356, 16
        %v1415 = vpop.permute.xlu0 %1414
        %1418 = vrot.lane.b32.xlu0 %v1404, 24
        %v1419 = vpop.permute.xlu0 %1418
        %v1421 = vsel %vm960, %v1260, %v1411
        %vm1422 = vcmask 130048
        %v1423 = vsel %vm1422, %v1421, %v1415
        %vm1424 = vcmask 195584
        %v1425 = vsel %vm1424, %v1423, %v1419
        %v1426 = vpack.c.bf16 %v1425, %v1425
        %v1427 = vld [vmem:[%s9] sm:$0xf]
        %v1428 = vld [vmem:[%s9 + $0x4] sm:$0xf]
        %v1429 = vld [vmem:[%s9 + $0x8] sm:$0xf]
        %v1430 = vld [vmem:[%s9 + $0xc] sm:$0xf]
        %v1431 = vld [vmem:[%s10] sm:$0x1]
        %v1433 = vlaneseq
        %v1434 = vshrl.u32 %v1433, 7
        %v1435 = vsub.s32 0, %v1434
        %v1436 = vrot.slane %v1431, %v1435
        %v1442 = vunpack.c.l.b16 %v1427
        %v1443 = vunpack.c.l.b16 %v1428
        %v1444 = vunpack.c.l.b16 %v1429
        %v1445 = vunpack.c.l.b16 %v1430
        %v1446 = vpack.c.b16 %v1443, %v1442
        %v1447 = vpack.c.b16 %v1445, %v1444
        %v1451 = vsel %vm843, %v1426, 0
        %1453 = vmatprep.subr.bf16.mxu0 0
        %1454 = vmatpush1.bf16.msra.mxu0 %v1446
        %1455 = vmatprep.subr.bf16.mxu0 0
        %1456 = vmatpush1.bf16.msra.mxu0 %v1447
        %1457 = vmatprep.subr.bf16.mxu0 0
        %1458 = vmatpush1.bf16.msra.mxu0 0
        %1459 = vmatprep.subr.bf16.mxu0 0
        %1460 = vmatpush1.bf16.msra.mxu0 0
        %1461 = vmatprep.subr.bf16.mxu0 0
        %1462 = vmatpush1.bf16.msra.mxu0 0
        %1463 = vmatprep.subr.bf16.mxu0 0
        %1464 = vmatpush1.bf16.msra.mxu0 0
        %1465 = vmatprep.subr.bf16.mxu0 0
        %1466 = vmatpush1.bf16.msra.mxu0 0
        %1467 = vmatprep.subr.bf16.mxu0 0
        %1468 = vmatpush1.bf16.msra.mxu0 0
        %1469 = vmatprep.subr.bf16.mxu0 0
        %1470 = vmatpush1.bf16.msra.mxu0 0
        %1471 = vmatprep.subr.bf16.mxu0 0
        %1472 = vmatpush1.bf16.msra.mxu0 0
        %1473 = vmatprep.subr.bf16.mxu0 0
        %1474 = vmatpush1.bf16.msra.mxu0 0
        %1475 = vmatprep.subr.bf16.mxu0 0
        %1476 = vmatpush1.bf16.msra.mxu0 0
        %1477 = vmatprep.subr.bf16.mxu0 0
        %1478 = vmatpush1.bf16.msra.mxu0 0
        %1479 = vmatprep.subr.bf16.mxu0 0
        %1480 = vmatpush1.bf16.msra.mxu0 0
        %1481 = vmatprep.subr.bf16.mxu0 0
        %1482 = vmatpush1.bf16.msra.mxu0 0
        %1483 = vmatprep.subr.bf16.mxu0 0
        %1484 = vmatpush1.bf16.msra.mxu0 0
        %1485 = vmatprep.mubr.bf16.mxu0 0
        %1486 = vmatmul.mubr.bf16.gmra.mrb[0].mxu0 %v1451
        %v1487 = vpop.f32.mrb[0].mxu0
        %v1488 = vadd.f32 %v1436, %v1487
        %v1489 = vpop.f32.mrb[0].mxu0
        %v1490 = vpop.f32.mrb[0].mxu0
        %v1491 = vpop.f32.mrb[0].mxu0
        %1492 = vdwg.mxu0
        %v1493 = vadd.f32 %v1488, %v871
        %v1494 = vld [vmem:[%s11] sm:$0x1]
        %v1495 = vld [vmem:[%s12] sm:$0x1]
        %v1496 = vsel %vm843, %v1493, 0.0
        %1497 = vadd.xlane.f32.xlu0 %v1496
        %v1498 = vpop.xlane.xlu0 %1497
        %v1499 = vmul.f32 %v1498, %v847
        %v1500 = vsub.f32 %v1493, %v1499
        %v1501 = vmul.f32 %v1500, %v1500
        %v1502 = vsel %vm843, %v1501, 0.0
        %1503 = vadd.xlane.f32.xlu0 %v1502
        %v1504 = vpop.xlane.xlu0 %1503
        %v1505 = vmul.f32 %v1504, %v847
        %v1506 = vadd.f32 %v1505, 1e-12
        %v1507 = vrsqrt.pop %v1506
        %v1508 = vmul.f32 %v1500, %v1507
        %v1510 = vlaneseq
        %v1511 = vshrl.u32 %v1510, 7
        %v1512 = vsub.s32 0, %v1511
        %v1513 = vrot.slane %v1494, %v1512
        %v1515 = vmul.f32 %v1508, %v1513
        %v1517 = vlaneseq
        %v1518 = vshrl.u32 %v1517, 7
        %v1519 = vsub.s32 0, %v1518
        %v1520 = vrot.slane %v1495, %v1519
        %v1522 = vadd.f32 %v1515, %v1520
        %v1523 = vpack.c.bf16 %v1522, %v1522
        %v1524 = vld [vmem:[%s13] sm:$0xf]
        %v1525 = vld [vmem:[%s13 + $0x4] sm:$0xf]
        %v1526 = vld [vmem:[%s13 + $0x8] sm:$0xf]
        %v1527 = vld [vmem:[%s13 + $0xc] sm:$0xf]
        %v1528 = vld [vmem:[%s14] sm:$0x1]
        %v1530 = vlaneseq
        %v1531 = vshrl.u32 %v1530, 7
        %v1532 = vsub.s32 0, %v1531
        %v1533 = vrot.slane %v1528, %v1532
        %v1539 = vunpack.c.l.b16 %v1524
        %v1540 = vunpack.c.l.b16 %v1525
        %v1541 = vunpack.c.l.b16 %v1526
        %v1542 = vunpack.c.l.b16 %v1527
        %v1543 = vpack.c.b16 %v1540, %v1539
        %v1544 = vpack.c.b16 %v1542, %v1541
        %v1548 = vsel %vm843, %v1523, 0
        %1550 = vmatprep.subr.bf16.mxu0 0
        %1551 = vmatpush1.bf16.msra.mxu0 %v1543
        %1552 = vmatprep.subr.bf16.mxu0 0
        %1553 = vmatpush1.bf16.msra.mxu0 %v1544
        %1554 = vmatprep.subr.bf16.mxu0 0
        %1555 = vmatpush1.bf16.msra.mxu0 0
        %1556 = vmatprep.subr.bf16.mxu0 0
        %1557 = vmatpush1.bf16.msra.mxu0 0
        %1558 = vmatprep.subr.bf16.mxu0 0
        %1559 = vmatpush1.bf16.msra.mxu0 0
        %1560 = vmatprep.subr.bf16.mxu0 0
        %1561 = vmatpush1.bf16.msra.mxu0 0
        %1562 = vmatprep.subr.bf16.mxu0 0
        %1563 = vmatpush1.bf16.msra.mxu0 0
        %1564 = vmatprep.subr.bf16.mxu0 0
        %1565 = vmatpush1.bf16.msra.mxu0 0
        %1566 = vmatprep.subr.bf16.mxu0 0
        %1567 = vmatpush1.bf16.msra.mxu0 0
        %1568 = vmatprep.subr.bf16.mxu0 0
        %1569 = vmatpush1.bf16.msra.mxu0 0
        %1570 = vmatprep.subr.bf16.mxu0 0
        %1571 = vmatpush1.bf16.msra.mxu0 0
        %1572 = vmatprep.subr.bf16.mxu0 0
        %1573 = vmatpush1.bf16.msra.mxu0 0
        %1574 = vmatprep.subr.bf16.mxu0 0
        %1575 = vmatpush1.bf16.msra.mxu0 0
        %1576 = vmatprep.subr.bf16.mxu0 0
        %1577 = vmatpush1.bf16.msra.mxu0 0
        %1578 = vmatprep.subr.bf16.mxu0 0
        %1579 = vmatpush1.bf16.msra.mxu0 0
        %1580 = vmatprep.subr.bf16.mxu0 0
        %1581 = vmatpush1.bf16.msra.mxu0 0
        %1582 = vmatprep.mubr.bf16.mxu0 0
        %1583 = vmatmul.mubr.bf16.gmra.mrb[0].mxu0 %v1548
        %v1584 = vpop.f32.mrb[0].mxu0
        %v1585 = vadd.f32 %v1533, %v1584
        %v1586 = vpop.f32.mrb[0].mxu0
        %v1587 = vpop.f32.mrb[0].mxu0
        %v1588 = vpop.f32.mrb[0].mxu0
        %1589 = vdwg.mxu0
        %v1590 = vmul.f32 %v1585, 0.5
        %v1591 = vmul.f32 %v1585, 0.044715
        %v1592 = vmul.f32 %v1591, %v1585
        %v1593 = vmul.f32 %v1592, %v1585
        %v1594 = vadd.f32 %v1585, %v1593
        %v1595 = vmul.f32 %v1594, 0.7978846
        %v1596 = vtanh.pop %v1595
        %v1597 = vadd.f32 %v1596, 1.0
        %v1598 = vmul.f32 %v1590, %v1597
        %v1599 = vpack.c.bf16 %v1598, %v1598
        %v1600 = vld [vmem:[%s15] sm:$0xf]
        %v1601 = vld [vmem:[%s15 + $0x4] sm:$0xf]
        %v1602 = vld [vmem:[%s15 + $0x8] sm:$0xf]
        %v1603 = vld [vmem:[%s15 + $0xc] sm:$0xf]
        %v1604 = vld [vmem:[%s15 + $0x10] sm:$0xf]
        %v1605 = vld [vmem:[%s15 + $0x14] sm:$0xf]
        %v1606 = vld [vmem:[%s15 + $0x18] sm:$0xf]
        %v1607 = vld [vmem:[%s15 + $0x1c] sm:$0xf]
        %v1608 = vld [vmem:[%s16] sm:$0x1]
        %v1610 = vlaneseq
        %v1611 = vshrl.u32 %v1610, 7
        %v1612 = vsub.s32 0, %v1611
        %v1613 = vrot.slane %v1608, %v1612
        %v1623 = vunpack.c.l.b16 %v1600
        %v1624 = vunpack.c.l.b16 %v1601
        %v1625 = vunpack.c.l.b16 %v1602
        %v1626 = vunpack.c.l.b16 %v1603
        %v1627 = vunpack.c.l.b16 %v1604
        %v1628 = vunpack.c.l.b16 %v1605
        %v1629 = vunpack.c.l.b16 %v1606
        %v1630 = vunpack.c.l.b16 %v1607
        %v1631 = vpack.c.b16 %v1624, %v1623
        %v1632 = vpack.c.b16 %v1626, %v1625
        %v1633 = vpack.c.b16 %v1628, %v1627
        %v1634 = vpack.c.b16 %v1630, %v1629
        %vm1639 = vcmask 523264
        %v1641 = vsel %vm1639, %v1599, 0
        %1643 = vmatprep.subr.bf16.mxu0 0
        %1644 = vmatpush1.bf16.msra.mxu0 %v1631
        %1645 = vmatprep.subr.bf16.mxu0 0
        %1646 = vmatpush1.bf16.msra.mxu0 %v1632
        %1647 = vmatprep.subr.bf16.mxu0 0
        %1648 = vmatpush1.bf16.msra.mxu0 %v1633
        %1649 = vmatprep.subr.bf16.mxu0 0
        %1650 = vmatpush1.bf16.msra.mxu0 %v1634
        %1651 = vmatprep.subr.bf16.mxu0 0
        %1652 = vmatpush1.bf16.msra.mxu0 0
        %1653 = vmatprep.subr.bf16.mxu0 0
        %1654 = vmatpush1.bf16.msra.mxu0 0
        %1655 = vmatprep.subr.bf16.mxu0 0
        %1656 = vmatpush1.bf16.msra.mxu0 0
        %1657 = vmatprep.subr.bf16.mxu0 0
        %1658 = vmatpush1.bf16.msra.mxu0 0
        %1659 = vmatprep.subr.bf16.mxu0 0
        %1660 = vmatpush1.bf16.msra.mxu0 0
        %1661 = vmatprep.subr.bf16.mxu0 0
        %1662 = vmatpush1.bf16.msra.mxu0 0
        %1663 = vmatprep.subr.bf16.mxu0 0
        %1664 = vmatpush1.bf16.msra.mxu0 0
        %1665 = vmatprep.subr.bf16.mxu0 0
        %1666 = vmatpush1.bf16.msra.mxu0 0
        %1667 = vmatprep.subr.bf16.mxu0 0
        %1668 = vmatpush1.bf16.msra.mxu0 0
        %1669 = vmatprep.subr.bf16.mxu0 0
        %1670 = vmatpush1.bf16.msra.mxu0 0
        %1671 = vmatprep.subr.bf16.mxu0 0
        %1672 = vmatpush1.bf16.msra.mxu0 0
        %1673 = vmatprep.subr.bf16.mxu0 0
        %1674 = vmatpush1.bf16.msra.mxu0 0
        %1675 = vmatprep.mubr.bf16.mxu0 0
        %1676 = vmatmul.mubr.bf16.gmra.mrb[0].mxu0 %v1641
        %v1677 = vpop.f32.mrb[0].mxu0
        %v1678 = vadd.f32 %v1613, %v1677
        %v1679 = vpop.f32.mrb[0].mxu0
        %v1680 = vpop.f32.mrb[0].mxu0
        %v1681 = vpop.f32.mrb[0].mxu0
        %1682 = vdwg.mxu0
        %v1683 = vadd.f32 %v1678, %v1522
        %v1684 = vld [vmem:[%s17] sm:$0x1]
        %v1685 = vld [vmem:[%s18] sm:$0x1]
        %v1686 = vsel %vm843, %v1683, 0.0
        %1687 = vadd.xlane.f32.xlu0 %v1686
        %v1688 = vpop.xlane.xlu0 %1687
        %v1689 = vmul.f32 %v1688, %v847
        %v1690 = vsub.f32 %v1683, %v1689
        %v1691 = vmul.f32 %v1690, %v1690
        %v1692 = vsel %vm843, %v1691, 0.0
        %1693 = vadd.xlane.f32.xlu0 %v1692
        %v1694 = vpop.xlane.xlu0 %1693
        %v1695 = vmul.f32 %v1694, %v847
        %v1696 = vadd.f32 %v1695, 1e-12
        %v1697 = vrsqrt.pop %v1696
        %v1698 = vmul.f32 %v1690, %v1697
        %v1700 = vlaneseq
        %v1701 = vshrl.u32 %v1700, 7
        %v1702 = vsub.s32 0, %v1701
        %v1703 = vrot.slane %v1684, %v1702
        %v1705 = vmul.f32 %v1698, %v1703
        %v1707 = vlaneseq
        %v1708 = vshrl.u32 %v1707, 7
        %v1709 = vsub.s32 0, %v1708
        %v1710 = vrot.slane %v1685, %v1709
        %v1712 = vadd.f32 %v1705, %v1710
        %v1713 = vpack.c.bf16 %v1712, %v1712
        %s1714 = scalar_lea.vmem %s7, 16
        %v1715 = vld [vmem:[%s1714] sm:$0xf]
        %v1716 = vld [vmem:[%s1714 + $0x4] sm:$0xf]
        %v1717 = vld [vmem:[%s1714 + $0x8] sm:$0xf]
        %v1718 = vld [vmem:[%s1714 + $0xc] sm:$0xf]
        %s1719 = scalar_lea.vmem %s8, 1
        %v1720 = vld [vmem:[%s1719] sm:$0x1]
        %v1722 = vlaneseq
        %v1723 = vshrl.u32 %v1722, 7
        %v1724 = vsub.s32 0, %v1723
        %v1725 = vrot.slane %v1720, %v1724
        %v1731 = vunpack.c.l.b16 %v1715
        %v1732 = vunpack.c.l.b16 %v1716
        %v1733 = vunpack.c.l.b16 %v1717
        %v1734 = vunpack.c.l.b16 %v1718
        %v1735 = vpack.c.b16 %v1732, %v1731
        %v1736 = vpack.c.b16 %v1734, %v1733
        %v1740 = vsel %vm843, %v1713, 0
        %1742 = vmatprep.subr.bf16.mxu0 0
        %1743 = vmatpush1.bf16.msra.mxu0 %v1735
        %1744 = vmatprep.subr.bf16.mxu0 0
        %1745 = vmatpush1.bf16.msra.mxu0 %v1736
        %1746 = vmatprep.subr.bf16.mxu0 0
        %1747 = vmatpush1.bf16.msra.mxu0 0
        %1748 = vmatprep.subr.bf16.mxu0 0
        %1749 = vmatpush1.bf16.msra.mxu0 0
        %1750 = vmatprep.subr.bf16.mxu0 0
        %1751 = vmatpush1.bf16.msra.mxu0 0
        %1752 = vmatprep.subr.bf16.mxu0 0
        %1753 = vmatpush1.bf16.msra.mxu0 0
        %1754 = vmatprep.subr.bf16.mxu0 0
        %1755 = vmatpush1.bf16.msra.mxu0 0
        %1756 = vmatprep.subr.bf16.mxu0 0
        %1757 = vmatpush1.bf16.msra.mxu0 0
        %1758 = vmatprep.subr.bf16.mxu0 0
        %1759 = vmatpush1.bf16.msra.mxu0 0
        %1760 = vmatprep.subr.bf16.mxu0 0
        %1761 = vmatpush1.bf16.msra.mxu0 0
        %1762 = vmatprep.subr.bf16.mxu0 0
        %1763 = vmatpush1.bf16.msra.mxu0 0
        %1764 = vmatprep.subr.bf16.mxu0 0
        %1765 = vmatpush1.bf16.msra.mxu0 0
        %1766 = vmatprep.subr.bf16.mxu0 0
        %1767 = vmatpush1.bf16.msra.mxu0 0
        %1768 = vmatprep.subr.bf16.mxu0 0
        %1769 = vmatpush1.bf16.msra.mxu0 0
        %1770 = vmatprep.subr.bf16.mxu0 0
        %1771 = vmatpush1.bf16.msra.mxu0 0
        %1772 = vmatprep.subr.bf16.mxu0 0
        %1773 = vmatpush1.bf16.msra.mxu0 0
        %1774 = vmatprep.mubr.bf16.mxu0 0
        %1775 = vmatmul.mubr.bf16.gmra.mrb[0].mxu0 %v1740
        %v1776 = vpop.f32.mrb[0].mxu0
        %v1777 = vadd.f32 %v1725, %v1776
        %v1778 = vpop.f32.mrb[0].mxu0
        %v1779 = vpop.f32.mrb[0].mxu0
        %v1780 = vpop.f32.mrb[0].mxu0
        %1781 = vdwg.mxu0
        %1783 = vrot.lane.b32.xlu0 %v1777, 120
        %v1784 = vpop.permute.xlu0 %1783
        %1786 = vrot.lane.b32.xlu0 %v1777, 112
        %v1787 = vpop.permute.xlu0 %1786
        %1789 = vrot.lane.b32.xlu0 %v1777, 104
        %v1790 = vpop.permute.xlu0 %1789
        %v1792 = vpack.c.bf16 %v1777, %v1777
        %v1793 = vpack.c.bf16 %v1784, %v1784
        %v1794 = vpack.c.bf16 %v1787, %v1787
        %v1795 = vpack.c.bf16 %v1790, %v1790
        %1797 = vrot.lane.b32.xlu0 %v1792, 96
        %v1798 = vpop.permute.xlu0 %1797
        %v1800 = vsel %vm960, %v1792, 0
        %v1803 = vsel %vm960, %v1798, 0
        %1805 = vmatprep.subr.bf16.mxu0 0
        %1806 = vmatpush1.bf16.xpose.msra.mxu0 %v1803
        %1807 = vmatprep.subr.bf16.mxu0 0
        %1808 = vmatpush1.bf16.xpose.msra.mxu0 0
        %1809 = vmatprep.subr.bf16.mxu0 0
        %1810 = vmatpush1.bf16.xpose.msra.mxu0 0
        %1811 = vmatprep.subr.bf16.mxu0 0
        %1812 = vmatpush1.bf16.xpose.msra.mxu0 0
        %1813 = vmatprep.subr.bf16.mxu0 0
        %1814 = vmatpush1.bf16.xpose.msra.mxu0 0
        %1815 = vmatprep.subr.bf16.mxu0 0
        %1816 = vmatpush1.bf16.xpose.msra.mxu0 0
        %1817 = vmatprep.subr.bf16.mxu0 0
        %1818 = vmatpush1.bf16.xpose.msra.mxu0 0
        %1819 = vmatprep.subr.bf16.mxu0 0
        %1820 = vmatpush1.bf16.xpose.msra.mxu0 0
        %1821 = vmatprep.subr.bf16.mxu0 0
        %1822 = vmatpush1.bf16.xpose.msra.mxu0 0
        %1823 = vmatprep.subr.bf16.mxu0 0
        %1824 = vmatpush1.bf16.xpose.msra.mxu0 0
        %1825 = vmatprep.subr.bf16.mxu0 0
        %1826 = vmatpush1.bf16.xpose.msra.mxu0 0
        %1827 = vmatprep.subr.bf16.mxu0 0
        %1828 = vmatpush1.bf16.xpose.msra.mxu0 0
        %1829 = vmatprep.subr.bf16.mxu0 0
        %1830 = vmatpush1.bf16.xpose.msra.mxu0 0
        %1831 = vmatprep.subr.bf16.mxu0 0
        %1832 = vmatpush1.bf16.xpose.msra.mxu0 0
        %1833 = vmatprep.subr.bf16.mxu0 0
        %1834 = vmatpush1.bf16.xpose.msra.mxu0 0
        %1835 = vmatprep.subr.bf16.mxu0 0
        %1836 = vmatpush1.bf16.xpose.msra.mxu0 0
        %1837 = vmatprep.mubr.bf16.mxu0 0
        %1838 = vmatmul.mubr.bf16.gmra.mrb[0].mxu0 %v1800
        %v1839 = vpop.f32.mrb[0].mxu0
        %v1840 = vadd.f32 0.0, %v1839
        %v1841 = vpop.f32.mrb[0].mxu0
        %v1842 = vpop.f32.mrb[0].mxu0
        %v1843 = vpop.f32.mrb[0].mxu0
        %1844 = vdwg.mxu0
        %1846 = vrot.lane.b32.xlu0 %v1793, 96
        %v1847 = vpop.permute.xlu0 %1846
        %v1849 = vsel %vm960, %v1793, 0
        %v1852 = vsel %vm960, %v1847, 0
        %1854 = vmatprep.subr.bf16.mxu0 0
        %1855 = vmatpush1.bf16.xpose.msra.mxu0 %v1852
        %1856 = vmatprep.subr.bf16.mxu0 0
        %1857 = vmatpush1.bf16.xpose.msra.mxu0 0
        %1858 = vmatprep.subr.bf16.mxu0 0
        %1859 = vmatpush1.bf16.xpose.msra.mxu0 0
        %1860 = vmatprep.subr.bf16.mxu0 0
        %1861 = vmatpush1.bf16.xpose.msra.mxu0 0
        %1862 = vmatprep.subr.bf16.mxu0 0
        %1863 = vmatpush1.bf16.xpose.msra.mxu0 0
        %1864 = vmatprep.subr.bf16.mxu0 0
        %1865 = vmatpush1.bf16.xpose.msra.mxu0 0
        %1866 = vmatprep.subr.bf16.mxu0 0
        %1867 = vmatpush1.bf16.xpose.msra.mxu0 0
        %1868 = vmatprep.subr.bf16.mxu0 0
        %1869 = vmatpush1.bf16.xpose.msra.mxu0 0
        %1870 = vmatprep.subr.bf16.mxu0 0
        %1871 = vmatpush1.bf16.xpose.msra.mxu0 0
        %1872 = vmatprep.subr.bf16.mxu0 0
        %1873 = vmatpush1.bf16.xpose.msra.mxu0 0
        %1874 = vmatprep.subr.bf16.mxu0 0
        %1875 = vmatpush1.bf16.xpose.msra.mxu0 0
        %1876 = vmatprep.subr.bf16.mxu0 0
        %1877 = vmatpush1.bf16.xpose.msra.mxu0 0
        %1878 = vmatprep.subr.bf16.mxu0 0
        %1879 = vmatpush1.bf16.xpose.msra.mxu0 0
        %1880 = vmatprep.subr.bf16.mxu0 0
        %1881 = vmatpush1.bf16.xpose.msra.mxu0 0
        %1882 = vmatprep.subr.bf16.mxu0 0
        %1883 = vmatpush1.bf16.xpose.msra.mxu0 0
        %1884 = vmatprep.subr.bf16.mxu0 0
        %1885 = vmatpush1.bf16.xpose.msra.mxu0 0
        %1886 = vmatprep.mubr.bf16.mxu0 0
        %1887 = vmatmul.mubr.bf16.gmra.mrb[0].mxu0 %v1849
        %v1888 = vpop.f32.mrb[0].mxu0
        %v1889 = vadd.f32 0.0, %v1888
        %v1890 = vpop.f32.mrb[0].mxu0
        %v1891 = vpop.f32.mrb[0].mxu0
        %v1892 = vpop.f32.mrb[0].mxu0
        %1893 = vdwg.mxu0
        %1895 = vrot.lane.b32.xlu0 %v1794, 96
        %v1896 = vpop.permute.xlu0 %1895
        %v1898 = vsel %vm960, %v1794, 0
        %v1901 = vsel %vm960, %v1896, 0
        %1903 = vmatprep.subr.bf16.mxu0 0
        %1904 = vmatpush1.bf16.xpose.msra.mxu0 %v1901
        %1905 = vmatprep.subr.bf16.mxu0 0
        %1906 = vmatpush1.bf16.xpose.msra.mxu0 0
        %1907 = vmatprep.subr.bf16.mxu0 0
        %1908 = vmatpush1.bf16.xpose.msra.mxu0 0
        %1909 = vmatprep.subr.bf16.mxu0 0
        %1910 = vmatpush1.bf16.xpose.msra.mxu0 0
        %1911 = vmatprep.subr.bf16.mxu0 0
        %1912 = vmatpush1.bf16.xpose.msra.mxu0 0
        %1913 = vmatprep.subr.bf16.mxu0 0
        %1914 = vmatpush1.bf16.xpose.msra.mxu0 0
        %1915 = vmatprep.subr.bf16.mxu0 0
        %1916 = vmatpush1.bf16.xpose.msra.mxu0 0
        %1917 = vmatprep.subr.bf16.mxu0 0
        %1918 = vmatpush1.bf16.xpose.msra.mxu0 0
        %1919 = vmatprep.subr.bf16.mxu0 0
        %1920 = vmatpush1.bf16.xpose.msra.mxu0 0
        %1921 = vmatprep.subr.bf16.mxu0 0
        %1922 = vmatpush1.bf16.xpose.msra.mxu0 0
        %1923 = vmatprep.subr.bf16.mxu0 0
        %1924 = vmatpush1.bf16.xpose.msra.mxu0 0
        %1925 = vmatprep.subr.bf16.mxu0 0
        %1926 = vmatpush1.bf16.xpose.msra.mxu0 0
        %1927 = vmatprep.subr.bf16.mxu0 0
        %1928 = vmatpush1.bf16.xpose.msra.mxu0 0
        %1929 = vmatprep.subr.bf16.mxu0 0
        %1930 = vmatpush1.bf16.xpose.msra.mxu0 0
        %1931 = vmatprep.subr.bf16.mxu0 0
        %1932 = vmatpush1.bf16.xpose.msra.mxu0 0
        %1933 = vmatprep.subr.bf16.mxu0 0
        %1934 = vmatpush1.bf16.xpose.msra.mxu0 0
        %1935 = vmatprep.mubr.bf16.mxu0 0
        %1936 = vmatmul.mubr.bf16.gmra.mrb[0].mxu0 %v1898
        %v1937 = vpop.f32.mrb[0].mxu0
        %v1938 = vadd.f32 0.0, %v1937
        %v1939 = vpop.f32.mrb[0].mxu0
        %v1940 = vpop.f32.mrb[0].mxu0
        %v1941 = vpop.f32.mrb[0].mxu0
        %1942 = vdwg.mxu0
        %1944 = vrot.lane.b32.xlu0 %v1795, 96
        %v1945 = vpop.permute.xlu0 %1944
        %v1947 = vsel %vm960, %v1795, 0
        %v1950 = vsel %vm960, %v1945, 0
        %1952 = vmatprep.subr.bf16.mxu0 0
        %1953 = vmatpush1.bf16.xpose.msra.mxu0 %v1950
        %1954 = vmatprep.subr.bf16.mxu0 0
        %1955 = vmatpush1.bf16.xpose.msra.mxu0 0
        %1956 = vmatprep.subr.bf16.mxu0 0
        %1957 = vmatpush1.bf16.xpose.msra.mxu0 0
        %1958 = vmatprep.subr.bf16.mxu0 0
        %1959 = vmatpush1.bf16.xpose.msra.mxu0 0
        %1960 = vmatprep.subr.bf16.mxu0 0
        %1961 = vmatpush1.bf16.xpose.msra.mxu0 0
        %1962 = vmatprep.subr.bf16.mxu0 0
        %1963 = vmatpush1.bf16.xpose.msra.mxu0 0
        %1964 = vmatprep.subr.bf16.mxu0 0
        %1965 = vmatpush1.bf16.xpose.msra.mxu0 0
        %1966 = vmatprep.subr.bf16.mxu0 0
        %1967 = vmatpush1.bf16.xpose.msra.mxu0 0
        %1968 = vmatprep.subr.bf16.mxu0 0
        %1969 = vmatpush1.bf16.xpose.msra.mxu0 0
        %1970 = vmatprep.subr.bf16.mxu0 0
        %1971 = vmatpush1.bf16.xpose.msra.mxu0 0
        %1972 = vmatprep.subr.bf16.mxu0 0
        %1973 = vmatpush1.bf16.xpose.msra.mxu0 0
        %1974 = vmatprep.subr.bf16.mxu0 0
        %1975 = vmatpush1.bf16.xpose.msra.mxu0 0
        %1976 = vmatprep.subr.bf16.mxu0 0
        %1977 = vmatpush1.bf16.xpose.msra.mxu0 0
        %1978 = vmatprep.subr.bf16.mxu0 0
        %1979 = vmatpush1.bf16.xpose.msra.mxu0 0
        %1980 = vmatprep.subr.bf16.mxu0 0
        %1981 = vmatpush1.bf16.xpose.msra.mxu0 0
        %1982 = vmatprep.subr.bf16.mxu0 0
        %1983 = vmatpush1.bf16.xpose.msra.mxu0 0
        %1984 = vmatprep.mubr.bf16.mxu0 0
        %1985 = vmatmul.mubr.bf16.gmra.mrb[0].mxu0 %v1947
        %v1986 = vpop.f32.mrb[0].mxu0
        %v1987 = vadd.f32 0.0, %v1986
        %v1988 = vpop.f32.mrb[0].mxu0
        %v1989 = vpop.f32.mrb[0].mxu0
        %v1990 = vpop.f32.mrb[0].mxu0
        %1991 = vdwg.mxu0
        %v1992 = vmul.f32 %v1840, 0.35355338
        %v1993 = vmul.f32 %v1889, 0.35355338
        %v1994 = vmul.f32 %v1938, 0.35355338
        %v1995 = vmul.f32 %v1987, 0.35355338
        %v1996 = vadd.f32 %v1992, %v1162
        %v1997 = vadd.f32 %v1993, %v1162
        %v1998 = vadd.f32 %v1994, %v1162
        %v1999 = vadd.f32 %v1995, %v1162
        %v2000 = vsel %vm960, %v1996, -inf
        %2001 = vmax.xlane.f32.xlu0 %v2000
        %v2002 = vpop.xlane.xlu0 %2001
        %v2003 = vsel %vm960, %v1997, -inf
        %2004 = vmax.xlane.f32.xlu0 %v2003
        %v2005 = vpop.xlane.xlu0 %2004
        %v2006 = vsel %vm960, %v1998, -inf
        %2007 = vmax.xlane.f32.xlu0 %v2006
        %v2008 = vpop.xlane.xlu0 %2007
        %v2009 = vsel %vm960, %v1999, -inf
        %2010 = vmax.xlane.f32.xlu0 %v2009
        %v2011 = vpop.xlane.xlu0 %2010
        %v2012 = vsub.f32 %v1996, %v2002
        %v2013 = vsub.f32 %v1997, %v2005
        %v2014 = vsub.f32 %v1998, %v2008
        %v2015 = vsub.f32 %v1999, %v2011
        %v2016 = vmul.f32 %v2012, 1.442695
        %v2017 = vpow.pop %v2016
        %v2018 = vmul.f32 %v2013, 1.442695
        %v2019 = vpow.pop %v2018
        %v2020 = vmul.f32 %v2014, 1.442695
        %v2021 = vpow.pop %v2020
        %v2022 = vmul.f32 %v2015, 1.442695
        %v2023 = vpow.pop %v2022
        %v2024 = vsel %vm960, %v2017, 0.0
        %2025 = vadd.xlane.f32.xlu0 %v2024
        %v2026 = vpop.xlane.xlu0 %2025
        %v2027 = vsel %vm960, %v2019, 0.0
        %2028 = vadd.xlane.f32.xlu0 %v2027
        %v2029 = vpop.xlane.xlu0 %2028
        %v2030 = vsel %vm960, %v2021, 0.0
        %2031 = vadd.xlane.f32.xlu0 %v2030
        %v2032 = vpop.xlane.xlu0 %2031
        %v2033 = vsel %vm960, %v2023, 0.0
        %2034 = vadd.xlane.f32.xlu0 %v2033
        %v2035 = vpop.xlane.xlu0 %2034
        %v2036 = vrcp.pop %v2026
        %v2037 = vrcp.pop %v2029
        %v2038 = vrcp.pop %v2032
        %v2039 = vrcp.pop %v2035
        %v2040 = vmul.f32 %v2017, %v2036
        %v2041 = vmul.f32 %v2019, %v2037
        %v2042 = vmul.f32 %v2021, %v2038
        %v2043 = vmul.f32 %v2023, %v2039
        %v2044 = vpack.c.bf16 %v2040, %v2040
        %v2045 = vpack.c.bf16 %v2041, %v2041
        %v2046 = vpack.c.bf16 %v2042, %v2042
        %v2047 = vpack.c.bf16 %v2043, %v2043
        %2048 = vrot.lane.b32.xlu0 %v1792, 64
        %v2049 = vpop.permute.xlu0 %2048
        %v2051 = vsel %vm960, %v2044, 0
        %v2054 = vsel %vm1221, %v2049, 0
        %2056 = vmatprep.subr.bf16.mxu0 0
        %2057 = vmatpush1.bf16.msra.mxu0 %v2054
        %2058 = vmatprep.subr.bf16.mxu0 0
        %2059 = vmatpush1.bf16.msra.mxu0 0
        %2060 = vmatprep.subr.bf16.mxu0 0
        %2061 = vmatpush1.bf16.msra.mxu0 0
        %2062 = vmatprep.subr.bf16.mxu0 0
        %2063 = vmatpush1.bf16.msra.mxu0 0
        %2064 = vmatprep.subr.bf16.mxu0 0
        %2065 = vmatpush1.bf16.msra.mxu0 0
        %2066 = vmatprep.subr.bf16.mxu0 0
        %2067 = vmatpush1.bf16.msra.mxu0 0
        %2068 = vmatprep.subr.bf16.mxu0 0
        %2069 = vmatpush1.bf16.msra.mxu0 0
        %2070 = vmatprep.subr.bf16.mxu0 0
        %2071 = vmatpush1.bf16.msra.mxu0 0
        %2072 = vmatprep.subr.bf16.mxu0 0
        %2073 = vmatpush1.bf16.msra.mxu0 0
        %2074 = vmatprep.subr.bf16.mxu0 0
        %2075 = vmatpush1.bf16.msra.mxu0 0
        %2076 = vmatprep.subr.bf16.mxu0 0
        %2077 = vmatpush1.bf16.msra.mxu0 0
        %2078 = vmatprep.subr.bf16.mxu0 0
        %2079 = vmatpush1.bf16.msra.mxu0 0
        %2080 = vmatprep.subr.bf16.mxu0 0
        %2081 = vmatpush1.bf16.msra.mxu0 0
        %2082 = vmatprep.subr.bf16.mxu0 0
        %2083 = vmatpush1.bf16.msra.mxu0 0
        %2084 = vmatprep.subr.bf16.mxu0 0
        %2085 = vmatpush1.bf16.msra.mxu0 0
        %2086 = vmatprep.subr.bf16.mxu0 0
        %2087 = vmatpush1.bf16.msra.mxu0 0
        %2088 = vmatprep.mubr.bf16.mxu0 0
        %2089 = vmatmul.mubr.bf16.gmra.mrb[0].mxu0 %v2051
        %v2090 = vpop.f32.mrb[0].mxu0
        %v2091 = vadd.f32 0.0, %v2090
        %v2092 = vpop.f32.mrb[0].mxu0
        %v2093 = vpop.f32.mrb[0].mxu0
        %v2094 = vpop.f32.mrb[0].mxu0
        %2095 = vdwg.mxu0
        %2096 = vrot.lane.b32.xlu0 %v1793, 64
        %v2097 = vpop.permute.xlu0 %2096
        %v2099 = vsel %vm960, %v2045, 0
        %v2102 = vsel %vm1221, %v2097, 0
        %2104 = vmatprep.subr.bf16.mxu0 0
        %2105 = vmatpush1.bf16.msra.mxu0 %v2102
        %2106 = vmatprep.subr.bf16.mxu0 0
        %2107 = vmatpush1.bf16.msra.mxu0 0
        %2108 = vmatprep.subr.bf16.mxu0 0
        %2109 = vmatpush1.bf16.msra.mxu0 0
        %2110 = vmatprep.subr.bf16.mxu0 0
        %2111 = vmatpush1.bf16.msra.mxu0 0
        %2112 = vmatprep.subr.bf16.mxu0 0
        %2113 = vmatpush1.bf16.msra.mxu0 0
        %2114 = vmatprep.subr.bf16.mxu0 0
        %2115 = vmatpush1.bf16.msra.mxu0 0
        %2116 = vmatprep.subr.bf16.mxu0 0
        %2117 = vmatpush1.bf16.msra.mxu0 0
        %2118 = vmatprep.subr.bf16.mxu0 0
        %2119 = vmatpush1.bf16.msra.mxu0 0
        %2120 = vmatprep.subr.bf16.mxu0 0
        %2121 = vmatpush1.bf16.msra.mxu0 0
        %2122 = vmatprep.subr.bf16.mxu0 0
        %2123 = vmatpush1.bf16.msra.mxu0 0
        %2124 = vmatprep.subr.bf16.mxu0 0
        %2125 = vmatpush1.bf16.msra.mxu0 0
        %2126 = vmatprep.subr.bf16.mxu0 0
        %2127 = vmatpush1.bf16.msra.mxu0 0
        %2128 = vmatprep.subr.bf16.mxu0 0
        %2129 = vmatpush1.bf16.msra.mxu0 0
        %2130 = vmatprep.subr.bf16.mxu0 0
        %2131 = vmatpush1.bf16.msra.mxu0 0
        %2132 = vmatprep.subr.bf16.mxu0 0
        %2133 = vmatpush1.bf16.msra.mxu0 0
        %2134 = vmatprep.subr.bf16.mxu0 0
        %2135 = vmatpush1.bf16.msra.mxu0 0
        %2136 = vmatprep.mubr.bf16.mxu0 0
        %2137 = vmatmul.mubr.bf16.gmra.mrb[0].mxu0 %v2099
        %v2138 = vpop.f32.mrb[0].mxu0
        %v2139 = vadd.f32 0.0, %v2138
        %v2140 = vpop.f32.mrb[0].mxu0
        %v2141 = vpop.f32.mrb[0].mxu0
        %v2142 = vpop.f32.mrb[0].mxu0
        %2143 = vdwg.mxu0
        %2144 = vrot.lane.b32.xlu0 %v1794, 64
        %v2145 = vpop.permute.xlu0 %2144
        %v2147 = vsel %vm960, %v2046, 0
        %v2150 = vsel %vm1221, %v2145, 0
        %2152 = vmatprep.subr.bf16.mxu0 0
        %2153 = vmatpush1.bf16.msra.mxu0 %v2150
        %2154 = vmatprep.subr.bf16.mxu0 0
        %2155 = vmatpush1.bf16.msra.mxu0 0
        %2156 = vmatprep.subr.bf16.mxu0 0
        %2157 = vmatpush1.bf16.msra.mxu0 0
        %2158 = vmatprep.subr.bf16.mxu0 0
        %2159 = vmatpush1.bf16.msra.mxu0 0
        %2160 = vmatprep.subr.bf16.mxu0 0
        %2161 = vmatpush1.bf16.msra.mxu0 0
        %2162 = vmatprep.subr.bf16.mxu0 0
        %2163 = vmatpush1.bf16.msra.mxu0 0
        %2164 = vmatprep.subr.bf16.mxu0 0
        %2165 = vmatpush1.bf16.msra.mxu0 0
        %2166 = vmatprep.subr.bf16.mxu0 0
        %2167 = vmatpush1.bf16.msra.mxu0 0
        %2168 = vmatprep.subr.bf16.mxu0 0
        %2169 = vmatpush1.bf16.msra.mxu0 0
        %2170 = vmatprep.subr.bf16.mxu0 0
        %2171 = vmatpush1.bf16.msra.mxu0 0
        %2172 = vmatprep.subr.bf16.mxu0 0
        %2173 = vmatpush1.bf16.msra.mxu0 0
        %2174 = vmatprep.subr.bf16.mxu0 0
        %2175 = vmatpush1.bf16.msra.mxu0 0
        %2176 = vmatprep.subr.bf16.mxu0 0
        %2177 = vmatpush1.bf16.msra.mxu0 0
        %2178 = vmatprep.subr.bf16.mxu0 0
        %2179 = vmatpush1.bf16.msra.mxu0 0
        %2180 = vmatprep.subr.bf16.mxu0 0
        %2181 = vmatpush1.bf16.msra.mxu0 0
        %2182 = vmatprep.subr.bf16.mxu0 0
        %2183 = vmatpush1.bf16.msra.mxu0 0
        %2184 = vmatprep.mubr.bf16.mxu0 0
        %2185 = vmatmul.mubr.bf16.gmra.mrb[0].mxu0 %v2147
        %v2186 = vpop.f32.mrb[0].mxu0
        %v2187 = vadd.f32 0.0, %v2186
        %v2188 = vpop.f32.mrb[0].mxu0
        %v2189 = vpop.f32.mrb[0].mxu0
        %v2190 = vpop.f32.mrb[0].mxu0
        %2191 = vdwg.mxu0
        %2192 = vrot.lane.b32.xlu0 %v1795, 64
        %v2193 = vpop.permute.xlu0 %2192
        %v2195 = vsel %vm960, %v2047, 0
        %v2198 = vsel %vm1221, %v2193, 0
        %2200 = vmatprep.subr.bf16.mxu0 0
        %2201 = vmatpush1.bf16.msra.mxu0 %v2198
        %2202 = vmatprep.subr.bf16.mxu0 0
        %2203 = vmatpush1.bf16.msra.mxu0 0
        %2204 = vmatprep.subr.bf16.mxu0 0
        %2205 = vmatpush1.bf16.msra.mxu0 0
        %2206 = vmatprep.subr.bf16.mxu0 0
        %2207 = vmatpush1.bf16.msra.mxu0 0
        %2208 = vmatprep.subr.bf16.mxu0 0
        %2209 = vmatpush1.bf16.msra.mxu0 0
        %2210 = vmatprep.subr.bf16.mxu0 0
        %2211 = vmatpush1.bf16.msra.mxu0 0
        %2212 = vmatprep.subr.bf16.mxu0 0
        %2213 = vmatpush1.bf16.msra.mxu0 0
        %2214 = vmatprep.subr.bf16.mxu0 0
        %2215 = vmatpush1.bf16.msra.mxu0 0
        %2216 = vmatprep.subr.bf16.mxu0 0
        %2217 = vmatpush1.bf16.msra.mxu0 0
        %2218 = vmatprep.subr.bf16.mxu0 0
        %2219 = vmatpush1.bf16.msra.mxu0 0
        %2220 = vmatprep.subr.bf16.mxu0 0
        %2221 = vmatpush1.bf16.msra.mxu0 0
        %2222 = vmatprep.subr.bf16.mxu0 0
        %2223 = vmatpush1.bf16.msra.mxu0 0
        %2224 = vmatprep.subr.bf16.mxu0 0
        %2225 = vmatpush1.bf16.msra.mxu0 0
        %2226 = vmatprep.subr.bf16.mxu0 0
        %2227 = vmatpush1.bf16.msra.mxu0 0
        %2228 = vmatprep.subr.bf16.mxu0 0
        %2229 = vmatpush1.bf16.msra.mxu0 0
        %2230 = vmatprep.subr.bf16.mxu0 0
        %2231 = vmatpush1.bf16.msra.mxu0 0
        %2232 = vmatprep.mubr.bf16.mxu0 0
        %2233 = vmatmul.mubr.bf16.gmra.mrb[0].mxu0 %v2195
        %v2234 = vpop.f32.mrb[0].mxu0
        %v2235 = vadd.f32 0.0, %v2234
        %v2236 = vpop.f32.mrb[0].mxu0
        %v2237 = vpop.f32.mrb[0].mxu0
        %v2238 = vpop.f32.mrb[0].mxu0
        %2239 = vdwg.mxu0
        %2241 = vrot.lane.b32.xlu0 %v2139, 8
        %v2242 = vpop.permute.xlu0 %2241
        %2245 = vrot.lane.b32.xlu0 %v2187, 16
        %v2246 = vpop.permute.xlu0 %2245
        %2249 = vrot.lane.b32.xlu0 %v2235, 24
        %v2250 = vpop.permute.xlu0 %2249
        %v2252 = vsel %vm960, %v2091, %v2242
        %v2253 = vsel %vm1422, %v2252, %v2246
        %v2254 = vsel %vm1424, %v2253, %v2250
        %v2255 = vpack.c.bf16 %v2254, %v2254
        %s2256 = scalar_lea.vmem %s9, 16
        %v2257 = vld [vmem:[%s2256] sm:$0xf]
        %v2258 = vld [vmem:[%s2256 + $0x4] sm:$0xf]
        %v2259 = vld [vmem:[%s2256 + $0x8] sm:$0xf]
        %v2260 = vld [vmem:[%s2256 + $0xc] sm:$0xf]
        %s2261 = scalar_lea.vmem %s10, 1
        %v2262 = vld [vmem:[%s2261] sm:$0x1]
        %v2264 = vlaneseq
        %v2265 = vshrl.u32 %v2264, 7
        %v2266 = vsub.s32 0, %v2265
        %v2267 = vrot.slane %v2262, %v2266
        %v2273 = vunpack.c.l.b16 %v2257
        %v2274 = vunpack.c.l.b16 %v2258
        %v2275 = vunpack.c.l.b16 %v2259
        %v2276 = vunpack.c.l.b16 %v2260
        %v2277 = vpack.c.b16 %v2274, %v2273
        %v2278 = vpack.c.b16 %v2276, %v2275
        %v2282 = vsel %vm843, %v2255, 0
        %2284 = vmatprep.subr.bf16.mxu0 0
        %2285 = vmatpush1.bf16.msra.mxu0 %v2277
        %2286 = vmatprep.subr.bf16.mxu0 0
        %2287 = vmatpush1.bf16.msra.mxu0 %v2278
        %2288 = vmatprep.subr.bf16.mxu0 0
        %2289 = vmatpush1.bf16.msra.mxu0 0
        %2290 = vmatprep.subr.bf16.mxu0 0
        %2291 = vmatpush1.bf16.msra.mxu0 0
        %2292 = vmatprep.subr.bf16.mxu0 0
        %2293 = vmatpush1.bf16.msra.mxu0 0
        %2294 = vmatprep.subr.bf16.mxu0 0
        %2295 = vmatpush1.bf16.msra.mxu0 0
        %2296 = vmatprep.subr.bf16.mxu0 0
        %2297 = vmatpush1.bf16.msra.mxu0 0
        %2298 = vmatprep.subr.bf16.mxu0 0
        %2299 = vmatpush1.bf16.msra.mxu0 0
        %2300 = vmatprep.subr.bf16.mxu0 0
        %2301 = vmatpush1.bf16.msra.mxu0 0
        %2302 = vmatprep.subr.bf16.mxu0 0
        %2303 = vmatpush1.bf16.msra.mxu0 0
        %2304 = vmatprep.subr.bf16.mxu0 0
        %2305 = vmatpush1.bf16.msra.mxu0 0
        %2306 = vmatprep.subr.bf16.mxu0 0
        %2307 = vmatpush1.bf16.msra.mxu0 0
        %2308 = vmatprep.subr.bf16.mxu0 0
        %2309 = vmatpush1.bf16.msra.mxu0 0
        %2310 = vmatprep.subr.bf16.mxu0 0
        %2311 = vmatpush1.bf16.msra.mxu0 0
        %2312 = vmatprep.subr.bf16.mxu0 0
        %2313 = vmatpush1.bf16.msra.mxu0 0
        %2314 = vmatprep.subr.bf16.mxu0 0
        %2315 = vmatpush1.bf16.msra.mxu0 0
        %2316 = vmatprep.mubr.bf16.mxu0 0
        %2317 = vmatmul.mubr.bf16.gmra.mrb[0].mxu0 %v2282
        %v2318 = vpop.f32.mrb[0].mxu0
        %v2319 = vadd.f32 %v2267, %v2318
        %v2320 = vpop.f32.mrb[0].mxu0
        %v2321 = vpop.f32.mrb[0].mxu0
        %v2322 = vpop.f32.mrb[0].mxu0
        %2323 = vdwg.mxu0
        %v2324 = vadd.f32 %v2319, %v1712
        %s2325 = scalar_lea.vmem %s11, 1
        %v2326 = vld [vmem:[%s2325] sm:$0x1]
        %s2327 = scalar_lea.vmem %s12, 1
        %v2328 = vld [vmem:[%s2327] sm:$0x1]
        %v2329 = vsel %vm843, %v2324, 0.0
        %2330 = vadd.xlane.f32.xlu0 %v2329
        %v2331 = vpop.xlane.xlu0 %2330
        %v2332 = vmul.f32 %v2331, %v847
        %v2333 = vsub.f32 %v2324, %v2332
        %v2334 = vmul.f32 %v2333, %v2333
        %v2335 = vsel %vm843, %v2334, 0.0
        %2336 = vadd.xlane.f32.xlu0 %v2335
        %v2337 = vpop.xlane.xlu0 %2336
        %v2338 = vmul.f32 %v2337, %v847
        %v2339 = vadd.f32 %v2338, 1e-12
        %v2340 = vrsqrt.pop %v2339
        %v2341 = vmul.f32 %v2333, %v2340
        %v2343 = vlaneseq
        %v2344 = vshrl.u32 %v2343, 7
        %v2345 = vsub.s32 0, %v2344
        %v2346 = vrot.slane %v2326, %v2345
        %v2348 = vmul.f32 %v2341, %v2346
        %v2350 = vlaneseq
        %v2351 = vshrl.u32 %v2350, 7
        %v2352 = vsub.s32 0, %v2351
        %v2353 = vrot.slane %v2328, %v2352
        %v2355 = vadd.f32 %v2348, %v2353
        %v2356 = vpack.c.bf16 %v2355, %v2355
        %s2357 = scalar_lea.vmem %s13, 16
        %v2358 = vld [vmem:[%s2357] sm:$0xf]
        %v2359 = vld [vmem:[%s2357 + $0x4] sm:$0xf]
        %v2360 = vld [vmem:[%s2357 + $0x8] sm:$0xf]
        %v2361 = vld [vmem:[%s2357 + $0xc] sm:$0xf]
        %s2362 = scalar_lea.vmem %s14, 1
        %v2363 = vld [vmem:[%s2362] sm:$0x1]
        %v2365 = vlaneseq
        %v2366 = vshrl.u32 %v2365, 7
        %v2367 = vsub.s32 0, %v2366
        %v2368 = vrot.slane %v2363, %v2367
        %v2374 = vunpack.c.l.b16 %v2358
        %v2375 = vunpack.c.l.b16 %v2359
        %v2376 = vunpack.c.l.b16 %v2360
        %v2377 = vunpack.c.l.b16 %v2361
        %v2378 = vpack.c.b16 %v2375, %v2374
        %v2379 = vpack.c.b16 %v2377, %v2376
        %v2383 = vsel %vm843, %v2356, 0
        %2385 = vmatprep.subr.bf16.mxu0 0
        %2386 = vmatpush1.bf16.msra.mxu0 %v2378
        %2387 = vmatprep.subr.bf16.mxu0 0
        %2388 = vmatpush1.bf16.msra.mxu0 %v2379
        %2389 = vmatprep.subr.bf16.mxu0 0
        %2390 = vmatpush1.bf16.msra.mxu0 0
        %2391 = vmatprep.subr.bf16.mxu0 0
        %2392 = vmatpush1.bf16.msra.mxu0 0
        %2393 = vmatprep.subr.bf16.mxu0 0
        %2394 = vmatpush1.bf16.msra.mxu0 0
        %2395 = vmatprep.subr.bf16.mxu0 0
        %2396 = vmatpush1.bf16.msra.mxu0 0
        %2397 = vmatprep.subr.bf16.mxu0 0
        %2398 = vmatpush1.bf16.msra.mxu0 0
        %2399 = vmatprep.subr.bf16.mxu0 0
        %2400 = vmatpush1.bf16.msra.mxu0 0
        %2401 = vmatprep.subr.bf16.mxu0 0
        %2402 = vmatpush1.bf16.msra.mxu0 0
        %2403 = vmatprep.subr.bf16.mxu0 0
        %2404 = vmatpush1.bf16.msra.mxu0 0
        %2405 = vmatprep.subr.bf16.mxu0 0
        %2406 = vmatpush1.bf16.msra.mxu0 0
        %2407 = vmatprep.subr.bf16.mxu0 0
        %2408 = vmatpush1.bf16.msra.mxu0 0
        %2409 = vmatprep.subr.bf16.mxu0 0
        %2410 = vmatpush1.bf16.msra.mxu0 0
        %2411 = vmatprep.subr.bf16.mxu0 0
        %2412 = vmatpush1.bf16.msra.mxu0 0
        %2413 = vmatprep.subr.bf16.mxu0 0
        %2414 = vmatpush1.bf16.msra.mxu0 0
        %2415 = vmatprep.subr.bf16.mxu0 0
        %2416 = vmatpush1.bf16.msra.mxu0 0
        %2417 = vmatprep.mubr.bf16.mxu0 0
        %2418 = vmatmul.mubr.bf16.gmra.mrb[0].mxu0 %v2383
        %v2419 = vpop.f32.mrb[0].mxu0
        %v2420 = vadd.f32 %v2368, %v2419
        %v2421 = vpop.f32.mrb[0].mxu0
        %v2422 = vpop.f32.mrb[0].mxu0
        %v2423 = vpop.f32.mrb[0].mxu0
        %2424 = vdwg.mxu0
        %v2425 = vmul.f32 %v2420, 0.5
        %v2426 = vmul.f32 %v2420, 0.044715
        %v2427 = vmul.f32 %v2426, %v2420
        %v2428 = vmul.f32 %v2427, %v2420
        %v2429 = vadd.f32 %v2420, %v2428
        %v2430 = vmul.f32 %v2429, 0.7978846
        %v2431 = vtanh.pop %v2430
        %v2432 = vadd.f32 %v2431, 1.0
        %v2433 = vmul.f32 %v2425, %v2432
        %v2434 = vpack.c.bf16 %v2433, %v2433
        %s2435 = scalar_lea.vmem %s15, 32
        %v2436 = vld [vmem:[%s2435] sm:$0xf]
        %v2437 = vld [vmem:[%s2435 + $0x4] sm:$0xf]
        %v2438 = vld [vmem:[%s2435 + $0x8] sm:$0xf]
        %v2439 = vld [vmem:[%s2435 + $0xc] sm:$0xf]
        %v2440 = vld [vmem:[%s2435 + $0x10] sm:$0xf]
        %v2441 = vld [vmem:[%s2435 + $0x14] sm:$0xf]
        %v2442 = vld [vmem:[%s2435 + $0x18] sm:$0xf]
        %v2443 = vld [vmem:[%s2435 + $0x1c] sm:$0xf]
        %s2444 = scalar_lea.vmem %s16, 1
        %v2445 = vld [vmem:[%s2444] sm:$0x1]
        %v2447 = vlaneseq
        %v2448 = vshrl.u32 %v2447, 7
        %v2449 = vsub.s32 0, %v2448
        %v2450 = vrot.slane %v2445, %v2449
        %v2460 = vunpack.c.l.b16 %v2436
        %v2461 = vunpack.c.l.b16 %v2437
        %v2462 = vunpack.c.l.b16 %v2438
        %v2463 = vunpack.c.l.b16 %v2439
        %v2464 = vunpack.c.l.b16 %v2440
        %v2465 = vunpack.c.l.b16 %v2441
        %v2466 = vunpack.c.l.b16 %v2442
        %v2467 = vunpack.c.l.b16 %v2443
        %v2468 = vpack.c.b16 %v2461, %v2460
        %v2469 = vpack.c.b16 %v2463, %v2462
        %v2470 = vpack.c.b16 %v2465, %v2464
        %v2471 = vpack.c.b16 %v2467, %v2466
        %v2477 = vsel %vm1639, %v2434, 0
        %2479 = vmatprep.subr.bf16.mxu0 0
        %2480 = vmatpush1.bf16.msra.mxu0 %v2468
        %2481 = vmatprep.subr.bf16.mxu0 0
        %2482 = vmatpush1.bf16.msra.mxu0 %v2469
        %2483 = vmatprep.subr.bf16.mxu0 0
        %2484 = vmatpush1.bf16.msra.mxu0 %v2470
        %2485 = vmatprep.subr.bf16.mxu0 0
        %2486 = vmatpush1.bf16.msra.mxu0 %v2471
        %2487 = vmatprep.subr.bf16.mxu0 0
        %2488 = vmatpush1.bf16.msra.mxu0 0
        %2489 = vmatprep.subr.bf16.mxu0 0
        %2490 = vmatpush1.bf16.msra.mxu0 0
        %2491 = vmatprep.subr.bf16.mxu0 0
        %2492 = vmatpush1.bf16.msra.mxu0 0
        %2493 = vmatprep.subr.bf16.mxu0 0
        %2494 = vmatpush1.bf16.msra.mxu0 0
        %2495 = vmatprep.subr.bf16.mxu0 0
        %2496 = vmatpush1.bf16.msra.mxu0 0
        %2497 = vmatprep.subr.bf16.mxu0 0
        %2498 = vmatpush1.bf16.msra.mxu0 0
        %2499 = vmatprep.subr.bf16.mxu0 0
        %2500 = vmatpush1.bf16.msra.mxu0 0
        %2501 = vmatprep.subr.bf16.mxu0 0
        %2502 = vmatpush1.bf16.msra.mxu0 0
        %2503 = vmatprep.subr.bf16.mxu0 0
        %2504 = vmatpush1.bf16.msra.mxu0 0
        %2505 = vmatprep.subr.bf16.mxu0 0
        %2506 = vmatpush1.bf16.msra.mxu0 0
        %2507 = vmatprep.subr.bf16.mxu0 0
        %2508 = vmatpush1.bf16.msra.mxu0 0
        %2509 = vmatprep.subr.bf16.mxu0 0
        %2510 = vmatpush1.bf16.msra.mxu0 0
        %2511 = vmatprep.mubr.bf16.mxu0 0
        %2512 = vmatmul.mubr.bf16.gmra.mrb[0].mxu0 %v2477
        %v2513 = vpop.f32.mrb[0].mxu0
        %v2514 = vadd.f32 %v2450, %v2513
        %v2515 = vpop.f32.mrb[0].mxu0
        %v2516 = vpop.f32.mrb[0].mxu0
        %v2517 = vpop.f32.mrb[0].mxu0
        %2518 = vdwg.mxu0
        %v2519 = vadd.f32 %v2514, %v2355
        %s2520 = scalar_lea.vmem %s17, 1
        %v2521 = vld [vmem:[%s2520] sm:$0x1]
        %s2522 = scalar_lea.vmem %s18, 1
        %v2523 = vld [vmem:[%s2522] sm:$0x1]
        %v2524 = vsel %vm843, %v2519, 0.0
        %2525 = vadd.xlane.f32.xlu0 %v2524
        %v2526 = vpop.xlane.xlu0 %2525
        %v2527 = vmul.f32 %v2526, %v847
        %v2528 = vsub.f32 %v2519, %v2527
        %v2529 = vmul.f32 %v2528, %v2528
        %v2530 = vsel %vm843, %v2529, 0.0
        %2531 = vadd.xlane.f32.xlu0 %v2530
        %v2532 = vpop.xlane.xlu0 %2531
        %v2533 = vmul.f32 %v2532, %v847
        %v2534 = vadd.f32 %v2533, 1e-12
        %v2535 = vrsqrt.pop %v2534
        %v2536 = vmul.f32 %v2528, %v2535
        %v2538 = vlaneseq
        %v2539 = vshrl.u32 %v2538, 7
        %v2540 = vsub.s32 0, %v2539
        %v2541 = vrot.slane %v2521, %v2540
        %v2543 = vmul.f32 %v2536, %v2541
        %v2545 = vlaneseq
        %v2546 = vshrl.u32 %v2545, 7
        %v2547 = vsub.s32 0, %v2546
        %v2548 = vrot.slane %v2523, %v2547
        %v2550 = vadd.f32 %v2543, %v2548
        %v2551 = vpack.c.bf16 %v2550, %v2550
        %v2552 = vld [vmem:[%s19] sm:$0xf]
        %v2553 = vld [vmem:[%s19 + $0x4] sm:$0xf]
        %v2554 = vld [vmem:[%s19 + $0x8] sm:$0xf]
        %v2555 = vld [vmem:[%s19 + $0xc] sm:$0xf]
        %v2556 = vld [vmem:[%s20] sm:$0x1]
        %v2561 = vunpack.c.l.b16 %v2552
        %v2562 = vunpack.c.l.b16 %v2553
        %v2563 = vunpack.c.l.b16 %v2554
        %v2564 = vunpack.c.l.b16 %v2555
        %v2565 = vpack.c.b16 %v2562, %v2561
        %v2566 = vpack.c.b16 %v2564, %v2563
        %v2570 = vsel %vm843, %v2551, 0
        %2572 = vmatprep.subr.bf16.mxu0 0
        %2573 = vmatpush1.bf16.msra.mxu0 %v2565
        %2574 = vmatprep.subr.bf16.mxu0 0
        %2575 = vmatpush1.bf16.msra.mxu0 %v2566
        %2576 = vmatprep.subr.bf16.mxu0 0
        %2577 = vmatpush1.bf16.msra.mxu0 0
        %2578 = vmatprep.subr.bf16.mxu0 0
        %2579 = vmatpush1.bf16.msra.mxu0 0
        %2580 = vmatprep.subr.bf16.mxu0 0
        %2581 = vmatpush1.bf16.msra.mxu0 0
        %2582 = vmatprep.subr.bf16.mxu0 0
        %2583 = vmatpush1.bf16.msra.mxu0 0
        %2584 = vmatprep.subr.bf16.mxu0 0
        %2585 = vmatpush1.bf16.msra.mxu0 0
        %2586 = vmatprep.subr.bf16.mxu0 0
        %2587 = vmatpush1.bf16.msra.mxu0 0
        %2588 = vmatprep.subr.bf16.mxu0 0
        %2589 = vmatpush1.bf16.msra.mxu0 0
        %2590 = vmatprep.subr.bf16.mxu0 0
        %2591 = vmatpush1.bf16.msra.mxu0 0
        %2592 = vmatprep.subr.bf16.mxu0 0
        %2593 = vmatpush1.bf16.msra.mxu0 0
        %2594 = vmatprep.subr.bf16.mxu0 0
        %2595 = vmatpush1.bf16.msra.mxu0 0
        %2596 = vmatprep.subr.bf16.mxu0 0
        %2597 = vmatpush1.bf16.msra.mxu0 0
        %2598 = vmatprep.subr.bf16.mxu0 0
        %2599 = vmatpush1.bf16.msra.mxu0 0
        %2600 = vmatprep.subr.bf16.mxu0 0
        %2601 = vmatpush1.bf16.msra.mxu0 0
        %2602 = vmatprep.subr.bf16.mxu0 0
        %2603 = vmatpush1.bf16.msra.mxu0 0
        %2604 = vmatprep.mubr.bf16.mxu0 0
        %2605 = vmatmul.mubr.bf16.gmra.mrb[0].mxu0 %v2570
        %v2606 = vpop.f32.mrb[0].mxu0
        %v2607 = vadd.f32 %v2556, %v2606
        %v2608 = vpop.f32.mrb[0].mxu0
        %v2609 = vpop.f32.mrb[0].mxu0
        %v2610 = vpop.f32.mrb[0].mxu0
        %2611 = vdwg.mxu0
        %v2612 = vtanh.pop %v2607
        %v2613 = vpack.c.bf16 %v2612, %v2612
        %v2614 = vld [vmem:[%s21] sm:$0xf]
        %v2615 = vld [vmem:[%s21 + $0x4] sm:$0xf]
        %v2616 = vld [vmem:[%s21 + $0x8] sm:$0xf]
        %v2617 = vld [vmem:[%s21 + $0xc] sm:$0xf]
        %v2618 = vld [vmem:[%s22] sm:$0x1]
        %v2623 = vunpack.c.l.b16 %v2614
        %v2624 = vunpack.c.l.b16 %v2615
        %v2625 = vunpack.c.l.b16 %v2616
        %v2626 = vunpack.c.l.b16 %v2617
        %v2627 = vpack.c.b16 %v2624, %v2623
        %v2628 = vpack.c.b16 %v2626, %v2625
        %v2632 = vsel %vm843, %v2613, 0
        %2634 = vmatprep.subr.bf16.mxu0 0
        %2635 = vmatpush1.bf16.msra.mxu0 %v2627
        %2636 = vmatprep.subr.bf16.mxu0 0
        %2637 = vmatpush1.bf16.msra.mxu0 %v2628
        %2638 = vmatprep.subr.bf16.mxu0 0
        %2639 = vmatpush1.bf16.msra.mxu0 0
        %2640 = vmatprep.subr.bf16.mxu0 0
        %2641 = vmatpush1.bf16.msra.mxu0 0
        %2642 = vmatprep.subr.bf16.mxu0 0
        %2643 = vmatpush1.bf16.msra.mxu0 0
        %2644 = vmatprep.subr.bf16.mxu0 0
        %2645 = vmatpush1.bf16.msra.mxu0 0
        %2646 = vmatprep.subr.bf16.mxu0 0
        %2647 = vmatpush1.bf16.msra.mxu0 0
        %2648 = vmatprep.subr.bf16.mxu0 0
        %2649 = vmatpush1.bf16.msra.mxu0 0
        %2650 = vmatprep.subr.bf16.mxu0 0
        %2651 = vmatpush1.bf16.msra.mxu0 0
        %2652 = vmatprep.subr.bf16.mxu0 0
        %2653 = vmatpush1.bf16.msra.mxu0 0
        %2654 = vmatprep.subr.bf16.mxu0 0
        %2655 = vmatpush1.bf16.msra.mxu0 0
        %2656 = vmatprep.subr.bf16.mxu0 0
        %2657 = vmatpush1.bf16.msra.mxu0 0
        %2658 = vmatprep.subr.bf16.mxu0 0
        %2659 = vmatpush1.bf16.msra.mxu0 0
        %2660 = vmatprep.subr.bf16.mxu0 0
        %2661 = vmatpush1.bf16.msra.mxu0 0
        %2662 = vmatprep.subr.bf16.mxu0 0
        %2663 = vmatpush1.bf16.msra.mxu0 0
        %2664 = vmatprep.subr.bf16.mxu0 0
        %2665 = vmatpush1.bf16.msra.mxu0 0
        %2666 = vmatprep.mubr.bf16.mxu0 0
        %2667 = vmatmul.mubr.bf16.gmra.mrb[0].mxu0 %v2632
        %v2668 = vpop.f32.mrb[0].mxu0
        %v2669 = vadd.f32 %v2618, %v2668
        %v2670 = vpop.f32.mrb[0].mxu0
        %v2671 = vpop.f32.mrb[0].mxu0
        %v2672 = vpop.f32.mrb[0].mxu0
        %2673 = vdwg.mxu0
        %v2674 = vmax.f32 %v2669, 0.0
        %2675 = vst [vmem:[%s711] sm:$0x1] %v2674
        %s2676 = sand.u32 %s538, 1
        %s2677 = scalar_lea.sflag [#allocation3], %s2676
        %s2678 = sand.u32 %s538, 1
        %s2679 = scalar_lea.vmem [#allocation2], %s2678
        // Predicated region
        $region113: #{bert_classifier_forward.1} parent=111 // pred_check
          %p2680 = pneg %p548
        $region114: #{bert_classifier_forward.1} parent=111 // pred_check_branch
          %2682 = sbr.rel (%p2680) target = $region116
        $region115: #{bert_classifier_forward.1} parent=111 // pred_region
          %s2684 = ssub.s32 16, 16
          %2685 = vsyncadd %s2677, %s2684
          %s2686 = smul.addr %s37, 16
          %s2687 = scalar_lea.hbm %s23, %s2686
          %s2689 = sshll.u32 %s2679, 4
          %s2690 = int_to_ptr.vmem [resolvable:$true] %s2689
          %2692 = dma.vmem_to_hbm [thread:$0]  %s2690, 16, %s2687, %s2677
        $region116: #{bert_classifier_forward.1} parent=111 // pred_fallthru
          _
      $region112: #{bert_classifier_forward.1} parent=5 // pred_fallthru
        _
      %p2693 = scmp.le.s32.totalorder 2, %s32
      // Predicated region
      $region117: #{bert_classifier_forward.1} parent=5 // pred_check
        %p2694 = pneg %p2693
      $region118: #{bert_classifier_forward.1} parent=5 // pred_check_branch
        %2696 = sbr.rel (%p2694) target = $region120
      $region119: #{bert_classifier_forward.1} parent=5 // pred_region
        %s2697 = ssub.s32 %s32, 2
        // Predicated region
        $region121: #{bert_classifier_forward.1} parent=119 // pred_check
          %p2698 = pneg %p554
        $region122: #{bert_classifier_forward.1} parent=119 // pred_check_branch
          %2700 = sbr.rel (%p2698) target = $region124
        $region123: #{bert_classifier_forward.1} parent=119 // pred_region
          %s2701 = sand.u32 %s539, 1
          %s2702 = scalar_lea.sflag [#allocation3], %s2701
          %s2703 = sand.u32 %s539, 1
          %s2704 = scalar_lea.vmem [#allocation2], %s2703
          %2705 = dma.done %s2702, 16
        $region124: #{bert_classifier_forward.1} parent=119 // pred_fallthru
          _
      $region120: #{bert_classifier_forward.1} parent=5 // pred_fallthru
        _
    $region6: #{bert_classifier_forward.1} parent=1 // loop_footer
      %s36 = sadd.s32 1, %s32
    $region7: #{bert_classifier_forward.1} parent=1 // loop_footer_branch
      %31 = sbr.rel target = $region3
    $region8: #{bert_classifier_forward.1} parent=1 // loop_exit
      _
    %2706 = vsyncpa [#allocation3], 1
    %s2707 = scalar_lea.sflag [#allocation3], 1
    %2708 = vsyncpa %s2707, 1

</llo_original>
